<compile_context>
chip_gen: v6e
topology: v6e:2x2x1
jax: 0.10.0
libtpu: 0.0.40
codegen_flags: <defaults>
</compile_context>

<pallas_src>
import functools

import jax
import jax.numpy as jnp
from jax import lax
from jax.experimental import pallas as pl
from jax.experimental.pallas import tpu as pltpu

PAD_ID = 3


def _round_up(x, m):
    return (x + m - 1) // m * m


# ----------------------------------------------------------------------------
# Fused LSTM stack kernel (single pallas_call per stack, optional fused linear)
# ----------------------------------------------------------------------------
def _make_stack_kernel(num_layers, seq_len, batch, hidden, use_lengths,
                       fuse_proj):
    """Builds a fused multi-layer LSTM kernel (single invocation, no grid).

    Ref order:
      x (S,B,E) bf16, [lengths (B,1) i32], h0 (L,B,H), c0 (L,B,H),
      w_ih[0..L-1] (F,4H) bf16, w_hh[0..L-1] (H,4H) bf16, b[0..L-1] (1,4H) f32,
      [lin_w (H,Vp) bf16, lin_b (1,Vp) f32],
      outputs: logits (S*B,Vp) f32   if fuse_proj
               h_f, c_f (L,B,H) f32  otherwise,
      scratch: act (S,B,H) f32, gx (S,B,4H) f32.
    """
    H = hidden
    # Statically unroll the recurrence for short sequences (LLO visibility);
    # fall back to fori_loop for long ones.
    unroll_static = seq_len <= 64

    def kernel(*refs):
        it = iter(refs)
        x_ref = next(it)
        len_ref = next(it) if use_lengths else None
        h0_ref = next(it)
        c0_ref = next(it)
        wih_refs = [next(it) for _ in range(num_layers)]
        whh_refs = [next(it) for _ in range(num_layers)]
        b_refs = [next(it) for _ in range(num_layers)]
        if fuse_proj:
            lw_ref = next(it)
            lb_ref = next(it)
            logits_ref = next(it)
            hf_ref = cf_ref = None
        else:
            hf_ref = next(it)
            cf_ref = next(it)
        act_ref = next(it)
        gx_ref = next(it)

        # Lane classifier for the PyTorch gate order [i | f | g | o]; hoisted
        # once (JAX does not CSE broadcast_in_dim).
        lane = lax.broadcasted_iota(jnp.int32, (batch, 4 * H), 1)
        is_tanh_lane = (lane >= 2 * H) & (lane < 3 * H)

        for l in range(num_layers):
            in_ref = x_ref if l == 0 else act_ref
            last = (l == num_layers - 1)
            write_act = fuse_proj or (not last)

            # ---- time-parallel input projection (one big bf16 MXU matmul) ---
            x_all = in_ref[...]                              # (S, B, F)
            feat = x_all.shape[-1]
            gx = jnp.dot(
                x_all.reshape(seq_len * batch, feat).astype(jnp.bfloat16),
                wih_refs[l][...],
                preferred_element_type=jnp.float32)
            gx_ref[...] = (gx + b_refs[l][...]).reshape(seq_len, batch, 4 * H)

            w_hh = whh_refs[l][...]                          # (H, 4H) bf16

            def step(t, carry, w_hh=w_hh, write_act=write_act):
                h, c = carry
                gates = gx_ref[t] + jnp.dot(h.astype(jnp.bfloat16), w_hh,
                                            preferred_element_type=jnp.float32)
                # 2 full-width EUP ops + 1 select instead of 4 quarter-width.
                a = jnp.where(is_tanh_lane, jnp.tanh(gates),
                              jax.nn.sigmoid(gates))
                i_g = a[:, 0 * H:1 * H]
                f_g = a[:, 1 * H:2 * H]
                g_g = a[:, 2 * H:3 * H]
                o_g = a[:, 3 * H:4 * H]
                c_new = f_g * c + i_g * g_g
                h_new = o_g * jnp.tanh(c_new)
                if use_lengths:
                    m = len_ref[...] > t                     # (B, 1) bool
                    h_new = jnp.where(m, h_new, h)
                    c_new = jnp.where(m, c_new, c)
                if write_act:
                    act_ref[t] = h_new
                return h_new, c_new

            carry = (h0_ref[l], c0_ref[l])
            if unroll_static:
                for t in range(seq_len):
                    carry = step(t, carry)
            else:
                carry = lax.fori_loop(0, seq_len, step, carry)

            if not fuse_proj:
                h_f, c_f = carry
                hf_ref[l] = h_f                              # written once
                cf_ref[l] = c_f

        if fuse_proj:
            # Fused output projection: lane-dense (S*B, Vp) store, y never
            # leaves VMEM.
            y = act_ref[...].reshape(seq_len * batch, H)
            logits_ref[...] = (
                jnp.dot(y.astype(jnp.bfloat16), lw_ref[...],
                        preferred_element_type=jnp.float32)
                + lb_ref[...])

    return kernel


def lstm_encoder_pallas(x_tm, lengths, h0, c0, layers):
    """x_tm: (S, B, E) bf16; lengths: (B, 1) int32; h0/c0: (L, B, H) f32."""
    S, B, _ = x_tm.shape
    L = len(layers)
    H = h0.shape[-1]
    kernel = _make_stack_kernel(L, S, B, H, use_lengths=True, fuse_proj=False)
    inputs = [x_tm, lengths, h0, c0]
    inputs += [w_ih for (w_ih, _, _) in layers]
    inputs += [w_hh for (_, w_hh, _) in layers]
    inputs += [b for (_, _, b) in layers]
    out_shape = (jax.ShapeDtypeStruct((L, B, H), jnp.float32),
                 jax.ShapeDtypeStruct((L, B, H), jnp.float32))
    scratch = [pltpu.VMEM((S, B, H), jnp.float32),
               pltpu.VMEM((S, B, 4 * H), jnp.float32)]
    return pl.pallas_call(kernel, out_shape=out_shape,
                          scratch_shapes=scratch)(*inputs)


def lstm_decoder_pallas(x_tm, h0, c0, layers, lin_w, lin_b):
    """x_tm: (S, B, E) bf16; h0/c0: (L, B, H); lin_w: (H, Vp) bf16.

    Returns logits_flat: (S*B, Vp) f32 (row = t*B + b).
    """
    S, B, _ = x_tm.shape
    L = len(layers)
    H = h0.shape[-1]
    Vp = lin_w.shape[-1]
    kernel = _make_stack_kernel(L, S, B, H, use_lengths=False, fuse_proj=True)
    inputs = [x_tm, h0, c0]
    inputs += [w_ih for (w_ih, _, _) in layers]
    inputs += [w_hh for (_, w_hh, _) in layers]
    inputs += [b for (_, _, b) in layers]
    inputs += [lin_w, lin_b]
    out_shape = jax.ShapeDtypeStruct((S * B, Vp), jnp.float32)
    scratch = [pltpu.VMEM((S, B, H), jnp.float32),
               pltpu.VMEM((S, B, 4 * H), jnp.float32)]
    return pl.pallas_call(kernel, out_shape=out_shape,
                          scratch_shapes=scratch)(*inputs)


# ----------------------------------------------------------------------------
# Model glue (plain JAX): embeddings, length inference, batch padding
# ----------------------------------------------------------------------------
def make_params(key, enc_vocab, enc_emb_dim, hidden, num_layers,
                dec_vocab, dec_emb_dim):
    keys = iter(jax.random.split(key, 64))

    def u(shape, scale=0.1):
        return jax.random.uniform(next(keys), shape, jnp.float32, -scale, scale)

    params = {}
    params["enc_emb"] = u((enc_vocab, enc_emb_dim), 0.5).at[PAD_ID].set(0.0)
    params["dec_emb"] = u((dec_vocab, dec_emb_dim), 0.5).at[PAD_ID].set(0.0)

    def lstm_stack(in_dim):
        layers = []
        d = in_dim
        for _ in range(num_layers):
            w_ih = u((d, 4 * hidden)).astype(jnp.bfloat16)   # pre-transposed
            w_hh = u((hidden, 4 * hidden)).astype(jnp.bfloat16)
            bias = u((1, 4 * hidden)) + u((1, 4 * hidden))   # b_ih + b_hh
            layers.append((w_ih, w_hh, bias))
            d = hidden
        return layers

    params["enc_lstm"] = lstm_stack(enc_emb_dim)
    params["dec_lstm"] = lstm_stack(dec_emb_dim)

    # Output projection padded to a lane-dense vocab once at creation time.
    Vp = _round_up(dec_vocab, 128)
    lin_w = u((hidden, dec_vocab))
    lin_b = u((1, dec_vocab))
    params["lin_w"] = jnp.pad(lin_w, ((0, 0), (0, Vp - dec_vocab))).astype(
        jnp.bfloat16)
    params["lin_b"] = jnp.pad(lin_b, ((0, 0), (0, Vp - dec_vocab)))
    return params


def seq2seq_forward(params, enc_tokens, dec_tokens, *, vocab_out):
    B, S_enc = enc_tokens.shape
    _, S_dec = dec_tokens.shape
    L = len(params["enc_lstm"])
    H = params["enc_lstm"][0][1].shape[0]
    Vp = params["lin_w"].shape[-1]
    Bp = _round_up(B, 8)                                     # sublane alignment

    # ---- encoder: only final (h, c) are emitted ----
    enc_emb = jnp.take(params["enc_emb"], enc_tokens, axis=0)      # (B,S,E)
    lengths = jnp.sum(enc_tokens != PAD_ID, axis=1).astype(jnp.int32)
    enc_x_tm = jnp.transpose(enc_emb, (1, 0, 2)).astype(jnp.bfloat16)
    enc_x_tm = jnp.pad(enc_x_tm, ((0, 0), (0, Bp - B), (0, 0)))
    len_p = jnp.pad(lengths, (0, Bp - B)).reshape(Bp, 1)

    zeros = jnp.zeros((L, Bp, H), jnp.float32)
    h_n, c_n = lstm_encoder_pallas(enc_x_tm, len_p, zeros, zeros,
                                   params["enc_lstm"])

    # ---- decoder + fused output projection ----
    dec_emb = jnp.take(params["dec_emb"], dec_tokens, axis=0)       # (B,S,E)
    dec_x_tm = jnp.transpose(dec_emb, (1, 0, 2)).astype(jnp.bfloat16)
    dec_x_tm = jnp.pad(dec_x_tm, ((0, 0), (0, Bp - B), (0, 0)))
    logits_flat = lstm_decoder_pallas(dec_x_tm, h_n, c_n, params["dec_lstm"],
                                      params["lin_w"], params["lin_b"])

    logits = logits_flat.reshape(S_dec, Bp, Vp)[:, :B, :vocab_out]
    return jnp.transpose(logits, (1, 0, 2))                         # (B,S,V)


# ----------------------------------------------------------------------------
# Pure-JAX reference (same bf16-at-the-dot precision choice, for correctness)
# ----------------------------------------------------------------------------
def lstm_stack_ref(x_tm, mask_tm, h0, c0, layers):
    H = h0.shape[-1]
    y = x_tm
    hfs, cfs = [], []
    for l, (w_ih, w_hh, b) in enumerate(layers):
        def step(carry, inp, w_ih=w_ih, w_hh=w_hh, b=b):
            h, c = carry
            x, m = inp
            gates = (jnp.dot(x.astype(jnp.bfloat16), w_ih,
                             preferred_element_type=jnp.float32)
                     + jnp.dot(h.astype(jnp.bfloat16), w_hh,
                               preferred_element_type=jnp.float32) + b)
            i_g = jax.nn.sigmoid(gates[:, :H])
            f_g = jax.nn.sigmoid(gates[:, H:2 * H])
            g_g = jnp.tanh(gates[:, 2 * H:3 * H])
            o_g = jax.nn.sigmoid(gates[:, 3 * H:])
            c_new = f_g * c + i_g * g_g
            h_new = o_g * jnp.tanh(c_new)
            h2 = jnp.where(m > 0, h_new, h)
            c2 = jnp.where(m > 0, c_new, c)
            return (h2, c2), h2

        (hf, cf), y = lax.scan(step, (h0[l], c0[l]), (y, mask_tm))
        hfs.append(hf)
        cfs.append(cf)
    return y, jnp.stack(hfs), jnp.stack(cfs)


def seq2seq_forward_ref(params, enc_tokens, dec_tokens, *, vocab_out):
    B, S_enc = enc_tokens.shape
    _, S_dec = dec_tokens.shape
    L = len(params["enc_lstm"])
    H = params["enc_lstm"][0][1].shape[0]

    enc_emb = jnp.take(params["enc_emb"], enc_tokens, axis=0)
    lengths = jnp.sum(enc_tokens != PAD_ID, axis=1)
    pos = jnp.arange(S_enc, dtype=jnp.int32)[:, None]
    enc_mask = (pos < lengths[None, :]).astype(jnp.float32)[:, :, None]
    enc_x_tm = jnp.transpose(enc_emb, (1, 0, 2))
    zeros = jnp.zeros((L, B, H), jnp.float32)
    _, h_n, c_n = lstm_stack_ref(enc_x_tm, enc_mask, zeros, zeros,
                                 params["enc_lstm"])

    dec_emb = jnp.take(params["dec_emb"], dec_tokens, axis=0)
    dec_x_tm = jnp.transpose(dec_emb, (1, 0, 2))
    dec_mask = jnp.ones((S_dec, B, 1), jnp.float32)
    dec_y, _, _ = lstm_stack_ref(dec_x_tm, dec_mask, h_n, c_n,
                                 params["dec_lstm"])
    dec_out = jnp.transpose(dec_y, (1, 0, 2)).reshape(B * S_dec, H)
    logits = (jnp.dot(dec_out.astype(jnp.bfloat16), params["lin_w"],
                      preferred_element_type=jnp.float32) + params["lin_b"])
    return logits.reshape(B, S_dec, -1)[:, :, :vocab_out]


# ----------------------------------------------------------------------------
# Main
# ----------------------------------------------------------------------------
if __name__ == "__main__":
    # Encoder/decoder hidden sizes and num_layers match so the encoder hidden
    # can seed the decoder, as in the PyTorch module.
    ENC_VOCAB, DEC_VOCAB = 50, 48
    EMB, HIDDEN, LAYERS = 32, 32, 2
    B, S_ENC, S_DEC = 2, 10, 8

    key = jax.random.PRNGKey(0)
    k_par, k_enc, k_dec = jax.random.split(key, 3)
    params = make_params(k_par, ENC_VOCAB, EMB, HIDDEN, LAYERS, DEC_VOCAB, EMB)

    enc_tokens = jax.random.randint(k_enc, (B, S_ENC), 4, ENC_VOCAB, jnp.int32)
    dec_tokens = jax.random.randint(k_dec, (B, S_DEC), 4, DEC_VOCAB, jnp.int32)
    # Give batch element 1 trailing padding to exercise packed-sequence masking.
    enc_tokens = enc_tokens.at[1, 6:].set(PAD_ID)

    fwd_pallas = jax.jit(functools.partial(seq2seq_forward, vocab_out=DEC_VOCAB))
    fwd_ref = jax.jit(functools.partial(seq2seq_forward_ref,
                                        vocab_out=DEC_VOCAB))

    logits = fwd_pallas(params, enc_tokens, dec_tokens)
    jax.block_until_ready(logits)

    ref = fwd_ref(params, enc_tokens, dec_tokens)
    jax.block_until_ready(ref)

    assert logits.shape == (B, S_DEC, DEC_VOCAB), logits.shape
    assert bool(jnp.all(jnp.isfinite(logits)))
    assert bool(jnp.allclose(logits, ref, rtol=2e-3, atol=2e-3)), (
        float(jnp.max(jnp.abs(logits - ref))))

    print("KERNEL_OK")
</pallas_src>

<mosaic_0001>
module attributes {stable_mosaic.version = 11 : i64} {
  func.func @kernel(%arg0: memref<10x8x32xbf16, #tpu.memory_space<vmem>>, %arg1: memref<8x1xi32, #tpu.memory_space<vmem>>, %arg2: memref<2x8x32xf32, #tpu.memory_space<vmem>>, %arg3: memref<2x8x32xf32, #tpu.memory_space<vmem>>, %arg4: memref<32x128xbf16, #tpu.memory_space<vmem>>, %arg5: memref<32x128xbf16, #tpu.memory_space<vmem>>, %arg6: memref<32x128xbf16, #tpu.memory_space<vmem>>, %arg7: memref<32x128xbf16, #tpu.memory_space<vmem>>, %arg8: memref<1x128xf32, #tpu.memory_space<vmem>>, %arg9: memref<1x128xf32, #tpu.memory_space<vmem>>, %arg10: memref<2x8x32xf32, #tpu.memory_space<vmem>>, %arg11: memref<2x8x32xf32, #tpu.memory_space<vmem>>, %arg12: memref<10x8x32xf32, #tpu.memory_space<vmem>>, %arg13: memref<10x8x128xf32, #tpu.memory_space<vmem>>) attributes {dimension_semantics = [], scalar_prefetch = 0 : i64, scratch_operands = 2 : i64, tpu.core_type = #tpu.core_type<tc>} {
    %0 = tpu.iota {dimensions = array<i32: 1>} : vector<8x128xi32>
    %c64_i32 = arith.constant 64 : i32
    %1 = vector.broadcast %c64_i32 : i32 to vector<8x128xi32>
    %2 = arith.cmpi sge, %0, %1 : vector<8x128xi32>
    %c96_i32 = arith.constant 96 : i32
    %3 = vector.broadcast %c96_i32 : i32 to vector<8x128xi32>
    %4 = arith.cmpi slt, %0, %3 : vector<8x128xi32>
    %5 = arith.andi %2, %4 : vector<8x128xi1>
    %c0 = arith.constant 0 : index
    %c0_0 = arith.constant 0 : index
    %c0_1 = arith.constant 0 : index
    %6 = vector.load %arg0[%c0, %c0_0, %c0_1] : memref<10x8x32xbf16, #tpu.memory_space<vmem>>, vector<10x8x32xbf16>
    %7 = vector.shape_cast %6 : vector<10x8x32xbf16> to vector<80x32xbf16>
    %c0_2 = arith.constant 0 : index
    %c0_3 = arith.constant 0 : index
    %8 = vector.load %arg4[%c0_2, %c0_3] : memref<32x128xbf16, #tpu.memory_space<vmem>>, vector<32x128xbf16>
    %cst = arith.constant dense<0.000000e+00> : vector<80x128xf32>
    %9 = tpu.matmul %7, %8, %cst {dimension_numbers = #tpu.dot_dimension_numbers<[1], [0], [0], [1], [0, 0, 1, 1], [], []>} : vector<80x32xbf16>, vector<32x128xbf16>, vector<80x128xf32> -> vector<80x128xf32>
    %c0_4 = arith.constant 0 : index
    %c0_5 = arith.constant 0 : index
    %10 = vector.load %arg8[%c0_4, %c0_5] : memref<1x128xf32, #tpu.memory_space<vmem>>, vector<1x128xf32>
    %11 = vector.broadcast %10 : vector<1x128xf32> to vector<80x128xf32>
    %12 = arith.addf %9, %11 : vector<80x128xf32>
    %13 = vector.shape_cast %12 : vector<80x128xf32> to vector<10x8x128xf32>
    %c0_6 = arith.constant 0 : index
    %c0_7 = arith.constant 0 : index
    %c0_8 = arith.constant 0 : index
    %14 = vector.load %arg13[%c0_6, %c0_7, %c0_8] : memref<10x8x128xf32, #tpu.memory_space<vmem>>, vector<10x8x128xf32>
    tpu.vector_store %arg13[%c0_6, %c0_7, %c0_8], %13 {strides = array<i32>} : memref<10x8x128xf32, #tpu.memory_space<vmem>>, vector<10x8x128xf32>,
    %c0_9 = arith.constant 0 : index
    %c0_10 = arith.constant 0 : index
    %15 = vector.load %arg6[%c0_9, %c0_10] : memref<32x128xbf16, #tpu.memory_space<vmem>>, vector<32x128xbf16>
    %c0_11 = arith.constant 0 : index
    %c0_12 = arith.constant 0 : index
    %c0_13 = arith.constant 0 : index
    %16 = vector.load %arg2[%c0_11, %c0_12, %c0_13] : memref<2x8x32xf32, #tpu.memory_space<vmem>>, vector<1x8x32xf32>
    %17 = vector.shape_cast %16 : vector<1x8x32xf32> to vector<8x32xf32>
    %c0_14 = arith.constant 0 : index
    %c0_15 = arith.constant 0 : index
    %c0_16 = arith.constant 0 : index
    %18 = vector.load %arg3[%c0_14, %c0_15, %c0_16] : memref<2x8x32xf32, #tpu.memory_space<vmem>>, vector<1x8x32xf32>
    %19 = vector.shape_cast %18 : vector<1x8x32xf32> to vector<8x32xf32>
    %c0_17 = arith.constant 0 : index
    %c0_18 = arith.constant 0 : index
    %c0_19 = arith.constant 0 : index
    %20 = vector.load %arg13[%c0_17, %c0_18, %c0_19] : memref<10x8x128xf32, #tpu.memory_space<vmem>>, vector<1x8x128xf32>
    %21 = vector.shape_cast %20 : vector<1x8x128xf32> to vector<8x128xf32>
    %22 = arith.truncf %17 : vector<8x32xf32> to vector<8x32xbf16>
    %cst_20 = arith.constant dense<0.000000e+00> : vector<8x128xf32>
    %23 = tpu.matmul %22, %15, %cst_20 {dimension_numbers = #tpu.dot_dimension_numbers<[1], [0], [0], [1], [0, 0, 1, 1], [], []>} : vector<8x32xbf16>, vector<32x128xbf16>, vector<8x128xf32> -> vector<8x128xf32>
    %24 = arith.addf %21, %23 : vector<8x128xf32>
    %25 = math.tanh %24 : vector<8x128xf32>
    %26 = arith.negf %24 : vector<8x128xf32>
    %27 = math.exp %26 : vector<8x128xf32>
    %cst_21 = arith.constant 1.000000e+00 : f32
    %28 = vector.broadcast %cst_21 : f32 to vector<8x128xf32>
    %29 = arith.addf %28, %27 : vector<8x128xf32>
    %30 = arith.divf %28, %29 : vector<8x128xf32>
    %31 = arith.select %5, %25, %30 : vector<8x128xi1>, vector<8x128xf32>
    %32 = vector.extract_strided_slice %31 {offsets = [0, 0], sizes = [8, 32], strides = [1, 1]} : vector<8x128xf32> to vector<8x32xf32>
    %33 = vector.extract_strided_slice %31 {offsets = [0, 32], sizes = [8, 32], strides = [1, 1]} : vector<8x128xf32> to vector<8x32xf32>
    %34 = vector.extract_strided_slice %31 {offsets = [0, 64], sizes = [8, 32], strides = [1, 1]} : vector<8x128xf32> to vector<8x32xf32>
    %35 = vector.extract_strided_slice %31 {offsets = [0, 96], sizes = [8, 32], strides = [1, 1]} : vector<8x128xf32> to vector<8x32xf32>
    %36 = arith.mulf %33, %19 : vector<8x32xf32>
    %37 = arith.mulf %32, %34 : vector<8x32xf32>
    %38 = arith.addf %36, %37 : vector<8x32xf32>
    %39 = math.tanh %38 : vector<8x32xf32>
    %40 = arith.mulf %35, %39 : vector<8x32xf32>
    %c0_22 = arith.constant 0 : index
    %c0_23 = arith.constant 0 : index
    %41 = vector.load %arg1[%c0_22, %c0_23] : memref<8x1xi32, #tpu.memory_space<vmem>>, vector<8x1xi32>
    %c0_i32 = arith.constant 0 : i32
    %42 = vector.broadcast %c0_i32 : i32 to vector<8x1xi32>
    %43 = arith.cmpi sgt, %41, %42 : vector<8x1xi32>
    %44 = vector.shape_cast %43 : vector<8x1xi1> to vector<8x1xi1>
    %45 = vector.broadcast %44 : vector<8x1xi1> to vector<8x32xi1>
    %46 = arith.select %45, %40, %17 : vector<8x32xi1>, vector<8x32xf32>
    %47 = vector.shape_cast %43 : vector<8x1xi1> to vector<8x1xi1>
    %48 = vector.broadcast %47 : vector<8x1xi1> to vector<8x32xi1>
    %49 = arith.select %48, %38, %19 : vector<8x32xi1>, vector<8x32xf32>
    %c0_24 = arith.constant 0 : index
    %c0_25 = arith.constant 0 : index
    %c0_26 = arith.constant 0 : index
    %50 = vector.load %arg12[%c0_24, %c0_25, %c0_26] : memref<10x8x32xf32, #tpu.memory_space<vmem>>, vector<1x8x32xf32>
    %51 = vector.shape_cast %50 : vector<1x8x32xf32> to vector<8x32xf32>
    %52 = vector.shape_cast %46 : vector<8x32xf32> to vector<1x8x32xf32>
    tpu.vector_store %arg12[%c0_24, %c0_25, %c0_26], %52 {strides = array<i32>} : memref<10x8x32xf32, #tpu.memory_space<vmem>>, vector<1x8x32xf32>,
    %c1 = arith.constant 1 : index
    %c0_27 = arith.constant 0 : index
    %c0_28 = arith.constant 0 : index
    %53 = vector.load %arg13[%c1, %c0_27, %c0_28] : memref<10x8x128xf32, #tpu.memory_space<vmem>>, vector<1x8x128xf32>
    %54 = vector.shape_cast %53 : vector<1x8x128xf32> to vector<8x128xf32>
    %55 = arith.truncf %46 : vector<8x32xf32> to vector<8x32xbf16>
    %cst_29 = arith.constant dense<0.000000e+00> : vector<8x128xf32>
    %56 = tpu.matmul %55, %15, %cst_29 {dimension_numbers = #tpu.dot_dimension_numbers<[1], [0], [0], [1], [0, 0, 1, 1], [], []>} : vector<8x32xbf16>, vector<32x128xbf16>, vector<8x128xf32> -> vector<8x128xf32>
    %57 = arith.addf %54, %56 : vector<8x128xf32>
    %58 = math.tanh %57 : vector<8x128xf32>
    %59 = arith.negf %57 : vector<8x128xf32>
    %60 = math.exp %59 : vector<8x128xf32>
    %cst_30 = arith.constant 1.000000e+00 : f32
    %61 = vector.broadcast %cst_30 : f32 to vector<8x128xf32>
    %62 = arith.addf %61, %60 : vector<8x128xf32>
    %63 = arith.divf %61, %62 : vector<8x128xf32>
    %64 = arith.select %5, %58, %63 : vector<8x128xi1>, vector<8x128xf32>
    %65 = vector.extract_strided_slice %64 {offsets = [0, 0], sizes = [8, 32], strides = [1, 1]} : vector<8x128xf32> to vector<8x32xf32>
    %66 = vector.extract_strided_slice %64 {offsets = [0, 32], sizes = [8, 32], strides = [1, 1]} : vector<8x128xf32> to vector<8x32xf32>
    %67 = vector.extract_strided_slice %64 {offsets = [0, 64], sizes = [8, 32], strides = [1, 1]} : vector<8x128xf32> to vector<8x32xf32>
    %68 = vector.extract_strided_slice %64 {offsets = [0, 96], sizes = [8, 32], strides = [1, 1]} : vector<8x128xf32> to vector<8x32xf32>
    %69 = arith.mulf %66, %49 : vector<8x32xf32>
    %70 = arith.mulf %65, %67 : vector<8x32xf32>
    %71 = arith.addf %69, %70 : vector<8x32xf32>
    %72 = math.tanh %71 : vector<8x32xf32>
    %73 = arith.mulf %68, %72 : vector<8x32xf32>
    %c0_31 = arith.constant 0 : index
    %c0_32 = arith.constant 0 : index
    %74 = vector.load %arg1[%c0_31, %c0_32] : memref<8x1xi32, #tpu.memory_space<vmem>>, vector<8x1xi32>
    %c1_i32 = arith.constant 1 : i32
    %75 = vector.broadcast %c1_i32 : i32 to vector<8x1xi32>
    %76 = arith.cmpi sgt, %74, %75 : vector<8x1xi32>
    %77 = vector.shape_cast %76 : vector<8x1xi1> to vector<8x1xi1>
    %78 = vector.broadcast %77 : vector<8x1xi1> to vector<8x32xi1>
    %79 = arith.select %78, %73, %46 : vector<8x32xi1>, vector<8x32xf32>
    %80 = vector.shape_cast %76 : vector<8x1xi1> to vector<8x1xi1>
    %81 = vector.broadcast %80 : vector<8x1xi1> to vector<8x32xi1>
    %82 = arith.select %81, %71, %49 : vector<8x32xi1>, vector<8x32xf32>
    %c1_33 = arith.constant 1 : index
    %c0_34 = arith.constant 0 : index
    %c0_35 = arith.constant 0 : index
    %83 = vector.load %arg12[%c1_33, %c0_34, %c0_35] : memref<10x8x32xf32, #tpu.memory_space<vmem>>, vector<1x8x32xf32>
    %84 = vector.shape_cast %83 : vector<1x8x32xf32> to vector<8x32xf32>
    %85 = vector.shape_cast %79 : vector<8x32xf32> to vector<1x8x32xf32>
    tpu.vector_store %arg12[%c1_33, %c0_34, %c0_35], %85 {strides = array<i32>} : memref<10x8x32xf32, #tpu.memory_space<vmem>>, vector<1x8x32xf32>,
    %c2 = arith.constant 2 : index
    %c0_36 = arith.constant 0 : index
    %c0_37 = arith.constant 0 : index
    %86 = vector.load %arg13[%c2, %c0_36, %c0_37] : memref<10x8x128xf32, #tpu.memory_space<vmem>>, vector<1x8x128xf32>
    %87 = vector.shape_cast %86 : vector<1x8x128xf32> to vector<8x128xf32>
    %88 = arith.truncf %79 : vector<8x32xf32> to vector<8x32xbf16>
    %cst_38 = arith.constant dense<0.000000e+00> : vector<8x128xf32>
    %89 = tpu.matmul %88, %15, %cst_38 {dimension_numbers = #tpu.dot_dimension_numbers<[1], [0], [0], [1], [0, 0, 1, 1], [], []>} : vector<8x32xbf16>, vector<32x128xbf16>, vector<8x128xf32> -> vector<8x128xf32>
    %90 = arith.addf %87, %89 : vector<8x128xf32>
    %91 = math.tanh %90 : vector<8x128xf32>
    %92 = arith.negf %90 : vector<8x128xf32>
    %93 = math.exp %92 : vector<8x128xf32>
    %cst_39 = arith.constant 1.000000e+00 : f32
    %94 = vector.broadcast %cst_39 : f32 to vector<8x128xf32>
    %95 = arith.addf %94, %93 : vector<8x128xf32>
    %96 = arith.divf %94, %95 : vector<8x128xf32>
    %97 = arith.select %5, %91, %96 : vector<8x128xi1>, vector<8x128xf32>
    %98 = vector.extract_strided_slice %97 {offsets = [0, 0], sizes = [8, 32], strides = [1, 1]} : vector<8x128xf32> to vector<8x32xf32>
    %99 = vector.extract_strided_slice %97 {offsets = [0, 32], sizes = [8, 32], strides = [1, 1]} : vector<8x128xf32> to vector<8x32xf32>
    %100 = vector.extract_strided_slice %97 {offsets = [0, 64], sizes = [8, 32], strides = [1, 1]} : vector<8x128xf32> to vector<8x32xf32>
    %101 = vector.extract_strided_slice %97 {offsets = [0, 96], sizes = [8, 32], strides = [1, 1]} : vector<8x128xf32> to vector<8x32xf32>
    %102 = arith.mulf %99, %82 : vector<8x32xf32>
    %103 = arith.mulf %98, %100 : vector<8x32xf32>
    %104 = arith.addf %102, %103 : vector<8x32xf32>
    %105 = math.tanh %104 : vector<8x32xf32>
    %106 = arith.mulf %101, %105 : vector<8x32xf32>
    %c0_40 = arith.constant 0 : index
    %c0_41 = arith.constant 0 : index
    %107 = vector.load %arg1[%c0_40, %c0_41] : memref<8x1xi32, #tpu.memory_space<vmem>>, vector<8x1xi32>
    %c2_i32 = arith.constant 2 : i32
    %108 = vector.broadcast %c2_i32 : i32 to vector<8x1xi32>
    %109 = arith.cmpi sgt, %107, %108 : vector<8x1xi32>
    %110 = vector.shape_cast %109 : vector<8x1xi1> to vector<8x1xi1>
    %111 = vector.broadcast %110 : vector<8x1xi1> to vector<8x32xi1>
    %112 = arith.select %111, %106, %79 : vector<8x32xi1>, vector<8x32xf32>
    %113 = vector.shape_cast %109 : vector<8x1xi1> to vector<8x1xi1>
    %114 = vector.broadcast %113 : vector<8x1xi1> to vector<8x32xi1>
    %115 = arith.select %114, %104, %82 : vector<8x32xi1>, vector<8x32xf32>
    %c2_42 = arith.constant 2 : index
    %c0_43 = arith.constant 0 : index
    %c0_44 = arith.constant 0 : index
    %116 = vector.load %arg12[%c2_42, %c0_43, %c0_44] : memref<10x8x32xf32, #tpu.memory_space<vmem>>, vector<1x8x32xf32>
    %117 = vector.shape_cast %116 : vector<1x8x32xf32> to vector<8x32xf32>
    %118 = vector.shape_cast %112 : vector<8x32xf32> to vector<1x8x32xf32>
    tpu.vector_store %arg12[%c2_42, %c0_43, %c0_44], %118 {strides = array<i32>} : memref<10x8x32xf32, #tpu.memory_space<vmem>>, vector<1x8x32xf32>,
    %c3 = arith.constant 3 : index
    %c0_45 = arith.constant 0 : index
    %c0_46 = arith.constant 0 : index
    %119 = vector.load %arg13[%c3, %c0_45, %c0_46] : memref<10x8x128xf32, #tpu.memory_space<vmem>>, vector<1x8x128xf32>
    %120 = vector.shape_cast %119 : vector<1x8x128xf32> to vector<8x128xf32>
    %121 = arith.truncf %112 : vector<8x32xf32> to vector<8x32xbf16>
    %cst_47 = arith.constant dense<0.000000e+00> : vector<8x128xf32>
    %122 = tpu.matmul %121, %15, %cst_47 {dimension_numbers = #tpu.dot_dimension_numbers<[1], [0], [0], [1], [0, 0, 1, 1], [], []>} : vector<8x32xbf16>, vector<32x128xbf16>, vector<8x128xf32> -> vector<8x128xf32>
    %123 = arith.addf %120, %122 : vector<8x128xf32>
    %124 = math.tanh %123 : vector<8x128xf32>
    %125 = arith.negf %123 : vector<8x128xf32>
    %126 = math.exp %125 : vector<8x128xf32>
    %cst_48 = arith.constant 1.000000e+00 : f32
    %127 = vector.broadcast %cst_48 : f32 to vector<8x128xf32>
    %128 = arith.addf %127, %126 : vector<8x128xf32>
    %129 = arith.divf %127, %128 : vector<8x128xf32>
    %130 = arith.select %5, %124, %129 : vector<8x128xi1>, vector<8x128xf32>
    %131 = vector.extract_strided_slice %130 {offsets = [0, 0], sizes = [8, 32], strides = [1, 1]} : vector<8x128xf32> to vector<8x32xf32>
    %132 = vector.extract_strided_slice %130 {offsets = [0, 32], sizes = [8, 32], strides = [1, 1]} : vector<8x128xf32> to vector<8x32xf32>
    %133 = vector.extract_strided_slice %130 {offsets = [0, 64], sizes = [8, 32], strides = [1, 1]} : vector<8x128xf32> to vector<8x32xf32>
    %134 = vector.extract_strided_slice %130 {offsets = [0, 96], sizes = [8, 32], strides = [1, 1]} : vector<8x128xf32> to vector<8x32xf32>
    %135 = arith.mulf %132, %115 : vector<8x32xf32>
    %136 = arith.mulf %131, %133 : vector<8x32xf32>
    %137 = arith.addf %135, %136 : vector<8x32xf32>
    %138 = math.tanh %137 : vector<8x32xf32>
    %139 = arith.mulf %134, %138 : vector<8x32xf32>
    %c0_49 = arith.constant 0 : index
    %c0_50 = arith.constant 0 : index
    %140 = vector.load %arg1[%c0_49, %c0_50] : memref<8x1xi32, #tpu.memory_space<vmem>>, vector<8x1xi32>
    %c3_i32 = arith.constant 3 : i32
    %141 = vector.broadcast %c3_i32 : i32 to vector<8x1xi32>
    %142 = arith.cmpi sgt, %140, %141 : vector<8x1xi32>
    %143 = vector.shape_cast %142 : vector<8x1xi1> to vector<8x1xi1>
    %144 = vector.broadcast %143 : vector<8x1xi1> to vector<8x32xi1>
    %145 = arith.select %144, %139, %112 : vector<8x32xi1>, vector<8x32xf32>
    %146 = vector.shape_cast %142 : vector<8x1xi1> to vector<8x1xi1>
    %147 = vector.broadcast %146 : vector<8x1xi1> to vector<8x32xi1>
    %148 = arith.select %147, %137, %115 : vector<8x32xi1>, vector<8x32xf32>
    %c3_51 = arith.constant 3 : index
    %c0_52 = arith.constant 0 : index
    %c0_53 = arith.constant 0 : index
    %149 = vector.load %arg12[%c3_51, %c0_52, %c0_53] : memref<10x8x32xf32, #tpu.memory_space<vmem>>, vector<1x8x32xf32>
    %150 = vector.shape_cast %149 : vector<1x8x32xf32> to vector<8x32xf32>
    %151 = vector.shape_cast %145 : vector<8x32xf32> to vector<1x8x32xf32>
    tpu.vector_store %arg12[%c3_51, %c0_52, %c0_53], %151 {strides = array<i32>} : memref<10x8x32xf32, #tpu.memory_space<vmem>>, vector<1x8x32xf32>,
    %c4 = arith.constant 4 : index
    %c0_54 = arith.constant 0 : index
    %c0_55 = arith.constant 0 : index
    %152 = vector.load %arg13[%c4, %c0_54, %c0_55] : memref<10x8x128xf32, #tpu.memory_space<vmem>>, vector<1x8x128xf32>
    %153 = vector.shape_cast %152 : vector<1x8x128xf32> to vector<8x128xf32>
    %154 = arith.truncf %145 : vector<8x32xf32> to vector<8x32xbf16>
    %cst_56 = arith.constant dense<0.000000e+00> : vector<8x128xf32>
    %155 = tpu.matmul %154, %15, %cst_56 {dimension_numbers = #tpu.dot_dimension_numbers<[1], [0], [0], [1], [0, 0, 1, 1], [], []>} : vector<8x32xbf16>, vector<32x128xbf16>, vector<8x128xf32> -> vector<8x128xf32>
    %156 = arith.addf %153, %155 : vector<8x128xf32>
    %157 = math.tanh %156 : vector<8x128xf32>
    %158 = arith.negf %156 : vector<8x128xf32>
    %159 = math.exp %158 : vector<8x128xf32>
    %cst_57 = arith.constant 1.000000e+00 : f32
    %160 = vector.broadcast %cst_57 : f32 to vector<8x128xf32>
    %161 = arith.addf %160, %159 : vector<8x128xf32>
    %162 = arith.divf %160, %161 : vector<8x128xf32>
    %163 = arith.select %5, %157, %162 : vector<8x128xi1>, vector<8x128xf32>
    %164 = vector.extract_strided_slice %163 {offsets = [0, 0], sizes = [8, 32], strides = [1, 1]} : vector<8x128xf32> to vector<8x32xf32>
    %165 = vector.extract_strided_slice %163 {offsets = [0, 32], sizes = [8, 32], strides = [1, 1]} : vector<8x128xf32> to vector<8x32xf32>
    %166 = vector.extract_strided_slice %163 {offsets = [0, 64], sizes = [8, 32], strides = [1, 1]} : vector<8x128xf32> to vector<8x32xf32>
    %167 = vector.extract_strided_slice %163 {offsets = [0, 96], sizes = [8, 32], strides = [1, 1]} : vector<8x128xf32> to vector<8x32xf32>
    %168 = arith.mulf %165, %148 : vector<8x32xf32>
    %169 = arith.mulf %164, %166 : vector<8x32xf32>
    %170 = arith.addf %168, %169 : vector<8x32xf32>
    %171 = math.tanh %170 : vector<8x32xf32>
    %172 = arith.mulf %167, %171 : vector<8x32xf32>
    %c0_58 = arith.constant 0 : index
    %c0_59 = arith.constant 0 : index
    %173 = vector.load %arg1[%c0_58, %c0_59] : memref<8x1xi32, #tpu.memory_space<vmem>>, vector<8x1xi32>
    %c4_i32 = arith.constant 4 : i32
    %174 = vector.broadcast %c4_i32 : i32 to vector<8x1xi32>
    %175 = arith.cmpi sgt, %173, %174 : vector<8x1xi32>
    %176 = vector.shape_cast %175 : vector<8x1xi1> to vector<8x1xi1>
    %177 = vector.broadcast %176 : vector<8x1xi1> to vector<8x32xi1>
    %178 = arith.select %177, %172, %145 : vector<8x32xi1>, vector<8x32xf32>
    %179 = vector.shape_cast %175 : vector<8x1xi1> to vector<8x1xi1>
    %180 = vector.broadcast %179 : vector<8x1xi1> to vector<8x32xi1>
    %181 = arith.select %180, %170, %148 : vector<8x32xi1>, vector<8x32xf32>
    %c4_60 = arith.constant 4 : index
    %c0_61 = arith.constant 0 : index
    %c0_62 = arith.constant 0 : index
    %182 = vector.load %arg12[%c4_60, %c0_61, %c0_62] : memref<10x8x32xf32, #tpu.memory_space<vmem>>, vector<1x8x32xf32>
    %183 = vector.shape_cast %182 : vector<1x8x32xf32> to vector<8x32xf32>
    %184 = vector.shape_cast %178 : vector<8x32xf32> to vector<1x8x32xf32>
    tpu.vector_store %arg12[%c4_60, %c0_61, %c0_62], %184 {strides = array<i32>} : memref<10x8x32xf32, #tpu.memory_space<vmem>>, vector<1x8x32xf32>,
    %c5 = arith.constant 5 : index
    %c0_63 = arith.constant 0 : index
    %c0_64 = arith.constant 0 : index
    %185 = vector.load %arg13[%c5, %c0_63, %c0_64] : memref<10x8x128xf32, #tpu.memory_space<vmem>>, vector<1x8x128xf32>
    %186 = vector.shape_cast %185 : vector<1x8x128xf32> to vector<8x128xf32>
    %187 = arith.truncf %178 : vector<8x32xf32> to vector<8x32xbf16>
    %cst_65 = arith.constant dense<0.000000e+00> : vector<8x128xf32>
    %188 = tpu.matmul %187, %15, %cst_65 {dimension_numbers = #tpu.dot_dimension_numbers<[1], [0], [0], [1], [0, 0, 1, 1], [], []>} : vector<8x32xbf16>, vector<32x128xbf16>, vector<8x128xf32> -> vector<8x128xf32>
    %189 = arith.addf %186, %188 : vector<8x128xf32>
    %190 = math.tanh %189 : vector<8x128xf32>
    %191 = arith.negf %189 : vector<8x128xf32>
    %192 = math.exp %191 : vector<8x128xf32>
    %cst_66 = arith.constant 1.000000e+00 : f32
    %193 = vector.broadcast %cst_66 : f32 to vector<8x128xf32>
    %194 = arith.addf %193, %192 : vector<8x128xf32>
    %195 = arith.divf %193, %194 : vector<8x128xf32>
    %196 = arith.select %5, %190, %195 : vector<8x128xi1>, vector<8x128xf32>
    %197 = vector.extract_strided_slice %196 {offsets = [0, 0], sizes = [8, 32], strides = [1, 1]} : vector<8x128xf32> to vector<8x32xf32>
    %198 = vector.extract_strided_slice %196 {offsets = [0, 32], sizes = [8, 32], strides = [1, 1]} : vector<8x128xf32> to vector<8x32xf32>
    %199 = vector.extract_strided_slice %196 {offsets = [0, 64], sizes = [8, 32], strides = [1, 1]} : vector<8x128xf32> to vector<8x32xf32>
    %200 = vector.extract_strided_slice %196 {offsets = [0, 96], sizes = [8, 32], strides = [1, 1]} : vector<8x128xf32> to vector<8x32xf32>
    %201 = arith.mulf %198, %181 : vector<8x32xf32>
    %202 = arith.mulf %197, %199 : vector<8x32xf32>
    %203 = arith.addf %201, %202 : vector<8x32xf32>
    %204 = math.tanh %203 : vector<8x32xf32>
    %205 = arith.mulf %200, %204 : vector<8x32xf32>
    %c0_67 = arith.constant 0 : index
    %c0_68 = arith.constant 0 : index
    %206 = vector.load %arg1[%c0_67, %c0_68] : memref<8x1xi32, #tpu.memory_space<vmem>>, vector<8x1xi32>
    %c5_i32 = arith.constant 5 : i32
    %207 = vector.broadcast %c5_i32 : i32 to vector<8x1xi32>
    %208 = arith.cmpi sgt, %206, %207 : vector<8x1xi32>
    %209 = vector.shape_cast %208 : vector<8x1xi1> to vector<8x1xi1>
    %210 = vector.broadcast %209 : vector<8x1xi1> to vector<8x32xi1>
    %211 = arith.select %210, %205, %178 : vector<8x32xi1>, vector<8x32xf32>
    %212 = vector.shape_cast %208 : vector<8x1xi1> to vector<8x1xi1>
    %213 = vector.broadcast %212 : vector<8x1xi1> to vector<8x32xi1>
    %214 = arith.select %213, %203, %181 : vector<8x32xi1>, vector<8x32xf32>
    %c5_69 = arith.constant 5 : index
    %c0_70 = arith.constant 0 : index
    %c0_71 = arith.constant 0 : index
    %215 = vector.load %arg12[%c5_69, %c0_70, %c0_71] : memref<10x8x32xf32, #tpu.memory_space<vmem>>, vector<1x8x32xf32>
    %216 = vector.shape_cast %215 : vector<1x8x32xf32> to vector<8x32xf32>
    %217 = vector.shape_cast %211 : vector<8x32xf32> to vector<1x8x32xf32>
    tpu.vector_store %arg12[%c5_69, %c0_70, %c0_71], %217 {strides = array<i32>} : memref<10x8x32xf32, #tpu.memory_space<vmem>>, vector<1x8x32xf32>,
    %c6 = arith.constant 6 : index
    %c0_72 = arith.constant 0 : index
    %c0_73 = arith.constant 0 : index
    %218 = vector.load %arg13[%c6, %c0_72, %c0_73] : memref<10x8x128xf32, #tpu.memory_space<vmem>>, vector<1x8x128xf32>
    %219 = vector.shape_cast %218 : vector<1x8x128xf32> to vector<8x128xf32>
    %220 = arith.truncf %211 : vector<8x32xf32> to vector<8x32xbf16>
    %cst_74 = arith.constant dense<0.000000e+00> : vector<8x128xf32>
    %221 = tpu.matmul %220, %15, %cst_74 {dimension_numbers = #tpu.dot_dimension_numbers<[1], [0], [0], [1], [0, 0, 1, 1], [], []>} : vector<8x32xbf16>, vector<32x128xbf16>, vector<8x128xf32> -> vector<8x128xf32>
    %222 = arith.addf %219, %221 : vector<8x128xf32>
    %223 = math.tanh %222 : vector<8x128xf32>
    %224 = arith.negf %222 : vector<8x128xf32>
    %225 = math.exp %224 : vector<8x128xf32>
    %cst_75 = arith.constant 1.000000e+00 : f32
    %226 = vector.broadcast %cst_75 : f32 to vector<8x128xf32>
    %227 = arith.addf %226, %225 : vector<8x128xf32>
    %228 = arith.divf %226, %227 : vector<8x128xf32>
    %229 = arith.select %5, %223, %228 : vector<8x128xi1>, vector<8x128xf32>
    %230 = vector.extract_strided_slice %229 {offsets = [0, 0], sizes = [8, 32], strides = [1, 1]} : vector<8x128xf32> to vector<8x32xf32>
    %231 = vector.extract_strided_slice %229 {offsets = [0, 32], sizes = [8, 32], strides = [1, 1]} : vector<8x128xf32> to vector<8x32xf32>
    %232 = vector.extract_strided_slice %229 {offsets = [0, 64], sizes = [8, 32], strides = [1, 1]} : vector<8x128xf32> to vector<8x32xf32>
    %233 = vector.extract_strided_slice %229 {offsets = [0, 96], sizes = [8, 32], strides = [1, 1]} : vector<8x128xf32> to vector<8x32xf32>
    %234 = arith.mulf %231, %214 : vector<8x32xf32>
    %235 = arith.mulf %230, %232 : vector<8x32xf32>
    %236 = arith.addf %234, %235 : vector<8x32xf32>
    %237 = math.tanh %236 : vector<8x32xf32>
    %238 = arith.mulf %233, %237 : vector<8x32xf32>
    %c0_76 = arith.constant 0 : index
    %c0_77 = arith.constant 0 : index
    %239 = vector.load %arg1[%c0_76, %c0_77] : memref<8x1xi32, #tpu.memory_space<vmem>>, vector<8x1xi32>
    %c6_i32 = arith.constant 6 : i32
    %240 = vector.broadcast %c6_i32 : i32 to vector<8x1xi32>
    %241 = arith.cmpi sgt, %239, %240 : vector<8x1xi32>
    %242 = vector.shape_cast %241 : vector<8x1xi1> to vector<8x1xi1>
    %243 = vector.broadcast %242 : vector<8x1xi1> to vector<8x32xi1>
    %244 = arith.select %243, %238, %211 : vector<8x32xi1>, vector<8x32xf32>
    %245 = vector.shape_cast %241 : vector<8x1xi1> to vector<8x1xi1>
    %246 = vector.broadcast %245 : vector<8x1xi1> to vector<8x32xi1>
    %247 = arith.select %246, %236, %214 : vector<8x32xi1>, vector<8x32xf32>
    %c6_78 = arith.constant 6 : index
    %c0_79 = arith.constant 0 : index
    %c0_80 = arith.constant 0 : index
    %248 = vector.load %arg12[%c6_78, %c0_79, %c0_80] : memref<10x8x32xf32, #tpu.memory_space<vmem>>, vector<1x8x32xf32>
    %249 = vector.shape_cast %248 : vector<1x8x32xf32> to vector<8x32xf32>
    %250 = vector.shape_cast %244 : vector<8x32xf32> to vector<1x8x32xf32>
    tpu.vector_store %arg12[%c6_78, %c0_79, %c0_80], %250 {strides = array<i32>} : memref<10x8x32xf32, #tpu.memory_space<vmem>>, vector<1x8x32xf32>,
    %c7 = arith.constant 7 : index
    %c0_81 = arith.constant 0 : index
    %c0_82 = arith.constant 0 : index
    %251 = vector.load %arg13[%c7, %c0_81, %c0_82] : memref<10x8x128xf32, #tpu.memory_space<vmem>>, vector<1x8x128xf32>
    %252 = vector.shape_cast %251 : vector<1x8x128xf32> to vector<8x128xf32>
    %253 = arith.truncf %244 : vector<8x32xf32> to vector<8x32xbf16>
    %cst_83 = arith.constant dense<0.000000e+00> : vector<8x128xf32>
    %254 = tpu.matmul %253, %15, %cst_83 {dimension_numbers = #tpu.dot_dimension_numbers<[1], [0], [0], [1], [0, 0, 1, 1], [], []>} : vector<8x32xbf16>, vector<32x128xbf16>, vector<8x128xf32> -> vector<8x128xf32>
    %255 = arith.addf %252, %254 : vector<8x128xf32>
    %256 = math.tanh %255 : vector<8x128xf32>
    %257 = arith.negf %255 : vector<8x128xf32>
    %258 = math.exp %257 : vector<8x128xf32>
    %cst_84 = arith.constant 1.000000e+00 : f32
    %259 = vector.broadcast %cst_84 : f32 to vector<8x128xf32>
    %260 = arith.addf %259, %258 : vector<8x128xf32>
    %261 = arith.divf %259, %260 : vector<8x128xf32>
    %262 = arith.select %5, %256, %261 : vector<8x128xi1>, vector<8x128xf32>
    %263 = vector.extract_strided_slice %262 {offsets = [0, 0], sizes = [8, 32], strides = [1, 1]} : vector<8x128xf32> to vector<8x32xf32>
    %264 = vector.extract_strided_slice %262 {offsets = [0, 32], sizes = [8, 32], strides = [1, 1]} : vector<8x128xf32> to vector<8x32xf32>
    %265 = vector.extract_strided_slice %262 {offsets = [0, 64], sizes = [8, 32], strides = [1, 1]} : vector<8x128xf32> to vector<8x32xf32>
    %266 = vector.extract_strided_slice %262 {offsets = [0, 96], sizes = [8, 32], strides = [1, 1]} : vector<8x128xf32> to vector<8x32xf32>
    %267 = arith.mulf %264, %247 : vector<8x32xf32>
    %268 = arith.mulf %263, %265 : vector<8x32xf32>
    %269 = arith.addf %267, %268 : vector<8x32xf32>
    %270 = math.tanh %269 : vector<8x32xf32>
    %271 = arith.mulf %266, %270 : vector<8x32xf32>
    %c0_85 = arith.constant 0 : index
    %c0_86 = arith.constant 0 : index
    %272 = vector.load %arg1[%c0_85, %c0_86] : memref<8x1xi32, #tpu.memory_space<vmem>>, vector<8x1xi32>
    %c7_i32 = arith.constant 7 : i32
    %273 = vector.broadcast %c7_i32 : i32 to vector<8x1xi32>
    %274 = arith.cmpi sgt, %272, %273 : vector<8x1xi32>
    %275 = vector.shape_cast %274 : vector<8x1xi1> to vector<8x1xi1>
    %276 = vector.broadcast %275 : vector<8x1xi1> to vector<8x32xi1>
    %277 = arith.select %276, %271, %244 : vector<8x32xi1>, vector<8x32xf32>
    %278 = vector.shape_cast %274 : vector<8x1xi1> to vector<8x1xi1>
    %279 = vector.broadcast %278 : vector<8x1xi1> to vector<8x32xi1>
    %280 = arith.select %279, %269, %247 : vector<8x32xi1>, vector<8x32xf32>
    %c7_87 = arith.constant 7 : index
    %c0_88 = arith.constant 0 : index
    %c0_89 = arith.constant 0 : index
    %281 = vector.load %arg12[%c7_87, %c0_88, %c0_89] : memref<10x8x32xf32, #tpu.memory_space<vmem>>, vector<1x8x32xf32>
    %282 = vector.shape_cast %281 : vector<1x8x32xf32> to vector<8x32xf32>
    %283 = vector.shape_cast %277 : vector<8x32xf32> to vector<1x8x32xf32>
    tpu.vector_store %arg12[%c7_87, %c0_88, %c0_89], %283 {strides = array<i32>} : memref<10x8x32xf32, #tpu.memory_space<vmem>>, vector<1x8x32xf32>,
    %c8 = arith.constant 8 : index
    %c0_90 = arith.constant 0 : index
    %c0_91 = arith.constant 0 : index
    %284 = vector.load %arg13[%c8, %c0_90, %c0_91] : memref<10x8x128xf32, #tpu.memory_space<vmem>>, vector<1x8x128xf32>
    %285 = vector.shape_cast %284 : vector<1x8x128xf32> to vector<8x128xf32>
    %286 = arith.truncf %277 : vector<8x32xf32> to vector<8x32xbf16>
    %cst_92 = arith.constant dense<0.000000e+00> : vector<8x128xf32>
    %287 = tpu.matmul %286, %15, %cst_92 {dimension_numbers = #tpu.dot_dimension_numbers<[1], [0], [0], [1], [0, 0, 1, 1], [], []>} : vector<8x32xbf16>, vector<32x128xbf16>, vector<8x128xf32> -> vector<8x128xf32>
    %288 = arith.addf %285, %287 : vector<8x128xf32>
    %289 = math.tanh %288 : vector<8x128xf32>
    %290 = arith.negf %288 : vector<8x128xf32>
    %291 = math.exp %290 : vector<8x128xf32>
    %cst_93 = arith.constant 1.000000e+00 : f32
    %292 = vector.broadcast %cst_93 : f32 to vector<8x128xf32>
    %293 = arith.addf %292, %291 : vector<8x128xf32>
    %294 = arith.divf %292, %293 : vector<8x128xf32>
    %295 = arith.select %5, %289, %294 : vector<8x128xi1>, vector<8x128xf32>
    %296 = vector.extract_strided_slice %295 {offsets = [0, 0], sizes = [8, 32], strides = [1, 1]} : vector<8x128xf32> to vector<8x32xf32>
    %297 = vector.extract_strided_slice %295 {offsets = [0, 32], sizes = [8, 32], strides = [1, 1]} : vector<8x128xf32> to vector<8x32xf32>
    %298 = vector.extract_strided_slice %295 {offsets = [0, 64], sizes = [8, 32], strides = [1, 1]} : vector<8x128xf32> to vector<8x32xf32>
    %299 = vector.extract_strided_slice %295 {offsets = [0, 96], sizes = [8, 32], strides = [1, 1]} : vector<8x128xf32> to vector<8x32xf32>
    %300 = arith.mulf %297, %280 : vector<8x32xf32>
    %301 = arith.mulf %296, %298 : vector<8x32xf32>
    %302 = arith.addf %300, %301 : vector<8x32xf32>
    %303 = math.tanh %302 : vector<8x32xf32>
    %304 = arith.mulf %299, %303 : vector<8x32xf32>
    %c0_94 = arith.constant 0 : index
    %c0_95 = arith.constant 0 : index
    %305 = vector.load %arg1[%c0_94, %c0_95] : memref<8x1xi32, #tpu.memory_space<vmem>>, vector<8x1xi32>
    %c8_i32 = arith.constant 8 : i32
    %306 = vector.broadcast %c8_i32 : i32 to vector<8x1xi32>
    %307 = arith.cmpi sgt, %305, %306 : vector<8x1xi32>
    %308 = vector.shape_cast %307 : vector<8x1xi1> to vector<8x1xi1>
    %309 = vector.broadcast %308 : vector<8x1xi1> to vector<8x32xi1>
    %310 = arith.select %309, %304, %277 : vector<8x32xi1>, vector<8x32xf32>
    %311 = vector.shape_cast %307 : vector<8x1xi1> to vector<8x1xi1>
    %312 = vector.broadcast %311 : vector<8x1xi1> to vector<8x32xi1>
    %313 = arith.select %312, %302, %280 : vector<8x32xi1>, vector<8x32xf32>
    %c8_96 = arith.constant 8 : index
    %c0_97 = arith.constant 0 : index
    %c0_98 = arith.constant 0 : index
    %314 = vector.load %arg12[%c8_96, %c0_97, %c0_98] : memref<10x8x32xf32, #tpu.memory_space<vmem>>, vector<1x8x32xf32>
    %315 = vector.shape_cast %314 : vector<1x8x32xf32> to vector<8x32xf32>
    %316 = vector.shape_cast %310 : vector<8x32xf32> to vector<1x8x32xf32>
    tpu.vector_store %arg12[%c8_96, %c0_97, %c0_98], %316 {strides = array<i32>} : memref<10x8x32xf32, #tpu.memory_space<vmem>>, vector<1x8x32xf32>,
    %c9 = arith.constant 9 : index
    %c0_99 = arith.constant 0 : index
    %c0_100 = arith.constant 0 : index
    %317 = vector.load %arg13[%c9, %c0_99, %c0_100] : memref<10x8x128xf32, #tpu.memory_space<vmem>>, vector<1x8x128xf32>
    %318 = vector.shape_cast %317 : vector<1x8x128xf32> to vector<8x128xf32>
    %319 = arith.truncf %310 : vector<8x32xf32> to vector<8x32xbf16>
    %cst_101 = arith.constant dense<0.000000e+00> : vector<8x128xf32>
    %320 = tpu.matmul %319, %15, %cst_101 {dimension_numbers = #tpu.dot_dimension_numbers<[1], [0], [0], [1], [0, 0, 1, 1], [], []>} : vector<8x32xbf16>, vector<32x128xbf16>, vector<8x128xf32> -> vector<8x128xf32>
    %321 = arith.addf %318, %320 : vector<8x128xf32>
    %322 = math.tanh %321 : vector<8x128xf32>
    %323 = arith.negf %321 : vector<8x128xf32>
    %324 = math.exp %323 : vector<8x128xf32>
    %cst_102 = arith.constant 1.000000e+00 : f32
    %325 = vector.broadcast %cst_102 : f32 to vector<8x128xf32>
    %326 = arith.addf %325, %324 : vector<8x128xf32>
    %327 = arith.divf %325, %326 : vector<8x128xf32>
    %328 = arith.select %5, %322, %327 : vector<8x128xi1>, vector<8x128xf32>
    %329 = vector.extract_strided_slice %328 {offsets = [0, 0], sizes = [8, 32], strides = [1, 1]} : vector<8x128xf32> to vector<8x32xf32>
    %330 = vector.extract_strided_slice %328 {offsets = [0, 32], sizes = [8, 32], strides = [1, 1]} : vector<8x128xf32> to vector<8x32xf32>
    %331 = vector.extract_strided_slice %328 {offsets = [0, 64], sizes = [8, 32], strides = [1, 1]} : vector<8x128xf32> to vector<8x32xf32>
    %332 = vector.extract_strided_slice %328 {offsets = [0, 96], sizes = [8, 32], strides = [1, 1]} : vector<8x128xf32> to vector<8x32xf32>
    %333 = arith.mulf %330, %313 : vector<8x32xf32>
    %334 = arith.mulf %329, %331 : vector<8x32xf32>
    %335 = arith.addf %333, %334 : vector<8x32xf32>
    %336 = math.tanh %335 : vector<8x32xf32>
    %337 = arith.mulf %332, %336 : vector<8x32xf32>
    %c0_103 = arith.constant 0 : index
    %c0_104 = arith.constant 0 : index
    %338 = vector.load %arg1[%c0_103, %c0_104] : memref<8x1xi32, #tpu.memory_space<vmem>>, vector<8x1xi32>
    %c9_i32 = arith.constant 9 : i32
    %339 = vector.broadcast %c9_i32 : i32 to vector<8x1xi32>
    %340 = arith.cmpi sgt, %338, %339 : vector<8x1xi32>
    %341 = vector.shape_cast %340 : vector<8x1xi1> to vector<8x1xi1>
    %342 = vector.broadcast %341 : vector<8x1xi1> to vector<8x32xi1>
    %343 = arith.select %342, %337, %310 : vector<8x32xi1>, vector<8x32xf32>
    %344 = vector.shape_cast %340 : vector<8x1xi1> to vector<8x1xi1>
    %345 = vector.broadcast %344 : vector<8x1xi1> to vector<8x32xi1>
    %346 = arith.select %345, %335, %313 : vector<8x32xi1>, vector<8x32xf32>
    %c9_105 = arith.constant 9 : index
    %c0_106 = arith.constant 0 : index
    %c0_107 = arith.constant 0 : index
    %347 = vector.load %arg12[%c9_105, %c0_106, %c0_107] : memref<10x8x32xf32, #tpu.memory_space<vmem>>, vector<1x8x32xf32>
    %348 = vector.shape_cast %347 : vector<1x8x32xf32> to vector<8x32xf32>
    %349 = vector.shape_cast %343 : vector<8x32xf32> to vector<1x8x32xf32>
    tpu.vector_store %arg12[%c9_105, %c0_106, %c0_107], %349 {strides = array<i32>} : memref<10x8x32xf32, #tpu.memory_space<vmem>>, vector<1x8x32xf32>,
    %c0_108 = arith.constant 0 : index
    %c0_109 = arith.constant 0 : index
    %c0_110 = arith.constant 0 : index
    %350 = vector.load %arg10[%c0_108, %c0_109, %c0_110] : memref<2x8x32xf32, #tpu.memory_space<vmem>>, vector<1x8x32xf32>
    %351 = vector.shape_cast %350 : vector<1x8x32xf32> to vector<8x32xf32>
    %352 = vector.shape_cast %343 : vector<8x32xf32> to vector<1x8x32xf32>
    tpu.vector_store %arg10[%c0_108, %c0_109, %c0_110], %352 {strides = array<i32>} : memref<2x8x32xf32, #tpu.memory_space<vmem>>, vector<1x8x32xf32>,
    %c0_111 = arith.constant 0 : index
    %c0_112 = arith.constant 0 : index
    %c0_113 = arith.constant 0 : index
    %353 = vector.load %arg11[%c0_111, %c0_112, %c0_113] : memref<2x8x32xf32, #tpu.memory_space<vmem>>, vector<1x8x32xf32>
    %354 = vector.shape_cast %353 : vector<1x8x32xf32> to vector<8x32xf32>
    %355 = vector.shape_cast %346 : vector<8x32xf32> to vector<1x8x32xf32>
    tpu.vector_store %arg11[%c0_111, %c0_112, %c0_113], %355 {strides = array<i32>} : memref<2x8x32xf32, #tpu.memory_space<vmem>>, vector<1x8x32xf32>,
    %c0_114 = arith.constant 0 : index
    %c0_115 = arith.constant 0 : index
    %c0_116 = arith.constant 0 : index
    %356 = vector.load %arg12[%c0_114, %c0_115, %c0_116] : memref<10x8x32xf32, #tpu.memory_space<vmem>>, vector<10x8x32xf32>
    %357 = vector.shape_cast %356 : vector<10x8x32xf32> to vector<80x32xf32>
    %358 = arith.truncf %357 : vector<80x32xf32> to vector<80x32xbf16>
    %c0_117 = arith.constant 0 : index
    %c0_118 = arith.constant 0 : index
    %359 = vector.load %arg5[%c0_117, %c0_118] : memref<32x128xbf16, #tpu.memory_space<vmem>>, vector<32x128xbf16>
    %cst_119 = arith.constant dense<0.000000e+00> : vector<80x128xf32>
    %360 = tpu.matmul %358, %359, %cst_119 {dimension_numbers = #tpu.dot_dimension_numbers<[1], [0], [0], [1], [0, 0, 1, 1], [], []>} : vector<80x32xbf16>, vector<32x128xbf16>, vector<80x128xf32> -> vector<80x128xf32>
    %c0_120 = arith.constant 0 : index
    %c0_121 = arith.constant 0 : index
    %361 = vector.load %arg9[%c0_120, %c0_121] : memref<1x128xf32, #tpu.memory_space<vmem>>, vector<1x128xf32>
    %362 = vector.broadcast %361 : vector<1x128xf32> to vector<80x128xf32>
    %363 = arith.addf %360, %362 : vector<80x128xf32>
    %364 = vector.shape_cast %363 : vector<80x128xf32> to vector<10x8x128xf32>
    %c0_122 = arith.constant 0 : index
    %c0_123 = arith.constant 0 : index
    %c0_124 = arith.constant 0 : index
    %365 = vector.load %arg13[%c0_122, %c0_123, %c0_124] : memref<10x8x128xf32, #tpu.memory_space<vmem>>, vector<10x8x128xf32>
    tpu.vector_store %arg13[%c0_122, %c0_123, %c0_124], %364 {strides = array<i32>} : memref<10x8x128xf32, #tpu.memory_space<vmem>>, vector<10x8x128xf32>,
    %c0_125 = arith.constant 0 : index
    %c0_126 = arith.constant 0 : index
    %366 = vector.load %arg7[%c0_125, %c0_126] : memref<32x128xbf16, #tpu.memory_space<vmem>>, vector<32x128xbf16>
    %c1_127 = arith.constant 1 : index
    %c0_128 = arith.constant 0 : index
    %c0_129 = arith.constant 0 : index
    %367 = vector.load %arg2[%c1_127, %c0_128, %c0_129] : memref<2x8x32xf32, #tpu.memory_space<vmem>>, vector<1x8x32xf32>
    %368 = vector.shape_cast %367 : vector<1x8x32xf32> to vector<8x32xf32>
    %c1_130 = arith.constant 1 : index
    %c0_131 = arith.constant 0 : index
    %c0_132 = arith.constant 0 : index
    %369 = vector.load %arg3[%c1_130, %c0_131, %c0_132] : memref<2x8x32xf32, #tpu.memory_space<vmem>>, vector<1x8x32xf32>
    %370 = vector.shape_cast %369 : vector<1x8x32xf32> to vector<8x32xf32>
    %c0_133 = arith.constant 0 : index
    %c0_134 = arith.constant 0 : index
    %c0_135 = arith.constant 0 : index
    %371 = vector.load %arg13[%c0_133, %c0_134, %c0_135] : memref<10x8x128xf32, #tpu.memory_space<vmem>>, vector<1x8x128xf32>
    %372 = vector.shape_cast %371 : vector<1x8x128xf32> to vector<8x128xf32>
    %373 = arith.truncf %368 : vector<8x32xf32> to vector<8x32xbf16>
    %cst_136 = arith.constant dense<0.000000e+00> : vector<8x128xf32>
    %374 = tpu.matmul %373, %366, %cst_136 {dimension_numbers = #tpu.dot_dimension_numbers<[1], [0], [0], [1], [0, 0, 1, 1], [], []>} : vector<8x32xbf16>, vector<32x128xbf16>, vector<8x128xf32> -> vector<8x128xf32>
    %375 = arith.addf %372, %374 : vector<8x128xf32>
    %376 = math.tanh %375 : vector<8x128xf32>
    %377 = arith.negf %375 : vector<8x128xf32>
    %378 = math.exp %377 : vector<8x128xf32>
    %cst_137 = arith.constant 1.000000e+00 : f32
    %379 = vector.broadcast %cst_137 : f32 to vector<8x128xf32>
    %380 = arith.addf %379, %378 : vector<8x128xf32>
    %381 = arith.divf %379, %380 : vector<8x128xf32>
    %382 = arith.select %5, %376, %381 : vector<8x128xi1>, vector<8x128xf32>
    %383 = vector.extract_strided_slice %382 {offsets = [0, 0], sizes = [8, 32], strides = [1, 1]} : vector<8x128xf32> to vector<8x32xf32>
    %384 = vector.extract_strided_slice %382 {offsets = [0, 32], sizes = [8, 32], strides = [1, 1]} : vector<8x128xf32> to vector<8x32xf32>
    %385 = vector.extract_strided_slice %382 {offsets = [0, 64], sizes = [8, 32], strides = [1, 1]} : vector<8x128xf32> to vector<8x32xf32>
    %386 = vector.extract_strided_slice %382 {offsets = [0, 96], sizes = [8, 32], strides = [1, 1]} : vector<8x128xf32> to vector<8x32xf32>
    %387 = arith.mulf %384, %370 : vector<8x32xf32>
    %388 = arith.mulf %383, %385 : vector<8x32xf32>
    %389 = arith.addf %387, %388 : vector<8x32xf32>
    %390 = math.tanh %389 : vector<8x32xf32>
    %391 = arith.mulf %386, %390 : vector<8x32xf32>
    %c0_138 = arith.constant 0 : index
    %c0_139 = arith.constant 0 : index
    %392 = vector.load %arg1[%c0_138, %c0_139] : memref<8x1xi32, #tpu.memory_space<vmem>>, vector<8x1xi32>
    %c0_i32_140 = arith.constant 0 : i32
    %393 = vector.broadcast %c0_i32_140 : i32 to vector<8x1xi32>
    %394 = arith.cmpi sgt, %392, %393 : vector<8x1xi32>
    %395 = vector.shape_cast %394 : vector<8x1xi1> to vector<8x1xi1>
    %396 = vector.broadcast %395 : vector<8x1xi1> to vector<8x32xi1>
    %397 = arith.select %396, %391, %368 : vector<8x32xi1>, vector<8x32xf32>
    %398 = vector.shape_cast %394 : vector<8x1xi1> to vector<8x1xi1>
    %399 = vector.broadcast %398 : vector<8x1xi1> to vector<8x32xi1>
    %400 = arith.select %399, %389, %370 : vector<8x32xi1>, vector<8x32xf32>
    %c1_141 = arith.constant 1 : index
    %c0_142 = arith.constant 0 : index
    %c0_143 = arith.constant 0 : index
    %401 = vector.load %arg13[%c1_141, %c0_142, %c0_143] : memref<10x8x128xf32, #tpu.memory_space<vmem>>, vector<1x8x128xf32>
    %402 = vector.shape_cast %401 : vector<1x8x128xf32> to vector<8x128xf32>
    %403 = arith.truncf %397 : vector<8x32xf32> to vector<8x32xbf16>
    %cst_144 = arith.constant dense<0.000000e+00> : vector<8x128xf32>
    %404 = tpu.matmul %403, %366, %cst_144 {dimension_numbers = #tpu.dot_dimension_numbers<[1], [0], [0], [1], [0, 0, 1, 1], [], []>} : vector<8x32xbf16>, vector<32x128xbf16>, vector<8x128xf32> -> vector<8x128xf32>
    %405 = arith.addf %402, %404 : vector<8x128xf32>
    %406 = math.tanh %405 : vector<8x128xf32>
    %407 = arith.negf %405 : vector<8x128xf32>
    %408 = math.exp %407 : vector<8x128xf32>
    %cst_145 = arith.constant 1.000000e+00 : f32
    %409 = vector.broadcast %cst_145 : f32 to vector<8x128xf32>
    %410 = arith.addf %409, %408 : vector<8x128xf32>
    %411 = arith.divf %409, %410 : vector<8x128xf32>
    %412 = arith.select %5, %406, %411 : vector<8x128xi1>, vector<8x128xf32>
    %413 = vector.extract_strided_slice %412 {offsets = [0, 0], sizes = [8, 32], strides = [1, 1]} : vector<8x128xf32> to vector<8x32xf32>
    %414 = vector.extract_strided_slice %412 {offsets = [0, 32], sizes = [8, 32], strides = [1, 1]} : vector<8x128xf32> to vector<8x32xf32>
    %415 = vector.extract_strided_slice %412 {offsets = [0, 64], sizes = [8, 32], strides = [1, 1]} : vector<8x128xf32> to vector<8x32xf32>
    %416 = vector.extract_strided_slice %412 {offsets = [0, 96], sizes = [8, 32], strides = [1, 1]} : vector<8x128xf32> to vector<8x32xf32>
    %417 = arith.mulf %414, %400 : vector<8x32xf32>
    %418 = arith.mulf %413, %415 : vector<8x32xf32>
    %419 = arith.addf %417, %418 : vector<8x32xf32>
    %420 = math.tanh %419 : vector<8x32xf32>
    %421 = arith.mulf %416, %420 : vector<8x32xf32>
    %c0_146 = arith.constant 0 : index
    %c0_147 = arith.constant 0 : index
    %422 = vector.load %arg1[%c0_146, %c0_147] : memref<8x1xi32, #tpu.memory_space<vmem>>, vector<8x1xi32>
    %c1_i32_148 = arith.constant 1 : i32
    %423 = vector.broadcast %c1_i32_148 : i32 to vector<8x1xi32>
    %424 = arith.cmpi sgt, %422, %423 : vector<8x1xi32>
    %425 = vector.shape_cast %424 : vector<8x1xi1> to vector<8x1xi1>
    %426 = vector.broadcast %425 : vector<8x1xi1> to vector<8x32xi1>
    %427 = arith.select %426, %421, %397 : vector<8x32xi1>, vector<8x32xf32>
    %428 = vector.shape_cast %424 : vector<8x1xi1> to vector<8x1xi1>
    %429 = vector.broadcast %428 : vector<8x1xi1> to vector<8x32xi1>
    %430 = arith.select %429, %419, %400 : vector<8x32xi1>, vector<8x32xf32>
    %c2_149 = arith.constant 2 : index
    %c0_150 = arith.constant 0 : index
    %c0_151 = arith.constant 0 : index
    %431 = vector.load %arg13[%c2_149, %c0_150, %c0_151] : memref<10x8x128xf32, #tpu.memory_space<vmem>>, vector<1x8x128xf32>
    %432 = vector.shape_cast %431 : vector<1x8x128xf32> to vector<8x128xf32>
    %433 = arith.truncf %427 : vector<8x32xf32> to vector<8x32xbf16>
    %cst_152 = arith.constant dense<0.000000e+00> : vector<8x128xf32>
    %434 = tpu.matmul %433, %366, %cst_152 {dimension_numbers = #tpu.dot_dimension_numbers<[1], [0], [0], [1], [0, 0, 1, 1], [], []>} : vector<8x32xbf16>, vector<32x128xbf16>, vector<8x128xf32> -> vector<8x128xf32>
    %435 = arith.addf %432, %434 : vector<8x128xf32>
    %436 = math.tanh %435 : vector<8x128xf32>
    %437 = arith.negf %435 : vector<8x128xf32>
    %438 = math.exp %437 : vector<8x128xf32>
    %cst_153 = arith.constant 1.000000e+00 : f32
    %439 = vector.broadcast %cst_153 : f32 to vector<8x128xf32>
    %440 = arith.addf %439, %438 : vector<8x128xf32>
    %441 = arith.divf %439, %440 : vector<8x128xf32>
    %442 = arith.select %5, %436, %441 : vector<8x128xi1>, vector<8x128xf32>
    %443 = vector.extract_strided_slice %442 {offsets = [0, 0], sizes = [8, 32], strides = [1, 1]} : vector<8x128xf32> to vector<8x32xf32>
    %444 = vector.extract_strided_slice %442 {offsets = [0, 32], sizes = [8, 32], strides = [1, 1]} : vector<8x128xf32> to vector<8x32xf32>
    %445 = vector.extract_strided_slice %442 {offsets = [0, 64], sizes = [8, 32], strides = [1, 1]} : vector<8x128xf32> to vector<8x32xf32>
    %446 = vector.extract_strided_slice %442 {offsets = [0, 96], sizes = [8, 32], strides = [1, 1]} : vector<8x128xf32> to vector<8x32xf32>
    %447 = arith.mulf %444, %430 : vector<8x32xf32>
    %448 = arith.mulf %443, %445 : vector<8x32xf32>
    %449 = arith.addf %447, %448 : vector<8x32xf32>
    %450 = math.tanh %449 : vector<8x32xf32>
    %451 = arith.mulf %446, %450 : vector<8x32xf32>
    %c0_154 = arith.constant 0 : index
    %c0_155 = arith.constant 0 : index
    %452 = vector.load %arg1[%c0_154, %c0_155] : memref<8x1xi32, #tpu.memory_space<vmem>>, vector<8x1xi32>
    %c2_i32_156 = arith.constant 2 : i32
    %453 = vector.broadcast %c2_i32_156 : i32 to vector<8x1xi32>
    %454 = arith.cmpi sgt, %452, %453 : vector<8x1xi32>
    %455 = vector.shape_cast %454 : vector<8x1xi1> to vector<8x1xi1>
    %456 = vector.broadcast %455 : vector<8x1xi1> to vector<8x32xi1>
    %457 = arith.select %456, %451, %427 : vector<8x32xi1>, vector<8x32xf32>
    %458 = vector.shape_cast %454 : vector<8x1xi1> to vector<8x1xi1>
    %459 = vector.broadcast %458 : vector<8x1xi1> to vector<8x32xi1>
    %460 = arith.select %459, %449, %430 : vector<8x32xi1>, vector<8x32xf32>
    %c3_157 = arith.constant 3 : index
    %c0_158 = arith.constant 0 : index
    %c0_159 = arith.constant 0 : index
    %461 = vector.load %arg13[%c3_157, %c0_158, %c0_159] : memref<10x8x128xf32, #tpu.memory_space<vmem>>, vector<1x8x128xf32>
    %462 = vector.shape_cast %461 : vector<1x8x128xf32> to vector<8x128xf32>
    %463 = arith.truncf %457 : vector<8x32xf32> to vector<8x32xbf16>
    %cst_160 = arith.constant dense<0.000000e+00> : vector<8x128xf32>
    %464 = tpu.matmul %463, %366, %cst_160 {dimension_numbers = #tpu.dot_dimension_numbers<[1], [0], [0], [1], [0, 0, 1, 1], [], []>} : vector<8x32xbf16>, vector<32x128xbf16>, vector<8x128xf32> -> vector<8x128xf32>
    %465 = arith.addf %462, %464 : vector<8x128xf32>
    %466 = math.tanh %465 : vector<8x128xf32>
    %467 = arith.negf %465 : vector<8x128xf32>
    %468 = math.exp %467 : vector<8x128xf32>
    %cst_161 = arith.constant 1.000000e+00 : f32
    %469 = vector.broadcast %cst_161 : f32 to vector<8x128xf32>
    %470 = arith.addf %469, %468 : vector<8x128xf32>
    %471 = arith.divf %469, %470 : vector<8x128xf32>
    %472 = arith.select %5, %466, %471 : vector<8x128xi1>, vector<8x128xf32>
    %473 = vector.extract_strided_slice %472 {offsets = [0, 0], sizes = [8, 32], strides = [1, 1]} : vector<8x128xf32> to vector<8x32xf32>
    %474 = vector.extract_strided_slice %472 {offsets = [0, 32], sizes = [8, 32], strides = [1, 1]} : vector<8x128xf32> to vector<8x32xf32>
    %475 = vector.extract_strided_slice %472 {offsets = [0, 64], sizes = [8, 32], strides = [1, 1]} : vector<8x128xf32> to vector<8x32xf32>
    %476 = vector.extract_strided_slice %472 {offsets = [0, 96], sizes = [8, 32], strides = [1, 1]} : vector<8x128xf32> to vector<8x32xf32>
    %477 = arith.mulf %474, %460 : vector<8x32xf32>
    %478 = arith.mulf %473, %475 : vector<8x32xf32>
    %479 = arith.addf %477, %478 : vector<8x32xf32>
    %480 = math.tanh %479 : vector<8x32xf32>
    %481 = arith.mulf %476, %480 : vector<8x32xf32>
    %c0_162 = arith.constant 0 : index
    %c0_163 = arith.constant 0 : index
    %482 = vector.load %arg1[%c0_162, %c0_163] : memref<8x1xi32, #tpu.memory_space<vmem>>, vector<8x1xi32>
    %c3_i32_164 = arith.constant 3 : i32
    %483 = vector.broadcast %c3_i32_164 : i32 to vector<8x1xi32>
    %484 = arith.cmpi sgt, %482, %483 : vector<8x1xi32>
    %485 = vector.shape_cast %484 : vector<8x1xi1> to vector<8x1xi1>
    %486 = vector.broadcast %485 : vector<8x1xi1> to vector<8x32xi1>
    %487 = arith.select %486, %481, %457 : vector<8x32xi1>, vector<8x32xf32>
    %488 = vector.shape_cast %484 : vector<8x1xi1> to vector<8x1xi1>
    %489 = vector.broadcast %488 : vector<8x1xi1> to vector<8x32xi1>
    %490 = arith.select %489, %479, %460 : vector<8x32xi1>, vector<8x32xf32>
    %c4_165 = arith.constant 4 : index
    %c0_166 = arith.constant 0 : index
    %c0_167 = arith.constant 0 : index
    %491 = vector.load %arg13[%c4_165, %c0_166, %c0_167] : memref<10x8x128xf32, #tpu.memory_space<vmem>>, vector<1x8x128xf32>
    %492 = vector.shape_cast %491 : vector<1x8x128xf32> to vector<8x128xf32>
    %493 = arith.truncf %487 : vector<8x32xf32> to vector<8x32xbf16>
    %cst_168 = arith.constant dense<0.000000e+00> : vector<8x128xf32>
    %494 = tpu.matmul %493, %366, %cst_168 {dimension_numbers = #tpu.dot_dimension_numbers<[1], [0], [0], [1], [0, 0, 1, 1], [], []>} : vector<8x32xbf16>, vector<32x128xbf16>, vector<8x128xf32> -> vector<8x128xf32>
    %495 = arith.addf %492, %494 : vector<8x128xf32>
    %496 = math.tanh %495 : vector<8x128xf32>
    %497 = arith.negf %495 : vector<8x128xf32>
    %498 = math.exp %497 : vector<8x128xf32>
    %cst_169 = arith.constant 1.000000e+00 : f32
    %499 = vector.broadcast %cst_169 : f32 to vector<8x128xf32>
    %500 = arith.addf %499, %498 : vector<8x128xf32>
    %501 = arith.divf %499, %500 : vector<8x128xf32>
    %502 = arith.select %5, %496, %501 : vector<8x128xi1>, vector<8x128xf32>
    %503 = vector.extract_strided_slice %502 {offsets = [0, 0], sizes = [8, 32], strides = [1, 1]} : vector<8x128xf32> to vector<8x32xf32>
    %504 = vector.extract_strided_slice %502 {offsets = [0, 32], sizes = [8, 32], strides = [1, 1]} : vector<8x128xf32> to vector<8x32xf32>
    %505 = vector.extract_strided_slice %502 {offsets = [0, 64], sizes = [8, 32], strides = [1, 1]} : vector<8x128xf32> to vector<8x32xf32>
    %506 = vector.extract_strided_slice %502 {offsets = [0, 96], sizes = [8, 32], strides = [1, 1]} : vector<8x128xf32> to vector<8x32xf32>
    %507 = arith.mulf %504, %490 : vector<8x32xf32>
    %508 = arith.mulf %503, %505 : vector<8x32xf32>
    %509 = arith.addf %507, %508 : vector<8x32xf32>
    %510 = math.tanh %509 : vector<8x32xf32>
    %511 = arith.mulf %506, %510 : vector<8x32xf32>
    %c0_170 = arith.constant 0 : index
    %c0_171 = arith.constant 0 : index
    %512 = vector.load %arg1[%c0_170, %c0_171] : memref<8x1xi32, #tpu.memory_space<vmem>>, vector<8x1xi32>
    %c4_i32_172 = arith.constant 4 : i32
    %513 = vector.broadcast %c4_i32_172 : i32 to vector<8x1xi32>
    %514 = arith.cmpi sgt, %512, %513 : vector<8x1xi32>
    %515 = vector.shape_cast %514 : vector<8x1xi1> to vector<8x1xi1>
    %516 = vector.broadcast %515 : vector<8x1xi1> to vector<8x32xi1>
    %517 = arith.select %516, %511, %487 : vector<8x32xi1>, vector<8x32xf32>
    %518 = vector.shape_cast %514 : vector<8x1xi1> to vector<8x1xi1>
    %519 = vector.broadcast %518 : vector<8x1xi1> to vector<8x32xi1>
    %520 = arith.select %519, %509, %490 : vector<8x32xi1>, vector<8x32xf32>
    %c5_173 = arith.constant 5 : index
    %c0_174 = arith.constant 0 : index
    %c0_175 = arith.constant 0 : index
    %521 = vector.load %arg13[%c5_173, %c0_174, %c0_175] : memref<10x8x128xf32, #tpu.memory_space<vmem>>, vector<1x8x128xf32>
    %522 = vector.shape_cast %521 : vector<1x8x128xf32> to vector<8x128xf32>
    %523 = arith.truncf %517 : vector<8x32xf32> to vector<8x32xbf16>
    %cst_176 = arith.constant dense<0.000000e+00> : vector<8x128xf32>
    %524 = tpu.matmul %523, %366, %cst_176 {dimension_numbers = #tpu.dot_dimension_numbers<[1], [0], [0], [1], [0, 0, 1, 1], [], []>} : vector<8x32xbf16>, vector<32x128xbf16>, vector<8x128xf32> -> vector<8x128xf32>
    %525 = arith.addf %522, %524 : vector<8x128xf32>
    %526 = math.tanh %525 : vector<8x128xf32>
    %527 = arith.negf %525 : vector<8x128xf32>
    %528 = math.exp %527 : vector<8x128xf32>
    %cst_177 = arith.constant 1.000000e+00 : f32
    %529 = vector.broadcast %cst_177 : f32 to vector<8x128xf32>
    %530 = arith.addf %529, %528 : vector<8x128xf32>
    %531 = arith.divf %529, %530 : vector<8x128xf32>
    %532 = arith.select %5, %526, %531 : vector<8x128xi1>, vector<8x128xf32>
    %533 = vector.extract_strided_slice %532 {offsets = [0, 0], sizes = [8, 32], strides = [1, 1]} : vector<8x128xf32> to vector<8x32xf32>
    %534 = vector.extract_strided_slice %532 {offsets = [0, 32], sizes = [8, 32], strides = [1, 1]} : vector<8x128xf32> to vector<8x32xf32>
    %535 = vector.extract_strided_slice %532 {offsets = [0, 64], sizes = [8, 32], strides = [1, 1]} : vector<8x128xf32> to vector<8x32xf32>
    %536 = vector.extract_strided_slice %532 {offsets = [0, 96], sizes = [8, 32], strides = [1, 1]} : vector<8x128xf32> to vector<8x32xf32>
    %537 = arith.mulf %534, %520 : vector<8x32xf32>
    %538 = arith.mulf %533, %535 : vector<8x32xf32>
    %539 = arith.addf %537, %538 : vector<8x32xf32>
    %540 = math.tanh %539 : vector<8x32xf32>
    %541 = arith.mulf %536, %540 : vector<8x32xf32>
    %c0_178 = arith.constant 0 : index
    %c0_179 = arith.constant 0 : index
    %542 = vector.load %arg1[%c0_178, %c0_179] : memref<8x1xi32, #tpu.memory_space<vmem>>, vector<8x1xi32>
    %c5_i32_180 = arith.constant 5 : i32
    %543 = vector.broadcast %c5_i32_180 : i32 to vector<8x1xi32>
    %544 = arith.cmpi sgt, %542, %543 : vector<8x1xi32>
    %545 = vector.shape_cast %544 : vector<8x1xi1> to vector<8x1xi1>
    %546 = vector.broadcast %545 : vector<8x1xi1> to vector<8x32xi1>
    %547 = arith.select %546, %541, %517 : vector<8x32xi1>, vector<8x32xf32>
    %548 = vector.shape_cast %544 : vector<8x1xi1> to vector<8x1xi1>
    %549 = vector.broadcast %548 : vector<8x1xi1> to vector<8x32xi1>
    %550 = arith.select %549, %539, %520 : vector<8x32xi1>, vector<8x32xf32>
    %c6_181 = arith.constant 6 : index
    %c0_182 = arith.constant 0 : index
    %c0_183 = arith.constant 0 : index
    %551 = vector.load %arg13[%c6_181, %c0_182, %c0_183] : memref<10x8x128xf32, #tpu.memory_space<vmem>>, vector<1x8x128xf32>
    %552 = vector.shape_cast %551 : vector<1x8x128xf32> to vector<8x128xf32>
    %553 = arith.truncf %547 : vector<8x32xf32> to vector<8x32xbf16>
    %cst_184 = arith.constant dense<0.000000e+00> : vector<8x128xf32>
    %554 = tpu.matmul %553, %366, %cst_184 {dimension_numbers = #tpu.dot_dimension_numbers<[1], [0], [0], [1], [0, 0, 1, 1], [], []>} : vector<8x32xbf16>, vector<32x128xbf16>, vector<8x128xf32> -> vector<8x128xf32>
    %555 = arith.addf %552, %554 : vector<8x128xf32>
    %556 = math.tanh %555 : vector<8x128xf32>
    %557 = arith.negf %555 : vector<8x128xf32>
    %558 = math.exp %557 : vector<8x128xf32>
    %cst_185 = arith.constant 1.000000e+00 : f32
    %559 = vector.broadcast %cst_185 : f32 to vector<8x128xf32>
    %560 = arith.addf %559, %558 : vector<8x128xf32>
    %561 = arith.divf %559, %560 : vector<8x128xf32>
    %562 = arith.select %5, %556, %561 : vector<8x128xi1>, vector<8x128xf32>
    %563 = vector.extract_strided_slice %562 {offsets = [0, 0], sizes = [8, 32], strides = [1, 1]} : vector<8x128xf32> to vector<8x32xf32>
    %564 = vector.extract_strided_slice %562 {offsets = [0, 32], sizes = [8, 32], strides = [1, 1]} : vector<8x128xf32> to vector<8x32xf32>
    %565 = vector.extract_strided_slice %562 {offsets = [0, 64], sizes = [8, 32], strides = [1, 1]} : vector<8x128xf32> to vector<8x32xf32>
    %566 = vector.extract_strided_slice %562 {offsets = [0, 96], sizes = [8, 32], strides = [1, 1]} : vector<8x128xf32> to vector<8x32xf32>
    %567 = arith.mulf %564, %550 : vector<8x32xf32>
    %568 = arith.mulf %563, %565 : vector<8x32xf32>
    %569 = arith.addf %567, %568 : vector<8x32xf32>
    %570 = math.tanh %569 : vector<8x32xf32>
    %571 = arith.mulf %566, %570 : vector<8x32xf32>
    %c0_186 = arith.constant 0 : index
    %c0_187 = arith.constant 0 : index
    %572 = vector.load %arg1[%c0_186, %c0_187] : memref<8x1xi32, #tpu.memory_space<vmem>>, vector<8x1xi32>
    %c6_i32_188 = arith.constant 6 : i32
    %573 = vector.broadcast %c6_i32_188 : i32 to vector<8x1xi32>
    %574 = arith.cmpi sgt, %572, %573 : vector<8x1xi32>
    %575 = vector.shape_cast %574 : vector<8x1xi1> to vector<8x1xi1>
    %576 = vector.broadcast %575 : vector<8x1xi1> to vector<8x32xi1>
    %577 = arith.select %576, %571, %547 : vector<8x32xi1>, vector<8x32xf32>
    %578 = vector.shape_cast %574 : vector<8x1xi1> to vector<8x1xi1>
    %579 = vector.broadcast %578 : vector<8x1xi1> to vector<8x32xi1>
    %580 = arith.select %579, %569, %550 : vector<8x32xi1>, vector<8x32xf32>
    %c7_189 = arith.constant 7 : index
    %c0_190 = arith.constant 0 : index
    %c0_191 = arith.constant 0 : index
    %581 = vector.load %arg13[%c7_189, %c0_190, %c0_191] : memref<10x8x128xf32, #tpu.memory_space<vmem>>, vector<1x8x128xf32>
    %582 = vector.shape_cast %581 : vector<1x8x128xf32> to vector<8x128xf32>
    %583 = arith.truncf %577 : vector<8x32xf32> to vector<8x32xbf16>
    %cst_192 = arith.constant dense<0.000000e+00> : vector<8x128xf32>
    %584 = tpu.matmul %583, %366, %cst_192 {dimension_numbers = #tpu.dot_dimension_numbers<[1], [0], [0], [1], [0, 0, 1, 1], [], []>} : vector<8x32xbf16>, vector<32x128xbf16>, vector<8x128xf32> -> vector<8x128xf32>
    %585 = arith.addf %582, %584 : vector<8x128xf32>
    %586 = math.tanh %585 : vector<8x128xf32>
    %587 = arith.negf %585 : vector<8x128xf32>
    %588 = math.exp %587 : vector<8x128xf32>
    %cst_193 = arith.constant 1.000000e+00 : f32
    %589 = vector.broadcast %cst_193 : f32 to vector<8x128xf32>
    %590 = arith.addf %589, %588 : vector<8x128xf32>
    %591 = arith.divf %589, %590 : vector<8x128xf32>
    %592 = arith.select %5, %586, %591 : vector<8x128xi1>, vector<8x128xf32>
    %593 = vector.extract_strided_slice %592 {offsets = [0, 0], sizes = [8, 32], strides = [1, 1]} : vector<8x128xf32> to vector<8x32xf32>
    %594 = vector.extract_strided_slice %592 {offsets = [0, 32], sizes = [8, 32], strides = [1, 1]} : vector<8x128xf32> to vector<8x32xf32>
    %595 = vector.extract_strided_slice %592 {offsets = [0, 64], sizes = [8, 32], strides = [1, 1]} : vector<8x128xf32> to vector<8x32xf32>
    %596 = vector.extract_strided_slice %592 {offsets = [0, 96], sizes = [8, 32], strides = [1, 1]} : vector<8x128xf32> to vector<8x32xf32>
    %597 = arith.mulf %594, %580 : vector<8x32xf32>
    %598 = arith.mulf %593, %595 : vector<8x32xf32>
    %599 = arith.addf %597, %598 : vector<8x32xf32>
    %600 = math.tanh %599 : vector<8x32xf32>
    %601 = arith.mulf %596, %600 : vector<8x32xf32>
    %c0_194 = arith.constant 0 : index
    %c0_195 = arith.constant 0 : index
    %602 = vector.load %arg1[%c0_194, %c0_195] : memref<8x1xi32, #tpu.memory_space<vmem>>, vector<8x1xi32>
    %c7_i32_196 = arith.constant 7 : i32
    %603 = vector.broadcast %c7_i32_196 : i32 to vector<8x1xi32>
    %604 = arith.cmpi sgt, %602, %603 : vector<8x1xi32>
    %605 = vector.shape_cast %604 : vector<8x1xi1> to vector<8x1xi1>
    %606 = vector.broadcast %605 : vector<8x1xi1> to vector<8x32xi1>
    %607 = arith.select %606, %601, %577 : vector<8x32xi1>, vector<8x32xf32>
    %608 = vector.shape_cast %604 : vector<8x1xi1> to vector<8x1xi1>
    %609 = vector.broadcast %608 : vector<8x1xi1> to vector<8x32xi1>
    %610 = arith.select %609, %599, %580 : vector<8x32xi1>, vector<8x32xf32>
    %c8_197 = arith.constant 8 : index
    %c0_198 = arith.constant 0 : index
    %c0_199 = arith.constant 0 : index
    %611 = vector.load %arg13[%c8_197, %c0_198, %c0_199] : memref<10x8x128xf32, #tpu.memory_space<vmem>>, vector<1x8x128xf32>
    %612 = vector.shape_cast %611 : vector<1x8x128xf32> to vector<8x128xf32>
    %613 = arith.truncf %607 : vector<8x32xf32> to vector<8x32xbf16>
    %cst_200 = arith.constant dense<0.000000e+00> : vector<8x128xf32>
    %614 = tpu.matmul %613, %366, %cst_200 {dimension_numbers = #tpu.dot_dimension_numbers<[1], [0], [0], [1], [0, 0, 1, 1], [], []>} : vector<8x32xbf16>, vector<32x128xbf16>, vector<8x128xf32> -> vector<8x128xf32>
    %615 = arith.addf %612, %614 : vector<8x128xf32>
    %616 = math.tanh %615 : vector<8x128xf32>
    %617 = arith.negf %615 : vector<8x128xf32>
    %618 = math.exp %617 : vector<8x128xf32>
    %cst_201 = arith.constant 1.000000e+00 : f32
    %619 = vector.broadcast %cst_201 : f32 to vector<8x128xf32>
    %620 = arith.addf %619, %618 : vector<8x128xf32>
    %621 = arith.divf %619, %620 : vector<8x128xf32>
    %622 = arith.select %5, %616, %621 : vector<8x128xi1>, vector<8x128xf32>
    %623 = vector.extract_strided_slice %622 {offsets = [0, 0], sizes = [8, 32], strides = [1, 1]} : vector<8x128xf32> to vector<8x32xf32>
    %624 = vector.extract_strided_slice %622 {offsets = [0, 32], sizes = [8, 32], strides = [1, 1]} : vector<8x128xf32> to vector<8x32xf32>
    %625 = vector.extract_strided_slice %622 {offsets = [0, 64], sizes = [8, 32], strides = [1, 1]} : vector<8x128xf32> to vector<8x32xf32>
    %626 = vector.extract_strided_slice %622 {offsets = [0, 96], sizes = [8, 32], strides = [1, 1]} : vector<8x128xf32> to vector<8x32xf32>
    %627 = arith.mulf %624, %610 : vector<8x32xf32>
    %628 = arith.mulf %623, %625 : vector<8x32xf32>
    %629 = arith.addf %627, %628 : vector<8x32xf32>
    %630 = math.tanh %629 : vector<8x32xf32>
    %631 = arith.mulf %626, %630 : vector<8x32xf32>
    %c0_202 = arith.constant 0 : index
    %c0_203 = arith.constant 0 : index
    %632 = vector.load %arg1[%c0_202, %c0_203] : memref<8x1xi32, #tpu.memory_space<vmem>>, vector<8x1xi32>
    %c8_i32_204 = arith.constant 8 : i32
    %633 = vector.broadcast %c8_i32_204 : i32 to vector<8x1xi32>
    %634 = arith.cmpi sgt, %632, %633 : vector<8x1xi32>
    %635 = vector.shape_cast %634 : vector<8x1xi1> to vector<8x1xi1>
    %636 = vector.broadcast %635 : vector<8x1xi1> to vector<8x32xi1>
    %637 = arith.select %636, %631, %607 : vector<8x32xi1>, vector<8x32xf32>
    %638 = vector.shape_cast %634 : vector<8x1xi1> to vector<8x1xi1>
    %639 = vector.broadcast %638 : vector<8x1xi1> to vector<8x32xi1>
    %640 = arith.select %639, %629, %610 : vector<8x32xi1>, vector<8x32xf32>
    %c9_205 = arith.constant 9 : index
    %c0_206 = arith.constant 0 : index
    %c0_207 = arith.constant 0 : index
    %641 = vector.load %arg13[%c9_205, %c0_206, %c0_207] : memref<10x8x128xf32, #tpu.memory_space<vmem>>, vector<1x8x128xf32>
    %642 = vector.shape_cast %641 : vector<1x8x128xf32> to vector<8x128xf32>
    %643 = arith.truncf %637 : vector<8x32xf32> to vector<8x32xbf16>
    %cst_208 = arith.constant dense<0.000000e+00> : vector<8x128xf32>
    %644 = tpu.matmul %643, %366, %cst_208 {dimension_numbers = #tpu.dot_dimension_numbers<[1], [0], [0], [1], [0, 0, 1, 1], [], []>} : vector<8x32xbf16>, vector<32x128xbf16>, vector<8x128xf32> -> vector<8x128xf32>
    %645 = arith.addf %642, %644 : vector<8x128xf32>
    %646 = math.tanh %645 : vector<8x128xf32>
    %647 = arith.negf %645 : vector<8x128xf32>
    %648 = math.exp %647 : vector<8x128xf32>
    %cst_209 = arith.constant 1.000000e+00 : f32
    %649 = vector.broadcast %cst_209 : f32 to vector<8x128xf32>
    %650 = arith.addf %649, %648 : vector<8x128xf32>
    %651 = arith.divf %649, %650 : vector<8x128xf32>
    %652 = arith.select %5, %646, %651 : vector<8x128xi1>, vector<8x128xf32>
    %653 = vector.extract_strided_slice %652 {offsets = [0, 0], sizes = [8, 32], strides = [1, 1]} : vector<8x128xf32> to vector<8x32xf32>
    %654 = vector.extract_strided_slice %652 {offsets = [0, 32], sizes = [8, 32], strides = [1, 1]} : vector<8x128xf32> to vector<8x32xf32>
    %655 = vector.extract_strided_slice %652 {offsets = [0, 64], sizes = [8, 32], strides = [1, 1]} : vector<8x128xf32> to vector<8x32xf32>
    %656 = vector.extract_strided_slice %652 {offsets = [0, 96], sizes = [8, 32], strides = [1, 1]} : vector<8x128xf32> to vector<8x32xf32>
    %657 = arith.mulf %654, %640 : vector<8x32xf32>
    %658 = arith.mulf %653, %655 : vector<8x32xf32>
    %659 = arith.addf %657, %658 : vector<8x32xf32>
    %660 = math.tanh %659 : vector<8x32xf32>
    %661 = arith.mulf %656, %660 : vector<8x32xf32>
    %c0_210 = arith.constant 0 : index
    %c0_211 = arith.constant 0 : index
    %662 = vector.load %arg1[%c0_210, %c0_211] : memref<8x1xi32, #tpu.memory_space<vmem>>, vector<8x1xi32>
    %c9_i32_212 = arith.constant 9 : i32
    %663 = vector.broadcast %c9_i32_212 : i32 to vector<8x1xi32>
    %664 = arith.cmpi sgt, %662, %663 : vector<8x1xi32>
    %665 = vector.shape_cast %664 : vector<8x1xi1> to vector<8x1xi1>
    %666 = vector.broadcast %665 : vector<8x1xi1> to vector<8x32xi1>
    %667 = arith.select %666, %661, %637 : vector<8x32xi1>, vector<8x32xf32>
    %668 = vector.shape_cast %664 : vector<8x1xi1> to vector<8x1xi1>
    %669 = vector.broadcast %668 : vector<8x1xi1> to vector<8x32xi1>
    %670 = arith.select %669, %659, %640 : vector<8x32xi1>, vector<8x32xf32>
    %c1_213 = arith.constant 1 : index
    %c0_214 = arith.constant 0 : index
    %c0_215 = arith.constant 0 : index
    %671 = vector.load %arg10[%c1_213, %c0_214, %c0_215] : memref<2x8x32xf32, #tpu.memory_space<vmem>>, vector<1x8x32xf32>
    %672 = vector.shape_cast %671 : vector<1x8x32xf32> to vector<8x32xf32>
    %673 = vector.shape_cast %667 : vector<8x32xf32> to vector<1x8x32xf32>
    tpu.vector_store %arg10[%c1_213, %c0_214, %c0_215], %673 {strides = array<i32>} : memref<2x8x32xf32, #tpu.memory_space<vmem>>, vector<1x8x32xf32>,
    %c1_216 = arith.constant 1 : index
    %c0_217 = arith.constant 0 : index
    %c0_218 = arith.constant 0 : index
    %674 = vector.load %arg11[%c1_216, %c0_217, %c0_218] : memref<2x8x32xf32, #tpu.memory_space<vmem>>, vector<1x8x32xf32>
    %675 = vector.shape_cast %674 : vector<1x8x32xf32> to vector<8x32xf32>
    %676 = vector.shape_cast %670 : vector<8x32xf32> to vector<1x8x32xf32>
    tpu.vector_store %arg11[%c1_216, %c0_217, %c0_218], %676 {strides = array<i32>} : memref<2x8x32xf32, #tpu.memory_space<vmem>>, vector<1x8x32xf32>,
    return
  }
}

module attributes {stable_mosaic.version = 11 : i64} {
  func.func @kernel(%arg0: memref<8x8x32xbf16, #tpu.memory_space<vmem>>, %arg1: memref<2x8x32xf32, #tpu.memory_space<vmem>>, %arg2: memref<2x8x32xf32, #tpu.memory_space<vmem>>, %arg3: memref<32x128xbf16, #tpu.memory_space<vmem>>, %arg4: memref<32x128xbf16, #tpu.memory_space<vmem>>, %arg5: memref<32x128xbf16, #tpu.memory_space<vmem>>, %arg6: memref<32x128xbf16, #tpu.memory_space<vmem>>, %arg7: memref<1x128xf32, #tpu.memory_space<vmem>>, %arg8: memref<1x128xf32, #tpu.memory_space<vmem>>, %arg9: memref<32x128xbf16, #tpu.memory_space<vmem>>, %arg10: memref<1x128xf32, #tpu.memory_space<vmem>>, %arg11: memref<64x128xf32, #tpu.memory_space<vmem>>, %arg12: memref<8x8x32xf32, #tpu.memory_space<vmem>>, %arg13: memref<8x8x128xf32, #tpu.memory_space<vmem>>) attributes {dimension_semantics = [], scalar_prefetch = 0 : i64, scratch_operands = 2 : i64, tpu.core_type = #tpu.core_type<tc>} {
    %0 = tpu.iota {dimensions = array<i32: 1>} : vector<8x128xi32>
    %c64_i32 = arith.constant 64 : i32
    %1 = vector.broadcast %c64_i32 : i32 to vector<8x128xi32>
    %2 = arith.cmpi sge, %0, %1 : vector<8x128xi32>
    %c96_i32 = arith.constant 96 : i32
    %3 = vector.broadcast %c96_i32 : i32 to vector<8x128xi32>
    %4 = arith.cmpi slt, %0, %3 : vector<8x128xi32>
    %5 = arith.andi %2, %4 : vector<8x128xi1>
    %c0 = arith.constant 0 : index
    %c0_0 = arith.constant 0 : index
    %c0_1 = arith.constant 0 : index
    %6 = vector.load %arg0[%c0, %c0_0, %c0_1] : memref<8x8x32xbf16, #tpu.memory_space<vmem>>, vector<8x8x32xbf16>
    %7 = vector.shape_cast %6 : vector<8x8x32xbf16> to vector<64x32xbf16>
    %c0_2 = arith.constant 0 : index
    %c0_3 = arith.constant 0 : index
    %8 = vector.load %arg3[%c0_2, %c0_3] : memref<32x128xbf16, #tpu.memory_space<vmem>>, vector<32x128xbf16>
    %cst = arith.constant dense<0.000000e+00> : vector<64x128xf32>
    %9 = tpu.matmul %7, %8, %cst {dimension_numbers = #tpu.dot_dimension_numbers<[1], [0], [0], [1], [0, 0, 1, 1], [], []>} : vector<64x32xbf16>, vector<32x128xbf16>, vector<64x128xf32> -> vector<64x128xf32>
    %c0_4 = arith.constant 0 : index
    %c0_5 = arith.constant 0 : index
    %10 = vector.load %arg7[%c0_4, %c0_5] : memref<1x128xf32, #tpu.memory_space<vmem>>, vector<1x128xf32>
    %11 = vector.broadcast %10 : vector<1x128xf32> to vector<64x128xf32>
    %12 = arith.addf %9, %11 : vector<64x128xf32>
    %13 = vector.shape_cast %12 : vector<64x128xf32> to vector<8x8x128xf32>
    %c0_6 = arith.constant 0 : index
    %c0_7 = arith.constant 0 : index
    %c0_8 = arith.constant 0 : index
    %14 = vector.load %arg13[%c0_6, %c0_7, %c0_8] : memref<8x8x128xf32, #tpu.memory_space<vmem>>, vector<8x8x128xf32>
    tpu.vector_store %arg13[%c0_6, %c0_7, %c0_8], %13 {strides = array<i32>} : memref<8x8x128xf32, #tpu.memory_space<vmem>>, vector<8x8x128xf32>,
    %c0_9 = arith.constant 0 : index
    %c0_10 = arith.constant 0 : index
    %15 = vector.load %arg5[%c0_9, %c0_10] : memref<32x128xbf16, #tpu.memory_space<vmem>>, vector<32x128xbf16>
    %c0_11 = arith.constant 0 : index
    %c0_12 = arith.constant 0 : index
    %c0_13 = arith.constant 0 : index
    %16 = vector.load %arg1[%c0_11, %c0_12, %c0_13] : memref<2x8x32xf32, #tpu.memory_space<vmem>>, vector<1x8x32xf32>
    %17 = vector.shape_cast %16 : vector<1x8x32xf32> to vector<8x32xf32>
    %c0_14 = arith.constant 0 : index
    %c0_15 = arith.constant 0 : index
    %c0_16 = arith.constant 0 : index
    %18 = vector.load %arg2[%c0_14, %c0_15, %c0_16] : memref<2x8x32xf32, #tpu.memory_space<vmem>>, vector<1x8x32xf32>
    %19 = vector.shape_cast %18 : vector<1x8x32xf32> to vector<8x32xf32>
    %c0_17 = arith.constant 0 : index
    %c0_18 = arith.constant 0 : index
    %c0_19 = arith.constant 0 : index
    %20 = vector.load %arg13[%c0_17, %c0_18, %c0_19] : memref<8x8x128xf32, #tpu.memory_space<vmem>>, vector<1x8x128xf32>
    %21 = vector.shape_cast %20 : vector<1x8x128xf32> to vector<8x128xf32>
    %22 = arith.truncf %17 : vector<8x32xf32> to vector<8x32xbf16>
    %cst_20 = arith.constant dense<0.000000e+00> : vector<8x128xf32>
    %23 = tpu.matmul %22, %15, %cst_20 {dimension_numbers = #tpu.dot_dimension_numbers<[1], [0], [0], [1], [0, 0, 1, 1], [], []>} : vector<8x32xbf16>, vector<32x128xbf16>, vector<8x128xf32> -> vector<8x128xf32>
    %24 = arith.addf %21, %23 : vector<8x128xf32>
    %25 = math.tanh %24 : vector<8x128xf32>
    %26 = arith.negf %24 : vector<8x128xf32>
    %27 = math.exp %26 : vector<8x128xf32>
    %cst_21 = arith.constant 1.000000e+00 : f32
    %28 = vector.broadcast %cst_21 : f32 to vector<8x128xf32>
    %29 = arith.addf %28, %27 : vector<8x128xf32>
    %30 = arith.divf %28, %29 : vector<8x128xf32>
    %31 = arith.select %5, %25, %30 : vector<8x128xi1>, vector<8x128xf32>
    %32 = vector.extract_strided_slice %31 {offsets = [0, 0], sizes = [8, 32], strides = [1, 1]} : vector<8x128xf32> to vector<8x32xf32>
    %33 = vector.extract_strided_slice %31 {offsets = [0, 32], sizes = [8, 32], strides = [1, 1]} : vector<8x128xf32> to vector<8x32xf32>
    %34 = vector.extract_strided_slice %31 {offsets = [0, 64], sizes = [8, 32], strides = [1, 1]} : vector<8x128xf32> to vector<8x32xf32>
    %35 = vector.extract_strided_slice %31 {offsets = [0, 96], sizes = [8, 32], strides = [1, 1]} : vector<8x128xf32> to vector<8x32xf32>
    %36 = arith.mulf %33, %19 : vector<8x32xf32>
    %37 = arith.mulf %32, %34 : vector<8x32xf32>
    %38 = arith.addf %36, %37 : vector<8x32xf32>
    %39 = math.tanh %38 : vector<8x32xf32>
    %40 = arith.mulf %35, %39 : vector<8x32xf32>
    %c0_22 = arith.constant 0 : index
    %c0_23 = arith.constant 0 : index
    %c0_24 = arith.constant 0 : index
    %41 = vector.load %arg12[%c0_22, %c0_23, %c0_24] : memref<8x8x32xf32, #tpu.memory_space<vmem>>, vector<1x8x32xf32>
    %42 = vector.shape_cast %41 : vector<1x8x32xf32> to vector<8x32xf32>
    %43 = vector.shape_cast %40 : vector<8x32xf32> to vector<1x8x32xf32>
    tpu.vector_store %arg12[%c0_22, %c0_23, %c0_24], %43 {strides = array<i32>} : memref<8x8x32xf32, #tpu.memory_space<vmem>>, vector<1x8x32xf32>,
    %c1 = arith.constant 1 : index
    %c0_25 = arith.constant 0 : index
    %c0_26 = arith.constant 0 : index
    %44 = vector.load %arg13[%c1, %c0_25, %c0_26] : memref<8x8x128xf32, #tpu.memory_space<vmem>>, vector<1x8x128xf32>
    %45 = vector.shape_cast %44 : vector<1x8x128xf32> to vector<8x128xf32>
    %46 = arith.truncf %40 : vector<8x32xf32> to vector<8x32xbf16>
    %cst_27 = arith.constant dense<0.000000e+00> : vector<8x128xf32>
    %47 = tpu.matmul %46, %15, %cst_27 {dimension_numbers = #tpu.dot_dimension_numbers<[1], [0], [0], [1], [0, 0, 1, 1], [], []>} : vector<8x32xbf16>, vector<32x128xbf16>, vector<8x128xf32> -> vector<8x128xf32>
    %48 = arith.addf %45, %47 : vector<8x128xf32>
    %49 = math.tanh %48 : vector<8x128xf32>
    %50 = arith.negf %48 : vector<8x128xf32>
    %51 = math.exp %50 : vector<8x128xf32>
    %cst_28 = arith.constant 1.000000e+00 : f32
    %52 = vector.broadcast %cst_28 : f32 to vector<8x128xf32>
    %53 = arith.addf %52, %51 : vector<8x128xf32>
    %54 = arith.divf %52, %53 : vector<8x128xf32>
    %55 = arith.select %5, %49, %54 : vector<8x128xi1>, vector<8x128xf32>
    %56 = vector.extract_strided_slice %55 {offsets = [0, 0], sizes = [8, 32], strides = [1, 1]} : vector<8x128xf32> to vector<8x32xf32>
    %57 = vector.extract_strided_slice %55 {offsets = [0, 32], sizes = [8, 32], strides = [1, 1]} : vector<8x128xf32> to vector<8x32xf32>
    %58 = vector.extract_strided_slice %55 {offsets = [0, 64], sizes = [8, 32], strides = [1, 1]} : vector<8x128xf32> to vector<8x32xf32>
    %59 = vector.extract_strided_slice %55 {offsets = [0, 96], sizes = [8, 32], strides = [1, 1]} : vector<8x128xf32> to vector<8x32xf32>
    %60 = arith.mulf %57, %38 : vector<8x32xf32>
    %61 = arith.mulf %56, %58 : vector<8x32xf32>
    %62 = arith.addf %60, %61 : vector<8x32xf32>
    %63 = math.tanh %62 : vector<8x32xf32>
    %64 = arith.mulf %59, %63 : vector<8x32xf32>
    %c1_29 = arith.constant 1 : index
    %c0_30 = arith.constant 0 : index
    %c0_31 = arith.constant 0 : index
    %65 = vector.load %arg12[%c1_29, %c0_30, %c0_31] : memref<8x8x32xf32, #tpu.memory_space<vmem>>, vector<1x8x32xf32>
    %66 = vector.shape_cast %65 : vector<1x8x32xf32> to vector<8x32xf32>
    %67 = vector.shape_cast %64 : vector<8x32xf32> to vector<1x8x32xf32>
    tpu.vector_store %arg12[%c1_29, %c0_30, %c0_31], %67 {strides = array<i32>} : memref<8x8x32xf32, #tpu.memory_space<vmem>>, vector<1x8x32xf32>,
    %c2 = arith.constant 2 : index
    %c0_32 = arith.constant 0 : index
    %c0_33 = arith.constant 0 : index
    %68 = vector.load %arg13[%c2, %c0_32, %c0_33] : memref<8x8x128xf32, #tpu.memory_space<vmem>>, vector<1x8x128xf32>
    %69 = vector.shape_cast %68 : vector<1x8x128xf32> to vector<8x128xf32>
    %70 = arith.truncf %64 : vector<8x32xf32> to vector<8x32xbf16>
    %cst_34 = arith.constant dense<0.000000e+00> : vector<8x128xf32>
    %71 = tpu.matmul %70, %15, %cst_34 {dimension_numbers = #tpu.dot_dimension_numbers<[1], [0], [0], [1], [0, 0, 1, 1], [], []>} : vector<8x32xbf16>, vector<32x128xbf16>, vector<8x128xf32> -> vector<8x128xf32>
    %72 = arith.addf %69, %71 : vector<8x128xf32>
    %73 = math.tanh %72 : vector<8x128xf32>
    %74 = arith.negf %72 : vector<8x128xf32>
    %75 = math.exp %74 : vector<8x128xf32>
    %cst_35 = arith.constant 1.000000e+00 : f32
    %76 = vector.broadcast %cst_35 : f32 to vector<8x128xf32>
    %77 = arith.addf %76, %75 : vector<8x128xf32>
    %78 = arith.divf %76, %77 : vector<8x128xf32>
    %79 = arith.select %5, %73, %78 : vector<8x128xi1>, vector<8x128xf32>
    %80 = vector.extract_strided_slice %79 {offsets = [0, 0], sizes = [8, 32], strides = [1, 1]} : vector<8x128xf32> to vector<8x32xf32>
    %81 = vector.extract_strided_slice %79 {offsets = [0, 32], sizes = [8, 32], strides = [1, 1]} : vector<8x128xf32> to vector<8x32xf32>
    %82 = vector.extract_strided_slice %79 {offsets = [0, 64], sizes = [8, 32], strides = [1, 1]} : vector<8x128xf32> to vector<8x32xf32>
    %83 = vector.extract_strided_slice %79 {offsets = [0, 96], sizes = [8, 32], strides = [1, 1]} : vector<8x128xf32> to vector<8x32xf32>
    %84 = arith.mulf %81, %62 : vector<8x32xf32>
    %85 = arith.mulf %80, %82 : vector<8x32xf32>
    %86 = arith.addf %84, %85 : vector<8x32xf32>
    %87 = math.tanh %86 : vector<8x32xf32>
    %88 = arith.mulf %83, %87 : vector<8x32xf32>
    %c2_36 = arith.constant 2 : index
    %c0_37 = arith.constant 0 : index
    %c0_38 = arith.constant 0 : index
    %89 = vector.load %arg12[%c2_36, %c0_37, %c0_38] : memref<8x8x32xf32, #tpu.memory_space<vmem>>, vector<1x8x32xf32>
    %90 = vector.shape_cast %89 : vector<1x8x32xf32> to vector<8x32xf32>
    %91 = vector.shape_cast %88 : vector<8x32xf32> to vector<1x8x32xf32>
    tpu.vector_store %arg12[%c2_36, %c0_37, %c0_38], %91 {strides = array<i32>} : memref<8x8x32xf32, #tpu.memory_space<vmem>>, vector<1x8x32xf32>,
    %c3 = arith.constant 3 : index
    %c0_39 = arith.constant 0 : index
    %c0_40 = arith.constant 0 : index
    %92 = vector.load %arg13[%c3, %c0_39, %c0_40] : memref<8x8x128xf32, #tpu.memory_space<vmem>>, vector<1x8x128xf32>
    %93 = vector.shape_cast %92 : vector<1x8x128xf32> to vector<8x128xf32>
    %94 = arith.truncf %88 : vector<8x32xf32> to vector<8x32xbf16>
    %cst_41 = arith.constant dense<0.000000e+00> : vector<8x128xf32>
    %95 = tpu.matmul %94, %15, %cst_41 {dimension_numbers = #tpu.dot_dimension_numbers<[1], [0], [0], [1], [0, 0, 1, 1], [], []>} : vector<8x32xbf16>, vector<32x128xbf16>, vector<8x128xf32> -> vector<8x128xf32>
    %96 = arith.addf %93, %95 : vector<8x128xf32>
    %97 = math.tanh %96 : vector<8x128xf32>
    %98 = arith.negf %96 : vector<8x128xf32>
    %99 = math.exp %98 : vector<8x128xf32>
    %cst_42 = arith.constant 1.000000e+00 : f32
    %100 = vector.broadcast %cst_42 : f32 to vector<8x128xf32>
    %101 = arith.addf %100, %99 : vector<8x128xf32>
    %102 = arith.divf %100, %101 : vector<8x128xf32>
    %103 = arith.select %5, %97, %102 : vector<8x128xi1>, vector<8x128xf32>
    %104 = vector.extract_strided_slice %103 {offsets = [0, 0], sizes = [8, 32], strides = [1, 1]} : vector<8x128xf32> to vector<8x32xf32>
    %105 = vector.extract_strided_slice %103 {offsets = [0, 32], sizes = [8, 32], strides = [1, 1]} : vector<8x128xf32> to vector<8x32xf32>
    %106 = vector.extract_strided_slice %103 {offsets = [0, 64], sizes = [8, 32], strides = [1, 1]} : vector<8x128xf32> to vector<8x32xf32>
    %107 = vector.extract_strided_slice %103 {offsets = [0, 96], sizes = [8, 32], strides = [1, 1]} : vector<8x128xf32> to vector<8x32xf32>
    %108 = arith.mulf %105, %86 : vector<8x32xf32>
    %109 = arith.mulf %104, %106 : vector<8x32xf32>
    %110 = arith.addf %108, %109 : vector<8x32xf32>
    %111 = math.tanh %110 : vector<8x32xf32>
    %112 = arith.mulf %107, %111 : vector<8x32xf32>
    %c3_43 = arith.constant 3 : index
    %c0_44 = arith.constant 0 : index
    %c0_45 = arith.constant 0 : index
    %113 = vector.load %arg12[%c3_43, %c0_44, %c0_45] : memref<8x8x32xf32, #tpu.memory_space<vmem>>, vector<1x8x32xf32>
    %114 = vector.shape_cast %113 : vector<1x8x32xf32> to vector<8x32xf32>
    %115 = vector.shape_cast %112 : vector<8x32xf32> to vector<1x8x32xf32>
    tpu.vector_store %arg12[%c3_43, %c0_44, %c0_45], %115 {strides = array<i32>} : memref<8x8x32xf32, #tpu.memory_space<vmem>>, vector<1x8x32xf32>,
    %c4 = arith.constant 4 : index
    %c0_46 = arith.constant 0 : index
    %c0_47 = arith.constant 0 : index
    %116 = vector.load %arg13[%c4, %c0_46, %c0_47] : memref<8x8x128xf32, #tpu.memory_space<vmem>>, vector<1x8x128xf32>
    %117 = vector.shape_cast %116 : vector<1x8x128xf32> to vector<8x128xf32>
    %118 = arith.truncf %112 : vector<8x32xf32> to vector<8x32xbf16>
    %cst_48 = arith.constant dense<0.000000e+00> : vector<8x128xf32>
    %119 = tpu.matmul %118, %15, %cst_48 {dimension_numbers = #tpu.dot_dimension_numbers<[1], [0], [0], [1], [0, 0, 1, 1], [], []>} : vector<8x32xbf16>, vector<32x128xbf16>, vector<8x128xf32> -> vector<8x128xf32>
    %120 = arith.addf %117, %119 : vector<8x128xf32>
    %121 = math.tanh %120 : vector<8x128xf32>
    %122 = arith.negf %120 : vector<8x128xf32>
    %123 = math.exp %122 : vector<8x128xf32>
    %cst_49 = arith.constant 1.000000e+00 : f32
    %124 = vector.broadcast %cst_49 : f32 to vector<8x128xf32>
    %125 = arith.addf %124, %123 : vector<8x128xf32>
    %126 = arith.divf %124, %125 : vector<8x128xf32>
    %127 = arith.select %5, %121, %126 : vector<8x128xi1>, vector<8x128xf32>
    %128 = vector.extract_strided_slice %127 {offsets = [0, 0], sizes = [8, 32], strides = [1, 1]} : vector<8x128xf32> to vector<8x32xf32>
    %129 = vector.extract_strided_slice %127 {offsets = [0, 32], sizes = [8, 32], strides = [1, 1]} : vector<8x128xf32> to vector<8x32xf32>
    %130 = vector.extract_strided_slice %127 {offsets = [0, 64], sizes = [8, 32], strides = [1, 1]} : vector<8x128xf32> to vector<8x32xf32>
    %131 = vector.extract_strided_slice %127 {offsets = [0, 96], sizes = [8, 32], strides = [1, 1]} : vector<8x128xf32> to vector<8x32xf32>
    %132 = arith.mulf %129, %110 : vector<8x32xf32>
    %133 = arith.mulf %128, %130 : vector<8x32xf32>
    %134 = arith.addf %132, %133 : vector<8x32xf32>
    %135 = math.tanh %134 : vector<8x32xf32>
    %136 = arith.mulf %131, %135 : vector<8x32xf32>
    %c4_50 = arith.constant 4 : index
    %c0_51 = arith.constant 0 : index
    %c0_52 = arith.constant 0 : index
    %137 = vector.load %arg12[%c4_50, %c0_51, %c0_52] : memref<8x8x32xf32, #tpu.memory_space<vmem>>, vector<1x8x32xf32>
    %138 = vector.shape_cast %137 : vector<1x8x32xf32> to vector<8x32xf32>
    %139 = vector.shape_cast %136 : vector<8x32xf32> to vector<1x8x32xf32>
    tpu.vector_store %arg12[%c4_50, %c0_51, %c0_52], %139 {strides = array<i32>} : memref<8x8x32xf32, #tpu.memory_space<vmem>>, vector<1x8x32xf32>,
    %c5 = arith.constant 5 : index
    %c0_53 = arith.constant 0 : index
    %c0_54 = arith.constant 0 : index
    %140 = vector.load %arg13[%c5, %c0_53, %c0_54] : memref<8x8x128xf32, #tpu.memory_space<vmem>>, vector<1x8x128xf32>
    %141 = vector.shape_cast %140 : vector<1x8x128xf32> to vector<8x128xf32>
    %142 = arith.truncf %136 : vector<8x32xf32> to vector<8x32xbf16>
    %cst_55 = arith.constant dense<0.000000e+00> : vector<8x128xf32>
    %143 = tpu.matmul %142, %15, %cst_55 {dimension_numbers = #tpu.dot_dimension_numbers<[1], [0], [0], [1], [0, 0, 1, 1], [], []>} : vector<8x32xbf16>, vector<32x128xbf16>, vector<8x128xf32> -> vector<8x128xf32>
    %144 = arith.addf %141, %143 : vector<8x128xf32>
    %145 = math.tanh %144 : vector<8x128xf32>
    %146 = arith.negf %144 : vector<8x128xf32>
    %147 = math.exp %146 : vector<8x128xf32>
    %cst_56 = arith.constant 1.000000e+00 : f32
    %148 = vector.broadcast %cst_56 : f32 to vector<8x128xf32>
    %149 = arith.addf %148, %147 : vector<8x128xf32>
    %150 = arith.divf %148, %149 : vector<8x128xf32>
    %151 = arith.select %5, %145, %150 : vector<8x128xi1>, vector<8x128xf32>
    %152 = vector.extract_strided_slice %151 {offsets = [0, 0], sizes = [8, 32], strides = [1, 1]} : vector<8x128xf32> to vector<8x32xf32>
    %153 = vector.extract_strided_slice %151 {offsets = [0, 32], sizes = [8, 32], strides = [1, 1]} : vector<8x128xf32> to vector<8x32xf32>
    %154 = vector.extract_strided_slice %151 {offsets = [0, 64], sizes = [8, 32], strides = [1, 1]} : vector<8x128xf32> to vector<8x32xf32>
    %155 = vector.extract_strided_slice %151 {offsets = [0, 96], sizes = [8, 32], strides = [1, 1]} : vector<8x128xf32> to vector<8x32xf32>
    %156 = arith.mulf %153, %134 : vector<8x32xf32>
    %157 = arith.mulf %152, %154 : vector<8x32xf32>
    %158 = arith.addf %156, %157 : vector<8x32xf32>
    %159 = math.tanh %158 : vector<8x32xf32>
    %160 = arith.mulf %155, %159 : vector<8x32xf32>
    %c5_57 = arith.constant 5 : index
    %c0_58 = arith.constant 0 : index
    %c0_59 = arith.constant 0 : index
    %161 = vector.load %arg12[%c5_57, %c0_58, %c0_59] : memref<8x8x32xf32, #tpu.memory_space<vmem>>, vector<1x8x32xf32>
    %162 = vector.shape_cast %161 : vector<1x8x32xf32> to vector<8x32xf32>
    %163 = vector.shape_cast %160 : vector<8x32xf32> to vector<1x8x32xf32>
    tpu.vector_store %arg12[%c5_57, %c0_58, %c0_59], %163 {strides = array<i32>} : memref<8x8x32xf32, #tpu.memory_space<vmem>>, vector<1x8x32xf32>,
    %c6 = arith.constant 6 : index
    %c0_60 = arith.constant 0 : index
    %c0_61 = arith.constant 0 : index
    %164 = vector.load %arg13[%c6, %c0_60, %c0_61] : memref<8x8x128xf32, #tpu.memory_space<vmem>>, vector<1x8x128xf32>
    %165 = vector.shape_cast %164 : vector<1x8x128xf32> to vector<8x128xf32>
    %166 = arith.truncf %160 : vector<8x32xf32> to vector<8x32xbf16>
    %cst_62 = arith.constant dense<0.000000e+00> : vector<8x128xf32>
    %167 = tpu.matmul %166, %15, %cst_62 {dimension_numbers = #tpu.dot_dimension_numbers<[1], [0], [0], [1], [0, 0, 1, 1], [], []>} : vector<8x32xbf16>, vector<32x128xbf16>, vector<8x128xf32> -> vector<8x128xf32>
    %168 = arith.addf %165, %167 : vector<8x128xf32>
    %169 = math.tanh %168 : vector<8x128xf32>
    %170 = arith.negf %168 : vector<8x128xf32>
    %171 = math.exp %170 : vector<8x128xf32>
    %cst_63 = arith.constant 1.000000e+00 : f32
    %172 = vector.broadcast %cst_63 : f32 to vector<8x128xf32>
    %173 = arith.addf %172, %171 : vector<8x128xf32>
    %174 = arith.divf %172, %173 : vector<8x128xf32>
    %175 = arith.select %5, %169, %174 : vector<8x128xi1>, vector<8x128xf32>
    %176 = vector.extract_strided_slice %175 {offsets = [0, 0], sizes = [8, 32], strides = [1, 1]} : vector<8x128xf32> to vector<8x32xf32>
    %177 = vector.extract_strided_slice %175 {offsets = [0, 32], sizes = [8, 32], strides = [1, 1]} : vector<8x128xf32> to vector<8x32xf32>
    %178 = vector.extract_strided_slice %175 {offsets = [0, 64], sizes = [8, 32], strides = [1, 1]} : vector<8x128xf32> to vector<8x32xf32>
    %179 = vector.extract_strided_slice %175 {offsets = [0, 96], sizes = [8, 32], strides = [1, 1]} : vector<8x128xf32> to vector<8x32xf32>
    %180 = arith.mulf %177, %158 : vector<8x32xf32>
    %181 = arith.mulf %176, %178 : vector<8x32xf32>
    %182 = arith.addf %180, %181 : vector<8x32xf32>
    %183 = math.tanh %182 : vector<8x32xf32>
    %184 = arith.mulf %179, %183 : vector<8x32xf32>
    %c6_64 = arith.constant 6 : index
    %c0_65 = arith.constant 0 : index
    %c0_66 = arith.constant 0 : index
    %185 = vector.load %arg12[%c6_64, %c0_65, %c0_66] : memref<8x8x32xf32, #tpu.memory_space<vmem>>, vector<1x8x32xf32>
    %186 = vector.shape_cast %185 : vector<1x8x32xf32> to vector<8x32xf32>
    %187 = vector.shape_cast %184 : vector<8x32xf32> to vector<1x8x32xf32>
    tpu.vector_store %arg12[%c6_64, %c0_65, %c0_66], %187 {strides = array<i32>} : memref<8x8x32xf32, #tpu.memory_space<vmem>>, vector<1x8x32xf32>,
    %c7 = arith.constant 7 : index
    %c0_67 = arith.constant 0 : index
    %c0_68 = arith.constant 0 : index
    %188 = vector.load %arg13[%c7, %c0_67, %c0_68] : memref<8x8x128xf32, #tpu.memory_space<vmem>>, vector<1x8x128xf32>
    %189 = vector.shape_cast %188 : vector<1x8x128xf32> to vector<8x128xf32>
    %190 = arith.truncf %184 : vector<8x32xf32> to vector<8x32xbf16>
    %cst_69 = arith.constant dense<0.000000e+00> : vector<8x128xf32>
    %191 = tpu.matmul %190, %15, %cst_69 {dimension_numbers = #tpu.dot_dimension_numbers<[1], [0], [0], [1], [0, 0, 1, 1], [], []>} : vector<8x32xbf16>, vector<32x128xbf16>, vector<8x128xf32> -> vector<8x128xf32>
    %192 = arith.addf %189, %191 : vector<8x128xf32>
    %193 = math.tanh %192 : vector<8x128xf32>
    %194 = arith.negf %192 : vector<8x128xf32>
    %195 = math.exp %194 : vector<8x128xf32>
    %cst_70 = arith.constant 1.000000e+00 : f32
    %196 = vector.broadcast %cst_70 : f32 to vector<8x128xf32>
    %197 = arith.addf %196, %195 : vector<8x128xf32>
    %198 = arith.divf %196, %197 : vector<8x128xf32>
    %199 = arith.select %5, %193, %198 : vector<8x128xi1>, vector<8x128xf32>
    %200 = vector.extract_strided_slice %199 {offsets = [0, 0], sizes = [8, 32], strides = [1, 1]} : vector<8x128xf32> to vector<8x32xf32>
    %201 = vector.extract_strided_slice %199 {offsets = [0, 32], sizes = [8, 32], strides = [1, 1]} : vector<8x128xf32> to vector<8x32xf32>
    %202 = vector.extract_strided_slice %199 {offsets = [0, 64], sizes = [8, 32], strides = [1, 1]} : vector<8x128xf32> to vector<8x32xf32>
    %203 = vector.extract_strided_slice %199 {offsets = [0, 96], sizes = [8, 32], strides = [1, 1]} : vector<8x128xf32> to vector<8x32xf32>
    %204 = arith.mulf %201, %182 : vector<8x32xf32>
    %205 = arith.mulf %200, %202 : vector<8x32xf32>
    %206 = arith.addf %204, %205 : vector<8x32xf32>
    %207 = math.tanh %206 : vector<8x32xf32>
    %208 = arith.mulf %203, %207 : vector<8x32xf32>
    %c7_71 = arith.constant 7 : index
    %c0_72 = arith.constant 0 : index
    %c0_73 = arith.constant 0 : index
    %209 = vector.load %arg12[%c7_71, %c0_72, %c0_73] : memref<8x8x32xf32, #tpu.memory_space<vmem>>, vector<1x8x32xf32>
    %210 = vector.shape_cast %209 : vector<1x8x32xf32> to vector<8x32xf32>
    %211 = vector.shape_cast %208 : vector<8x32xf32> to vector<1x8x32xf32>
    tpu.vector_store %arg12[%c7_71, %c0_72, %c0_73], %211 {strides = array<i32>} : memref<8x8x32xf32, #tpu.memory_space<vmem>>, vector<1x8x32xf32>,
    %c0_74 = arith.constant 0 : index
    %c0_75 = arith.constant 0 : index
    %c0_76 = arith.constant 0 : index
    %212 = vector.load %arg12[%c0_74, %c0_75, %c0_76] : memref<8x8x32xf32, #tpu.memory_space<vmem>>, vector<8x8x32xf32>
    %213 = vector.shape_cast %212 : vector<8x8x32xf32> to vector<64x32xf32>
    %214 = arith.truncf %213 : vector<64x32xf32> to vector<64x32xbf16>
    %c0_77 = arith.constant 0 : index
    %c0_78 = arith.constant 0 : index
    %215 = vector.load %arg4[%c0_77, %c0_78] : memref<32x128xbf16, #tpu.memory_space<vmem>>, vector<32x128xbf16>
    %cst_79 = arith.constant dense<0.000000e+00> : vector<64x128xf32>
    %216 = tpu.matmul %214, %215, %cst_79 {dimension_numbers = #tpu.dot_dimension_numbers<[1], [0], [0], [1], [0, 0, 1, 1], [], []>} : vector<64x32xbf16>, vector<32x128xbf16>, vector<64x128xf32> -> vector<64x128xf32>
    %c0_80 = arith.constant 0 : index
    %c0_81 = arith.constant 0 : index
    %217 = vector.load %arg8[%c0_80, %c0_81] : memref<1x128xf32, #tpu.memory_space<vmem>>, vector<1x128xf32>
    %218 = vector.broadcast %217 : vector<1x128xf32> to vector<64x128xf32>
    %219 = arith.addf %216, %218 : vector<64x128xf32>
    %220 = vector.shape_cast %219 : vector<64x128xf32> to vector<8x8x128xf32>
    %c0_82 = arith.constant 0 : index
    %c0_83 = arith.constant 0 : index
    %c0_84 = arith.constant 0 : index
    %221 = vector.load %arg13[%c0_82, %c0_83, %c0_84] : memref<8x8x128xf32, #tpu.memory_space<vmem>>, vector<8x8x128xf32>
    tpu.vector_store %arg13[%c0_82, %c0_83, %c0_84], %220 {strides = array<i32>} : memref<8x8x128xf32, #tpu.memory_space<vmem>>, vector<8x8x128xf32>,
    %c0_85 = arith.constant 0 : index
    %c0_86 = arith.constant 0 : index
    %222 = vector.load %arg6[%c0_85, %c0_86] : memref<32x128xbf16, #tpu.memory_space<vmem>>, vector<32x128xbf16>
    %c1_87 = arith.constant 1 : index
    %c0_88 = arith.constant 0 : index
    %c0_89 = arith.constant 0 : index
    %223 = vector.load %arg1[%c1_87, %c0_88, %c0_89] : memref<2x8x32xf32, #tpu.memory_space<vmem>>, vector<1x8x32xf32>
    %224 = vector.shape_cast %223 : vector<1x8x32xf32> to vector<8x32xf32>
    %c1_90 = arith.constant 1 : index
    %c0_91 = arith.constant 0 : index
    %c0_92 = arith.constant 0 : index
    %225 = vector.load %arg2[%c1_90, %c0_91, %c0_92] : memref<2x8x32xf32, #tpu.memory_space<vmem>>, vector<1x8x32xf32>
    %226 = vector.shape_cast %225 : vector<1x8x32xf32> to vector<8x32xf32>
    %c0_93 = arith.constant 0 : index
    %c0_94 = arith.constant 0 : index
    %c0_95 = arith.constant 0 : index
    %227 = vector.load %arg13[%c0_93, %c0_94, %c0_95] : memref<8x8x128xf32, #tpu.memory_space<vmem>>, vector<1x8x128xf32>
    %228 = vector.shape_cast %227 : vector<1x8x128xf32> to vector<8x128xf32>
    %229 = arith.truncf %224 : vector<8x32xf32> to vector<8x32xbf16>
    %cst_96 = arith.constant dense<0.000000e+00> : vector<8x128xf32>
    %230 = tpu.matmul %229, %222, %cst_96 {dimension_numbers = #tpu.dot_dimension_numbers<[1], [0], [0], [1], [0, 0, 1, 1], [], []>} : vector<8x32xbf16>, vector<32x128xbf16>, vector<8x128xf32> -> vector<8x128xf32>
    %231 = arith.addf %228, %230 : vector<8x128xf32>
    %232 = math.tanh %231 : vector<8x128xf32>
    %233 = arith.negf %231 : vector<8x128xf32>
    %234 = math.exp %233 : vector<8x128xf32>
    %cst_97 = arith.constant 1.000000e+00 : f32
    %235 = vector.broadcast %cst_97 : f32 to vector<8x128xf32>
    %236 = arith.addf %235, %234 : vector<8x128xf32>
    %237 = arith.divf %235, %236 : vector<8x128xf32>
    %238 = arith.select %5, %232, %237 : vector<8x128xi1>, vector<8x128xf32>
    %239 = vector.extract_strided_slice %238 {offsets = [0, 0], sizes = [8, 32], strides = [1, 1]} : vector<8x128xf32> to vector<8x32xf32>
    %240 = vector.extract_strided_slice %238 {offsets = [0, 32], sizes = [8, 32], strides = [1, 1]} : vector<8x128xf32> to vector<8x32xf32>
    %241 = vector.extract_strided_slice %238 {offsets = [0, 64], sizes = [8, 32], strides = [1, 1]} : vector<8x128xf32> to vector<8x32xf32>
    %242 = vector.extract_strided_slice %238 {offsets = [0, 96], sizes = [8, 32], strides = [1, 1]} : vector<8x128xf32> to vector<8x32xf32>
    %243 = arith.mulf %240, %226 : vector<8x32xf32>
    %244 = arith.mulf %239, %241 : vector<8x32xf32>
    %245 = arith.addf %243, %244 : vector<8x32xf32>
    %246 = math.tanh %245 : vector<8x32xf32>
    %247 = arith.mulf %242, %246 : vector<8x32xf32>
    %c0_98 = arith.constant 0 : index
    %c0_99 = arith.constant 0 : index
    %c0_100 = arith.constant 0 : index
    %248 = vector.load %arg12[%c0_98, %c0_99, %c0_100] : memref<8x8x32xf32, #tpu.memory_space<vmem>>, vector<1x8x32xf32>
    %249 = vector.shape_cast %248 : vector<1x8x32xf32> to vector<8x32xf32>
    %250 = vector.shape_cast %247 : vector<8x32xf32> to vector<1x8x32xf32>
    tpu.vector_store %arg12[%c0_98, %c0_99, %c0_100], %250 {strides = array<i32>} : memref<8x8x32xf32, #tpu.memory_space<vmem>>, vector<1x8x32xf32>,
    %c1_101 = arith.constant 1 : index
    %c0_102 = arith.constant 0 : index
    %c0_103 = arith.constant 0 : index
    %251 = vector.load %arg13[%c1_101, %c0_102, %c0_103] : memref<8x8x128xf32, #tpu.memory_space<vmem>>, vector<1x8x128xf32>
    %252 = vector.shape_cast %251 : vector<1x8x128xf32> to vector<8x128xf32>
    %253 = arith.truncf %247 : vector<8x32xf32> to vector<8x32xbf16>
    %cst_104 = arith.constant dense<0.000000e+00> : vector<8x128xf32>
    %254 = tpu.matmul %253, %222, %cst_104 {dimension_numbers = #tpu.dot_dimension_numbers<[1], [0], [0], [1], [0, 0, 1, 1], [], []>} : vector<8x32xbf16>, vector<32x128xbf16>, vector<8x128xf32> -> vector<8x128xf32>
    %255 = arith.addf %252, %254 : vector<8x128xf32>
    %256 = math.tanh %255 : vector<8x128xf32>
    %257 = arith.negf %255 : vector<8x128xf32>
    %258 = math.exp %257 : vector<8x128xf32>
    %cst_105 = arith.constant 1.000000e+00 : f32
    %259 = vector.broadcast %cst_105 : f32 to vector<8x128xf32>
    %260 = arith.addf %259, %258 : vector<8x128xf32>
    %261 = arith.divf %259, %260 : vector<8x128xf32>
    %262 = arith.select %5, %256, %261 : vector<8x128xi1>, vector<8x128xf32>
    %263 = vector.extract_strided_slice %262 {offsets = [0, 0], sizes = [8, 32], strides = [1, 1]} : vector<8x128xf32> to vector<8x32xf32>
    %264 = vector.extract_strided_slice %262 {offsets = [0, 32], sizes = [8, 32], strides = [1, 1]} : vector<8x128xf32> to vector<8x32xf32>
    %265 = vector.extract_strided_slice %262 {offsets = [0, 64], sizes = [8, 32], strides = [1, 1]} : vector<8x128xf32> to vector<8x32xf32>
    %266 = vector.extract_strided_slice %262 {offsets = [0, 96], sizes = [8, 32], strides = [1, 1]} : vector<8x128xf32> to vector<8x32xf32>
    %267 = arith.mulf %264, %245 : vector<8x32xf32>
    %268 = arith.mulf %263, %265 : vector<8x32xf32>
    %269 = arith.addf %267, %268 : vector<8x32xf32>
    %270 = math.tanh %269 : vector<8x32xf32>
    %271 = arith.mulf %266, %270 : vector<8x32xf32>
    %c1_106 = arith.constant 1 : index
    %c0_107 = arith.constant 0 : index
    %c0_108 = arith.constant 0 : index
    %272 = vector.load %arg12[%c1_106, %c0_107, %c0_108] : memref<8x8x32xf32, #tpu.memory_space<vmem>>, vector<1x8x32xf32>
    %273 = vector.shape_cast %272 : vector<1x8x32xf32> to vector<8x32xf32>
    %274 = vector.shape_cast %271 : vector<8x32xf32> to vector<1x8x32xf32>
    tpu.vector_store %arg12[%c1_106, %c0_107, %c0_108], %274 {strides = array<i32>} : memref<8x8x32xf32, #tpu.memory_space<vmem>>, vector<1x8x32xf32>,
    %c2_109 = arith.constant 2 : index
    %c0_110 = arith.constant 0 : index
    %c0_111 = arith.constant 0 : index
    %275 = vector.load %arg13[%c2_109, %c0_110, %c0_111] : memref<8x8x128xf32, #tpu.memory_space<vmem>>, vector<1x8x128xf32>
    %276 = vector.shape_cast %275 : vector<1x8x128xf32> to vector<8x128xf32>
    %277 = arith.truncf %271 : vector<8x32xf32> to vector<8x32xbf16>
    %cst_112 = arith.constant dense<0.000000e+00> : vector<8x128xf32>
    %278 = tpu.matmul %277, %222, %cst_112 {dimension_numbers = #tpu.dot_dimension_numbers<[1], [0], [0], [1], [0, 0, 1, 1], [], []>} : vector<8x32xbf16>, vector<32x128xbf16>, vector<8x128xf32> -> vector<8x128xf32>
    %279 = arith.addf %276, %278 : vector<8x128xf32>
    %280 = math.tanh %279 : vector<8x128xf32>
    %281 = arith.negf %279 : vector<8x128xf32>
    %282 = math.exp %281 : vector<8x128xf32>
    %cst_113 = arith.constant 1.000000e+00 : f32
    %283 = vector.broadcast %cst_113 : f32 to vector<8x128xf32>
    %284 = arith.addf %283, %282 : vector<8x128xf32>
    %285 = arith.divf %283, %284 : vector<8x128xf32>
    %286 = arith.select %5, %280, %285 : vector<8x128xi1>, vector<8x128xf32>
    %287 = vector.extract_strided_slice %286 {offsets = [0, 0], sizes = [8, 32], strides = [1, 1]} : vector<8x128xf32> to vector<8x32xf32>
    %288 = vector.extract_strided_slice %286 {offsets = [0, 32], sizes = [8, 32], strides = [1, 1]} : vector<8x128xf32> to vector<8x32xf32>
    %289 = vector.extract_strided_slice %286 {offsets = [0, 64], sizes = [8, 32], strides = [1, 1]} : vector<8x128xf32> to vector<8x32xf32>
    %290 = vector.extract_strided_slice %286 {offsets = [0, 96], sizes = [8, 32], strides = [1, 1]} : vector<8x128xf32> to vector<8x32xf32>
    %291 = arith.mulf %288, %269 : vector<8x32xf32>
    %292 = arith.mulf %287, %289 : vector<8x32xf32>
    %293 = arith.addf %291, %292 : vector<8x32xf32>
    %294 = math.tanh %293 : vector<8x32xf32>
    %295 = arith.mulf %290, %294 : vector<8x32xf32>
    %c2_114 = arith.constant 2 : index
    %c0_115 = arith.constant 0 : index
    %c0_116 = arith.constant 0 : index
    %296 = vector.load %arg12[%c2_114, %c0_115, %c0_116] : memref<8x8x32xf32, #tpu.memory_space<vmem>>, vector<1x8x32xf32>
    %297 = vector.shape_cast %296 : vector<1x8x32xf32> to vector<8x32xf32>
    %298 = vector.shape_cast %295 : vector<8x32xf32> to vector<1x8x32xf32>
    tpu.vector_store %arg12[%c2_114, %c0_115, %c0_116], %298 {strides = array<i32>} : memref<8x8x32xf32, #tpu.memory_space<vmem>>, vector<1x8x32xf32>,
    %c3_117 = arith.constant 3 : index
    %c0_118 = arith.constant 0 : index
    %c0_119 = arith.constant 0 : index
    %299 = vector.load %arg13[%c3_117, %c0_118, %c0_119] : memref<8x8x128xf32, #tpu.memory_space<vmem>>, vector<1x8x128xf32>
    %300 = vector.shape_cast %299 : vector<1x8x128xf32> to vector<8x128xf32>
    %301 = arith.truncf %295 : vector<8x32xf32> to vector<8x32xbf16>
    %cst_120 = arith.constant dense<0.000000e+00> : vector<8x128xf32>
    %302 = tpu.matmul %301, %222, %cst_120 {dimension_numbers = #tpu.dot_dimension_numbers<[1], [0], [0], [1], [0, 0, 1, 1], [], []>} : vector<8x32xbf16>, vector<32x128xbf16>, vector<8x128xf32> -> vector<8x128xf32>
    %303 = arith.addf %300, %302 : vector<8x128xf32>
    %304 = math.tanh %303 : vector<8x128xf32>
    %305 = arith.negf %303 : vector<8x128xf32>
    %306 = math.exp %305 : vector<8x128xf32>
    %cst_121 = arith.constant 1.000000e+00 : f32
    %307 = vector.broadcast %cst_121 : f32 to vector<8x128xf32>
    %308 = arith.addf %307, %306 : vector<8x128xf32>
    %309 = arith.divf %307, %308 : vector<8x128xf32>
    %310 = arith.select %5, %304, %309 : vector<8x128xi1>, vector<8x128xf32>
    %311 = vector.extract_strided_slice %310 {offsets = [0, 0], sizes = [8, 32], strides = [1, 1]} : vector<8x128xf32> to vector<8x32xf32>
    %312 = vector.extract_strided_slice %310 {offsets = [0, 32], sizes = [8, 32], strides = [1, 1]} : vector<8x128xf32> to vector<8x32xf32>
    %313 = vector.extract_strided_slice %310 {offsets = [0, 64], sizes = [8, 32], strides = [1, 1]} : vector<8x128xf32> to vector<8x32xf32>
    %314 = vector.extract_strided_slice %310 {offsets = [0, 96], sizes = [8, 32], strides = [1, 1]} : vector<8x128xf32> to vector<8x32xf32>
    %315 = arith.mulf %312, %293 : vector<8x32xf32>
    %316 = arith.mulf %311, %313 : vector<8x32xf32>
    %317 = arith.addf %315, %316 : vector<8x32xf32>
    %318 = math.tanh %317 : vector<8x32xf32>
    %319 = arith.mulf %314, %318 : vector<8x32xf32>
    %c3_122 = arith.constant 3 : index
    %c0_123 = arith.constant 0 : index
    %c0_124 = arith.constant 0 : index
    %320 = vector.load %arg12[%c3_122, %c0_123, %c0_124] : memref<8x8x32xf32, #tpu.memory_space<vmem>>, vector<1x8x32xf32>
    %321 = vector.shape_cast %320 : vector<1x8x32xf32> to vector<8x32xf32>
    %322 = vector.shape_cast %319 : vector<8x32xf32> to vector<1x8x32xf32>
    tpu.vector_store %arg12[%c3_122, %c0_123, %c0_124], %322 {strides = array<i32>} : memref<8x8x32xf32, #tpu.memory_space<vmem>>, vector<1x8x32xf32>,
    %c4_125 = arith.constant 4 : index
    %c0_126 = arith.constant 0 : index
    %c0_127 = arith.constant 0 : index
    %323 = vector.load %arg13[%c4_125, %c0_126, %c0_127] : memref<8x8x128xf32, #tpu.memory_space<vmem>>, vector<1x8x128xf32>
    %324 = vector.shape_cast %323 : vector<1x8x128xf32> to vector<8x128xf32>
    %325 = arith.truncf %319 : vector<8x32xf32> to vector<8x32xbf16>
    %cst_128 = arith.constant dense<0.000000e+00> : vector<8x128xf32>
    %326 = tpu.matmul %325, %222, %cst_128 {dimension_numbers = #tpu.dot_dimension_numbers<[1], [0], [0], [1], [0, 0, 1, 1], [], []>} : vector<8x32xbf16>, vector<32x128xbf16>, vector<8x128xf32> -> vector<8x128xf32>
    %327 = arith.addf %324, %326 : vector<8x128xf32>
    %328 = math.tanh %327 : vector<8x128xf32>
    %329 = arith.negf %327 : vector<8x128xf32>
    %330 = math.exp %329 : vector<8x128xf32>
    %cst_129 = arith.constant 1.000000e+00 : f32
    %331 = vector.broadcast %cst_129 : f32 to vector<8x128xf32>
    %332 = arith.addf %331, %330 : vector<8x128xf32>
    %333 = arith.divf %331, %332 : vector<8x128xf32>
    %334 = arith.select %5, %328, %333 : vector<8x128xi1>, vector<8x128xf32>
    %335 = vector.extract_strided_slice %334 {offsets = [0, 0], sizes = [8, 32], strides = [1, 1]} : vector<8x128xf32> to vector<8x32xf32>
    %336 = vector.extract_strided_slice %334 {offsets = [0, 32], sizes = [8, 32], strides = [1, 1]} : vector<8x128xf32> to vector<8x32xf32>
    %337 = vector.extract_strided_slice %334 {offsets = [0, 64], sizes = [8, 32], strides = [1, 1]} : vector<8x128xf32> to vector<8x32xf32>
    %338 = vector.extract_strided_slice %334 {offsets = [0, 96], sizes = [8, 32], strides = [1, 1]} : vector<8x128xf32> to vector<8x32xf32>
    %339 = arith.mulf %336, %317 : vector<8x32xf32>
    %340 = arith.mulf %335, %337 : vector<8x32xf32>
    %341 = arith.addf %339, %340 : vector<8x32xf32>
    %342 = math.tanh %341 : vector<8x32xf32>
    %343 = arith.mulf %338, %342 : vector<8x32xf32>
    %c4_130 = arith.constant 4 : index
    %c0_131 = arith.constant 0 : index
    %c0_132 = arith.constant 0 : index
    %344 = vector.load %arg12[%c4_130, %c0_131, %c0_132] : memref<8x8x32xf32, #tpu.memory_space<vmem>>, vector<1x8x32xf32>
    %345 = vector.shape_cast %344 : vector<1x8x32xf32> to vector<8x32xf32>
    %346 = vector.shape_cast %343 : vector<8x32xf32> to vector<1x8x32xf32>
    tpu.vector_store %arg12[%c4_130, %c0_131, %c0_132], %346 {strides = array<i32>} : memref<8x8x32xf32, #tpu.memory_space<vmem>>, vector<1x8x32xf32>,
    %c5_133 = arith.constant 5 : index
    %c0_134 = arith.constant 0 : index
    %c0_135 = arith.constant 0 : index
    %347 = vector.load %arg13[%c5_133, %c0_134, %c0_135] : memref<8x8x128xf32, #tpu.memory_space<vmem>>, vector<1x8x128xf32>
    %348 = vector.shape_cast %347 : vector<1x8x128xf32> to vector<8x128xf32>
    %349 = arith.truncf %343 : vector<8x32xf32> to vector<8x32xbf16>
    %cst_136 = arith.constant dense<0.000000e+00> : vector<8x128xf32>
    %350 = tpu.matmul %349, %222, %cst_136 {dimension_numbers = #tpu.dot_dimension_numbers<[1], [0], [0], [1], [0, 0, 1, 1], [], []>} : vector<8x32xbf16>, vector<32x128xbf16>, vector<8x128xf32> -> vector<8x128xf32>
    %351 = arith.addf %348, %350 : vector<8x128xf32>
    %352 = math.tanh %351 : vector<8x128xf32>
    %353 = arith.negf %351 : vector<8x128xf32>
    %354 = math.exp %353 : vector<8x128xf32>
    %cst_137 = arith.constant 1.000000e+00 : f32
    %355 = vector.broadcast %cst_137 : f32 to vector<8x128xf32>
    %356 = arith.addf %355, %354 : vector<8x128xf32>
    %357 = arith.divf %355, %356 : vector<8x128xf32>
    %358 = arith.select %5, %352, %357 : vector<8x128xi1>, vector<8x128xf32>
    %359 = vector.extract_strided_slice %358 {offsets = [0, 0], sizes = [8, 32], strides = [1, 1]} : vector<8x128xf32> to vector<8x32xf32>
    %360 = vector.extract_strided_slice %358 {offsets = [0, 32], sizes = [8, 32], strides = [1, 1]} : vector<8x128xf32> to vector<8x32xf32>
    %361 = vector.extract_strided_slice %358 {offsets = [0, 64], sizes = [8, 32], strides = [1, 1]} : vector<8x128xf32> to vector<8x32xf32>
    %362 = vector.extract_strided_slice %358 {offsets = [0, 96], sizes = [8, 32], strides = [1, 1]} : vector<8x128xf32> to vector<8x32xf32>
    %363 = arith.mulf %360, %341 : vector<8x32xf32>
    %364 = arith.mulf %359, %361 : vector<8x32xf32>
    %365 = arith.addf %363, %364 : vector<8x32xf32>
    %366 = math.tanh %365 : vector<8x32xf32>
    %367 = arith.mulf %362, %366 : vector<8x32xf32>
    %c5_138 = arith.constant 5 : index
    %c0_139 = arith.constant 0 : index
    %c0_140 = arith.constant 0 : index
    %368 = vector.load %arg12[%c5_138, %c0_139, %c0_140] : memref<8x8x32xf32, #tpu.memory_space<vmem>>, vector<1x8x32xf32>
    %369 = vector.shape_cast %368 : vector<1x8x32xf32> to vector<8x32xf32>
    %370 = vector.shape_cast %367 : vector<8x32xf32> to vector<1x8x32xf32>
    tpu.vector_store %arg12[%c5_138, %c0_139, %c0_140], %370 {strides = array<i32>} : memref<8x8x32xf32, #tpu.memory_space<vmem>>, vector<1x8x32xf32>,
    %c6_141 = arith.constant 6 : index
    %c0_142 = arith.constant 0 : index
    %c0_143 = arith.constant 0 : index
    %371 = vector.load %arg13[%c6_141, %c0_142, %c0_143] : memref<8x8x128xf32, #tpu.memory_space<vmem>>, vector<1x8x128xf32>
    %372 = vector.shape_cast %371 : vector<1x8x128xf32> to vector<8x128xf32>
    %373 = arith.truncf %367 : vector<8x32xf32> to vector<8x32xbf16>
    %cst_144 = arith.constant dense<0.000000e+00> : vector<8x128xf32>
    %374 = tpu.matmul %373, %222, %cst_144 {dimension_numbers = #tpu.dot_dimension_numbers<[1], [0], [0], [1], [0, 0, 1, 1], [], []>} : vector<8x32xbf16>, vector<32x128xbf16>, vector<8x128xf32> -> vector<8x128xf32>
    %375 = arith.addf %372, %374 : vector<8x128xf32>
    %376 = math.tanh %375 : vector<8x128xf32>
    %377 = arith.negf %375 : vector<8x128xf32>
    %378 = math.exp %377 : vector<8x128xf32>
    %cst_145 = arith.constant 1.000000e+00 : f32
    %379 = vector.broadcast %cst_145 : f32 to vector<8x128xf32>
    %380 = arith.addf %379, %378 : vector<8x128xf32>
    %381 = arith.divf %379, %380 : vector<8x128xf32>
    %382 = arith.select %5, %376, %381 : vector<8x128xi1>, vector<8x128xf32>
    %383 = vector.extract_strided_slice %382 {offsets = [0, 0], sizes = [8, 32], strides = [1, 1]} : vector<8x128xf32> to vector<8x32xf32>
    %384 = vector.extract_strided_slice %382 {offsets = [0, 32], sizes = [8, 32], strides = [1, 1]} : vector<8x128xf32> to vector<8x32xf32>
    %385 = vector.extract_strided_slice %382 {offsets = [0, 64], sizes = [8, 32], strides = [1, 1]} : vector<8x128xf32> to vector<8x32xf32>
    %386 = vector.extract_strided_slice %382 {offsets = [0, 96], sizes = [8, 32], strides = [1, 1]} : vector<8x128xf32> to vector<8x32xf32>
    %387 = arith.mulf %384, %365 : vector<8x32xf32>
    %388 = arith.mulf %383, %385 : vector<8x32xf32>
    %389 = arith.addf %387, %388 : vector<8x32xf32>
    %390 = math.tanh %389 : vector<8x32xf32>
    %391 = arith.mulf %386, %390 : vector<8x32xf32>
    %c6_146 = arith.constant 6 : index
    %c0_147 = arith.constant 0 : index
    %c0_148 = arith.constant 0 : index
    %392 = vector.load %arg12[%c6_146, %c0_147, %c0_148] : memref<8x8x32xf32, #tpu.memory_space<vmem>>, vector<1x8x32xf32>
    %393 = vector.shape_cast %392 : vector<1x8x32xf32> to vector<8x32xf32>
    %394 = vector.shape_cast %391 : vector<8x32xf32> to vector<1x8x32xf32>
    tpu.vector_store %arg12[%c6_146, %c0_147, %c0_148], %394 {strides = array<i32>} : memref<8x8x32xf32, #tpu.memory_space<vmem>>, vector<1x8x32xf32>,
    %c7_149 = arith.constant 7 : index
    %c0_150 = arith.constant 0 : index
    %c0_151 = arith.constant 0 : index
    %395 = vector.load %arg13[%c7_149, %c0_150, %c0_151] : memref<8x8x128xf32, #tpu.memory_space<vmem>>, vector<1x8x128xf32>
    %396 = vector.shape_cast %395 : vector<1x8x128xf32> to vector<8x128xf32>
    %397 = arith.truncf %391 : vector<8x32xf32> to vector<8x32xbf16>
    %cst_152 = arith.constant dense<0.000000e+00> : vector<8x128xf32>
    %398 = tpu.matmul %397, %222, %cst_152 {dimension_numbers = #tpu.dot_dimension_numbers<[1], [0], [0], [1], [0, 0, 1, 1], [], []>} : vector<8x32xbf16>, vector<32x128xbf16>, vector<8x128xf32> -> vector<8x128xf32>
    %399 = arith.addf %396, %398 : vector<8x128xf32>
    %400 = math.tanh %399 : vector<8x128xf32>
    %401 = arith.negf %399 : vector<8x128xf32>
    %402 = math.exp %401 : vector<8x128xf32>
    %cst_153 = arith.constant 1.000000e+00 : f32
    %403 = vector.broadcast %cst_153 : f32 to vector<8x128xf32>
    %404 = arith.addf %403, %402 : vector<8x128xf32>
    %405 = arith.divf %403, %404 : vector<8x128xf32>
    %406 = arith.select %5, %400, %405 : vector<8x128xi1>, vector<8x128xf32>
    %407 = vector.extract_strided_slice %406 {offsets = [0, 0], sizes = [8, 32], strides = [1, 1]} : vector<8x128xf32> to vector<8x32xf32>
    %408 = vector.extract_strided_slice %406 {offsets = [0, 32], sizes = [8, 32], strides = [1, 1]} : vector<8x128xf32> to vector<8x32xf32>
    %409 = vector.extract_strided_slice %406 {offsets = [0, 64], sizes = [8, 32], strides = [1, 1]} : vector<8x128xf32> to vector<8x32xf32>
    %410 = vector.extract_strided_slice %406 {offsets = [0, 96], sizes = [8, 32], strides = [1, 1]} : vector<8x128xf32> to vector<8x32xf32>
    %411 = arith.mulf %408, %389 : vector<8x32xf32>
    %412 = arith.mulf %407, %409 : vector<8x32xf32>
    %413 = arith.addf %411, %412 : vector<8x32xf32>
    %414 = math.tanh %413 : vector<8x32xf32>
    %415 = arith.mulf %410, %414 : vector<8x32xf32>
    %c7_154 = arith.constant 7 : index
    %c0_155 = arith.constant 0 : index
    %c0_156 = arith.constant 0 : index
    %416 = vector.load %arg12[%c7_154, %c0_155, %c0_156] : memref<8x8x32xf32, #tpu.memory_space<vmem>>, vector<1x8x32xf32>
    %417 = vector.shape_cast %416 : vector<1x8x32xf32> to vector<8x32xf32>
    %418 = vector.shape_cast %415 : vector<8x32xf32> to vector<1x8x32xf32>
    tpu.vector_store %arg12[%c7_154, %c0_155, %c0_156], %418 {strides = array<i32>} : memref<8x8x32xf32, #tpu.memory_space<vmem>>, vector<1x8x32xf32>,
    %c0_157 = arith.constant 0 : index
    %c0_158 = arith.constant 0 : index
    %c0_159 = arith.constant 0 : index
    %419 = vector.load %arg12[%c0_157, %c0_158, %c0_159] : memref<8x8x32xf32, #tpu.memory_space<vmem>>, vector<8x8x32xf32>
    %420 = vector.shape_cast %419 : vector<8x8x32xf32> to vector<64x32xf32>
    %421 = arith.truncf %420 : vector<64x32xf32> to vector<64x32xbf16>
    %c0_160 = arith.constant 0 : index
    %c0_161 = arith.constant 0 : index
    %422 = vector.load %arg9[%c0_160, %c0_161] : memref<32x128xbf16, #tpu.memory_space<vmem>>, vector<32x128xbf16>
    %cst_162 = arith.constant dense<0.000000e+00> : vector<64x128xf32>
    %423 = tpu.matmul %421, %422, %cst_162 {dimension_numbers = #tpu.dot_dimension_numbers<[1], [0], [0], [1], [0, 0, 1, 1], [], []>} : vector<64x32xbf16>, vector<32x128xbf16>, vector<64x128xf32> -> vector<64x128xf32>
    %c0_163 = arith.constant 0 : index
    %c0_164 = arith.constant 0 : index
    %424 = vector.load %arg10[%c0_163, %c0_164] : memref<1x128xf32, #tpu.memory_space<vmem>>, vector<1x128xf32>
    %425 = vector.broadcast %424 : vector<1x128xf32> to vector<64x128xf32>
    %426 = arith.addf %423, %425 : vector<64x128xf32>
    %c0_165 = arith.constant 0 : index
    %c0_166 = arith.constant 0 : index
    %427 = vector.load %arg11[%c0_165, %c0_166] : memref<64x128xf32, #tpu.memory_space<vmem>>, vector<64x128xf32>
    tpu.vector_store %arg11[%c0_165, %c0_166], %426 {strides = array<i32>} : memref<64x128xf32, #tpu.memory_space<vmem>>, vector<64x128xf32>,
    return
  }
}

</mosaic_0001>

<llo_original>
// kernel: seq2seq_forward.3
$region0: #{seq2seq_forward.3}
  #allocation0 [shape = 'u32[]', space=smem, size = 0x4, offset = 0x4, fixed_abs, tag = 'smem constant byte address 0x4 - core index']
  #allocation1 [shape = 'u32[144,128]{1,0:T(1,128)}', space=vmem, size = 0x12000, scoped, tag = 'internal scratch']
  #allocation2 [shape = 'f32[8,8,32]{2,1,0:T(8,128)}', space=vmem, size = 0x8000, scoped, tag = 'scratch operand']
  #allocation3 [shape = 'f32[8,8,128]{2,1,0:T(8,128)}', space=vmem, size = 0x8000, scoped, tag = 'scratch operand']
  %s0 = inlined_call_operand.vmem [shape: bf16[8,8,32], index: 0, kind: input, shape index: {}]
  %s1 = inlined_call_operand.vmem [shape: f32[2,8,32], index: 1, kind: input, shape index: {}]
  %s2 = inlined_call_operand.vmem [shape: f32[2,8,32], index: 2, kind: input, shape index: {}]
  %s3 = inlined_call_operand.vmem [shape: bf16[32,128], index: 3, kind: input, shape index: {}]
  %s4 = inlined_call_operand.vmem [shape: bf16[32,128], index: 4, kind: input, shape index: {}]
  %s5 = inlined_call_operand.vmem [shape: bf16[32,128], index: 5, kind: input, shape index: {}]
  %s6 = inlined_call_operand.vmem [shape: bf16[32,128], index: 6, kind: input, shape index: {}]
  %s7 = inlined_call_operand.vmem [shape: f32[1,128], index: 7, kind: input, shape index: {}]
  %s8 = inlined_call_operand.vmem [shape: f32[1,128], index: 8, kind: input, shape index: {}]
  %s9 = inlined_call_operand.vmem [shape: bf16[32,128], index: 9, kind: input, shape index: {}]
  %s10 = inlined_call_operand.vmem [shape: f32[1,128], index: 10, kind: input, shape index: {}]
  %s11 = inlined_call_operand.vmem [shape: f32[64,128], index: 11, kind: output, shape index: {}]
  %s12 = sld [smem:[#allocation0]]
  $region54: #{seq2seq_forward.3} parent=0
    _
  %s14 = ssub.s32 1, %s12
  %s15 = scalar_select 0, %s14, %s12
  // Predicated region
  $region2: #{seq2seq_forward.3} parent=0 // pred_check
    _
  $region3: #{seq2seq_forward.3} parent=0 // pred_check_branch
    %17 = sbr.rel (0) target = $region5
  $region4: #{seq2seq_forward.3} parent=0 // pred_region
    _
  $region5: #{seq2seq_forward.3} parent=0 // pred_fallthru
    _
  // Predicated region
  $region6: #{seq2seq_forward.3} parent=0 // pred_check
    _
  $region7: #{seq2seq_forward.3} parent=0 // pred_check_branch
    %19 = sbr.rel (0) target = $region9
  $region8: #{seq2seq_forward.3} parent=0 // pred_region
    _
  $region9: #{seq2seq_forward.3} parent=0 // pred_fallthru
    _
  // Predicated region
  $region10: #{seq2seq_forward.3} parent=0 // pred_check
    _
  $region11: #{seq2seq_forward.3} parent=0 // pred_check_branch
    %21 = sbr.rel (0) target = $region13
  $region12: #{seq2seq_forward.3} parent=0 // pred_region
    _
  $region13: #{seq2seq_forward.3} parent=0 // pred_fallthru
    _
  // Predicated region
  $region14: #{seq2seq_forward.3} parent=0 // pred_check
    _
  $region15: #{seq2seq_forward.3} parent=0 // pred_check_branch
    %23 = sbr.rel (0) target = $region17
  $region16: #{seq2seq_forward.3} parent=0 // pred_region
    _
  $region17: #{seq2seq_forward.3} parent=0 // pred_fallthru
    _
  // Predicated region
  $region18: #{seq2seq_forward.3} parent=0 // pred_check
    _
  $region19: #{seq2seq_forward.3} parent=0 // pred_check_branch
    %25 = sbr.rel (0) target = $region21
  $region20: #{seq2seq_forward.3} parent=0 // pred_region
    _
  $region21: #{seq2seq_forward.3} parent=0 // pred_fallthru
    _
  // Predicated region
  $region22: #{seq2seq_forward.3} parent=0 // pred_check
    _
  $region23: #{seq2seq_forward.3} parent=0 // pred_check_branch
    %27 = sbr.rel (0) target = $region25
  $region24: #{seq2seq_forward.3} parent=0 // pred_region
    _
  $region25: #{seq2seq_forward.3} parent=0 // pred_fallthru
    _
  // Predicated region
  $region26: #{seq2seq_forward.3} parent=0 // pred_check
    _
  $region27: #{seq2seq_forward.3} parent=0 // pred_check_branch
    %29 = sbr.rel (0) target = $region29
  $region28: #{seq2seq_forward.3} parent=0 // pred_region
    _
  $region29: #{seq2seq_forward.3} parent=0 // pred_fallthru
    _
  // Predicated region
  $region30: #{seq2seq_forward.3} parent=0 // pred_check
    _
  $region31: #{seq2seq_forward.3} parent=0 // pred_check_branch
    %31 = sbr.rel (0) target = $region33
  $region32: #{seq2seq_forward.3} parent=0 // pred_region
    _
  $region33: #{seq2seq_forward.3} parent=0 // pred_fallthru
    _
  // Predicated region
  $region34: #{seq2seq_forward.3} parent=0 // pred_check
    _
  $region35: #{seq2seq_forward.3} parent=0 // pred_check_branch
    %33 = sbr.rel (0) target = $region37
  $region36: #{seq2seq_forward.3} parent=0 // pred_region
    _
  $region37: #{seq2seq_forward.3} parent=0 // pred_fallthru
    _
  // Predicated region
  $region38: #{seq2seq_forward.3} parent=0 // pred_check
    _
  $region39: #{seq2seq_forward.3} parent=0 // pred_check_branch
    %35 = sbr.rel (0) target = $region41
  $region40: #{seq2seq_forward.3} parent=0 // pred_region
    _
  $region41: #{seq2seq_forward.3} parent=0 // pred_fallthru
    _
  // Predicated region
  $region42: #{seq2seq_forward.3} parent=0 // pred_check
    _
  $region43: #{seq2seq_forward.3} parent=0 // pred_check_branch
    %37 = sbr.rel (0) target = $region45
  $region44: #{seq2seq_forward.3} parent=0 // pred_region
    _
  $region45: #{seq2seq_forward.3} parent=0 // pred_fallthru
    _
  %v39 = vlaneseq
  %v40 = vand.u32 %v39, 127
  %vm41 = vcmp.ge.s32.totalorder %v40, 64
  %vm42 = vcmp.lt.s32.totalorder %v40, 96
  %vm43 = vmand %vm41, %vm42
  %v44 = vld [vmem:[%s0] sm:$0xf]
  %v45 = vld [vmem:[%s0 + $0x4] sm:$0xf]
  %v46 = vld [vmem:[%s0 + $0x8] sm:$0xf]
  %v47 = vld [vmem:[%s0 + $0xc] sm:$0xf]
  %v48 = vld [vmem:[%s0 + $0x10] sm:$0xf]
  %v49 = vld [vmem:[%s0 + $0x14] sm:$0xf]
  %v50 = vld [vmem:[%s0 + $0x18] sm:$0xf]
  %v51 = vld [vmem:[%s0 + $0x1c] sm:$0xf]
  %v52 = vld [vmem:[%s3] sm:$0xf]
  %v53 = vld [vmem:[%s3 + $0x4] sm:$0xf]
  %v54 = vld [vmem:[%s3 + $0x8] sm:$0xf]
  %v55 = vld [vmem:[%s3 + $0xc] sm:$0xf]
  %v56 = vld [vmem:[%s7] sm:$0x1]
  %v58 = vlaneseq
  %v59 = vshrl.u32 %v58, 7
  %v60 = vsub.s32 0, %v59
  %v61 = vrot.slane %v56, %v60
  %v71 = vunpack.c.l.b16 %v44
  %v72 = vunpack.c.l.b16 %v45
  %v73 = vunpack.c.l.b16 %v46
  %v74 = vunpack.c.l.b16 %v47
  %v75 = vunpack.c.l.b16 %v48
  %v76 = vunpack.c.l.b16 %v49
  %v77 = vunpack.c.l.b16 %v50
  %v78 = vunpack.c.l.b16 %v51
  %v79 = vpack.c.b16 %v72, %v71
  %v80 = vpack.c.b16 %v74, %v73
  %v81 = vpack.c.b16 %v76, %v75
  %v82 = vpack.c.b16 %v78, %v77
  %v87 = vunpack.c.l.b16 %v52
  %v88 = vunpack.c.l.b16 %v53
  %v89 = vunpack.c.l.b16 %v54
  %v90 = vunpack.c.l.b16 %v55
  %v91 = vpack.c.b16 %v88, %v87
  %v92 = vpack.c.b16 %v90, %v89
  %vm95 = vcmask 261120
  %v97 = vsel %vm95, %v79, 0
  %v100 = vsel %vm95, %v80, 0
  %v103 = vsel %vm95, %v81, 0
  %v106 = vsel %vm95, %v82, 0
  %108 = vmatprep.subr.bf16.mxu0 0
  %109 = vmatpush1.bf16.msra.mxu0 0
  %110 = vmatprep.subr.bf16.mxu0 0
  %111 = vmatpush1.bf16.msra.mxu0 0
  %112 = vmatprep.subr.bf16.mxu0 0
  %113 = vmatpush1.bf16.msra.mxu0 0
  %114 = vmatprep.subr.bf16.mxu0 0
  %115 = vmatpush1.bf16.msra.mxu0 0
  %116 = vmatprep.subr.bf16.mxu0 0
  %117 = vmatpush1.bf16.msra.mxu0 0
  %118 = vmatprep.subr.bf16.mxu0 0
  %119 = vmatpush1.bf16.msra.mxu0 0
  %120 = vmatprep.subr.bf16.mxu0 0
  %121 = vmatpush1.bf16.msra.mxu0 %v92
  %122 = vmatprep.subr.bf16.mxu0 0
  %123 = vmatpush1.bf16.msra.mxu0 %v91
  %124 = vmatprep.subr.bf16.mxu0 0
  %125 = vmatpush2.bf16.msra.mxu0 0
  %126 = vmatprep.subr.bf16.mxu0 0
  %127 = vmatpush2.bf16.msra.mxu0 0
  %128 = vmatprep.subr.bf16.mxu0 0
  %129 = vmatpush2.bf16.msra.mxu0 0
  %130 = vmatprep.subr.bf16.mxu0 0
  %131 = vmatpush2.bf16.msra.mxu0 0
  %132 = vmatprep.subr.bf16.mxu0 0
  %133 = vmatpush2.bf16.msra.mxu0 0
  %134 = vmatprep.subr.bf16.mxu0 0
  %135 = vmatpush2.bf16.msra.mxu0 0
  %136 = vmatprep.subr.bf16.mxu0 0
  %137 = vmatpush2.bf16.msra.mxu0 0
  %138 = vmatprep.subr.bf16.mxu0 0
  %139 = vmatpush2.bf16.msra.mxu0 0
  %140 = vmatprep.mubr.bf16.mxu0 0
  %141 = vmatmul.mubr.bf16.gmra.mxu0 %v97
  %v142 = vpop.f32.mrf.mxu0
  %v143 = vadd.f32 %v61, %v142
  %v144 = vpop.f32.mrf.mxu0
  %v145 = vpop.f32.mrf.mxu0
  %v146 = vadd.f32 %v61, %v145
  %v147 = vpop.f32.mrf.mxu0
  %148 = vmatprep.mubr.bf16.mxu0 0
  %149 = vmatmul.mubr.bf16.gmra.mxu0 %v100
  %v150 = vpop.f32.mrf.mxu0
  %v151 = vadd.f32 %v61, %v150
  %v152 = vpop.f32.mrf.mxu0
  %v153 = vpop.f32.mrf.mxu0
  %v154 = vadd.f32 %v61, %v153
  %v155 = vpop.f32.mrf.mxu0
  %156 = vmatprep.mubr.bf16.mxu0 0
  %157 = vmatmul.mubr.bf16.gmra.mxu0 %v103
  %v158 = vpop.f32.mrf.mxu0
  %v159 = vadd.f32 %v61, %v158
  %v160 = vpop.f32.mrf.mxu0
  %v161 = vpop.f32.mrf.mxu0
  %v162 = vadd.f32 %v61, %v161
  %v163 = vpop.f32.mrf.mxu0
  %164 = vmatprep.mubr.bf16.mxu0 0
  %165 = vmatmul.mubr.bf16.gmra.mxu0 %v106
  %v166 = vpop.f32.mrf.mxu0
  %v167 = vadd.f32 %v61, %v166
  %v168 = vpop.f32.mrf.mxu0
  %v169 = vpop.f32.mrf.mxu0
  %v170 = vadd.f32 %v61, %v169
  %v171 = vpop.f32.mrf.mxu0
  %172 = vdwg.mxu0
  %173 = vst [vmem:[#allocation3] sm:$0xff] %v143
  %174 = vst [vmem:[#allocation3 + $0x8] sm:$0xff] %v146
  %175 = vst [vmem:[#allocation3 + $0x10] sm:$0xff] %v151
  %176 = vst [vmem:[#allocation3 + $0x18] sm:$0xff] %v154
  %177 = vst [vmem:[#allocation3 + $0x20] sm:$0xff] %v159
  %178 = vst [vmem:[#allocation3 + $0x28] sm:$0xff] %v162
  %179 = vst [vmem:[#allocation3 + $0x30] sm:$0xff] %v167
  %180 = vst [vmem:[#allocation3 + $0x38] sm:$0xff] %v170
  %v181 = vld [vmem:[%s5] sm:$0xf]
  %v182 = vld [vmem:[%s5 + $0x4] sm:$0xf]
  %v183 = vld [vmem:[%s5 + $0x8] sm:$0xf]
  %v184 = vld [vmem:[%s5 + $0xc] sm:$0xf]
  %v185 = vld [vmem:[%s1] sm:$0xff]
  %v186 = vld [vmem:[%s2] sm:$0xff]
  %v187 = vld [vmem:[#allocation3] sm:$0xff]
  %v188 = vpack.c.bf16 %v185, %v185
  %v193 = vunpack.c.l.b16 %v181
  %v194 = vunpack.c.l.b16 %v182
  %v195 = vunpack.c.l.b16 %v183
  %v196 = vunpack.c.l.b16 %v184
  %v197 = vpack.c.b16 %v194, %v193
  %v198 = vpack.c.b16 %v196, %v195
  %v202 = vsel %vm95, %v188, 0
  %204 = vmatprep.subr.bf16.mxu0 0
  %205 = vmatpush1.bf16.msra.mxu0 0
  %206 = vmatprep.subr.bf16.mxu0 0
  %207 = vmatpush1.bf16.msra.mxu0 0
  %208 = vmatprep.subr.bf16.mxu0 0
  %209 = vmatpush1.bf16.msra.mxu0 0
  %210 = vmatprep.subr.bf16.mxu0 0
  %211 = vmatpush1.bf16.msra.mxu0 0
  %212 = vmatprep.subr.bf16.mxu0 0
  %213 = vmatpush1.bf16.msra.mxu0 0
  %214 = vmatprep.subr.bf16.mxu0 0
  %215 = vmatpush1.bf16.msra.mxu0 0
  %216 = vmatprep.subr.bf16.mxu0 0
  %217 = vmatpush1.bf16.msra.mxu0 %v198
  %218 = vmatprep.subr.bf16.mxu0 0
  %219 = vmatpush1.bf16.msra.mxu0 %v197
  %220 = vmatprep.subr.bf16.mxu0 0
  %221 = vmatpush2.bf16.msra.mxu0 0
  %222 = vmatprep.subr.bf16.mxu0 0
  %223 = vmatpush2.bf16.msra.mxu0 0
  %224 = vmatprep.subr.bf16.mxu0 0
  %225 = vmatpush2.bf16.msra.mxu0 0
  %226 = vmatprep.subr.bf16.mxu0 0
  %227 = vmatpush2.bf16.msra.mxu0 0
  %228 = vmatprep.subr.bf16.mxu0 0
  %229 = vmatpush2.bf16.msra.mxu0 0
  %230 = vmatprep.subr.bf16.mxu0 0
  %231 = vmatpush2.bf16.msra.mxu0 0
  %232 = vmatprep.subr.bf16.mxu0 0
  %233 = vmatpush2.bf16.msra.mxu0 0
  %234 = vmatprep.subr.bf16.mxu0 0
  %235 = vmatpush2.bf16.msra.mxu0 0
  %236 = vmatprep.mubr.bf16.mxu0 0
  %237 = vmatmul.mubr.bf16.gmra.mxu0 %v202
  %v238 = vpop.f32.mrf.mxu0
  %v239 = vadd.f32 0.0, %v238
  %v240 = vpop.f32.mrf.mxu0
  %v241 = vpop.f32.mrf.mxu0
  %v242 = vpop.f32.mrf.mxu0
  %243 = vdwg.mxu0
  %v244 = vadd.f32 %v187, %v239
  %v245 = vtanh.pop %v244
  %v246 = vxor.u32 %v244, 2147483648
  %v247 = vmul.f32 %v246, 1.442695
  %v248 = vpow.pop %v247
  %v249 = vadd.f32 %v248, 1.0
  %v250 = vrcp.pop %v249
  %v251 = vmul.f32 1.0, %v250
  %v252 = vsel %vm43, %v245, %v251
  %254 = vrot.lane.b32.xlu0 %v186, 32
  %v255 = vpop.permute.xlu0 %254
  %v257 = vmul.f32 %v252, %v255
  %259 = vrot.lane.b32.xlu0 %v252, 64
  %v260 = vpop.permute.xlu0 %259
  %v262 = vmul.f32 %v252, %v260
  %264 = vrot.lane.b32.xlu0 %v262, 32
  %v265 = vpop.permute.xlu0 %264
  %v267 = vadd.f32 %v257, %v265
  %v268 = vtanh.pop %v267
  %270 = vrot.lane.b32.xlu0 %v268, 64
  %v271 = vpop.permute.xlu0 %270
  %v273 = vmul.f32 %v252, %v271
  %275 = vrot.lane.b32.xlu0 %v273, 32
  %v276 = vpop.permute.xlu0 %275
  %278 = vst.msk [vmem:[#allocation2] sm:$0xff] %vm95, %v276
  %s279 = scalar_lea.vmem [#allocation3], 8
  %v280 = vld [vmem:[%s279] sm:$0xff]
  %v281 = vpack.c.bf16 %v273, %v273
  %283 = vrot.lane.b32.xlu0 %v281, 32
  %v284 = vpop.permute.xlu0 %283
  %v286 = vsel %vm95, %v284, 0
  %288 = vmatprep.subr.bf16.mxu0 0
  %289 = vmatpush1.bf16.msra.mxu0 0
  %290 = vmatprep.subr.bf16.mxu0 0
  %291 = vmatpush1.bf16.msra.mxu0 0
  %292 = vmatprep.subr.bf16.mxu0 0
  %293 = vmatpush1.bf16.msra.mxu0 0
  %294 = vmatprep.subr.bf16.mxu0 0
  %295 = vmatpush1.bf16.msra.mxu0 0
  %296 = vmatprep.subr.bf16.mxu0 0
  %297 = vmatpush1.bf16.msra.mxu0 0
  %298 = vmatprep.subr.bf16.mxu0 0
  %299 = vmatpush1.bf16.msra.mxu0 0
  %300 = vmatprep.subr.bf16.mxu0 0
  %301 = vmatpush1.bf16.msra.mxu0 %v198
  %302 = vmatprep.subr.bf16.mxu0 0
  %303 = vmatpush1.bf16.msra.mxu0 %v197
  %304 = vmatprep.subr.bf16.mxu0 0
  %305 = vmatpush2.bf16.msra.mxu0 0
  %306 = vmatprep.subr.bf16.mxu0 0
  %307 = vmatpush2.bf16.msra.mxu0 0
  %308 = vmatprep.subr.bf16.mxu0 0
  %309 = vmatpush2.bf16.msra.mxu0 0
  %310 = vmatprep.subr.bf16.mxu0 0
  %311 = vmatpush2.bf16.msra.mxu0 0
  %312 = vmatprep.subr.bf16.mxu0 0
  %313 = vmatpush2.bf16.msra.mxu0 0
  %314 = vmatprep.subr.bf16.mxu0 0
  %315 = vmatpush2.bf16.msra.mxu0 0
  %316 = vmatprep.subr.bf16.mxu0 0
  %317 = vmatpush2.bf16.msra.mxu0 0
  %318 = vmatprep.subr.bf16.mxu0 0
  %319 = vmatpush2.bf16.msra.mxu0 0
  %320 = vmatprep.mubr.bf16.mxu0 0
  %321 = vmatmul.mubr.bf16.gmra.mxu0 %v286
  %v322 = vpop.f32.mrf.mxu0
  %v323 = vadd.f32 0.0, %v322
  %v324 = vpop.f32.mrf.mxu0
  %v325 = vpop.f32.mrf.mxu0
  %v326 = vpop.f32.mrf.mxu0
  %327 = vdwg.mxu0
  %v328 = vadd.f32 %v280, %v323
  %v329 = vtanh.pop %v328
  %v330 = vxor.u32 %v328, 2147483648
  %v331 = vmul.f32 %v330, 1.442695
  %v332 = vpow.pop %v331
  %v333 = vadd.f32 %v332, 1.0
  %v334 = vrcp.pop %v333
  %v335 = vmul.f32 1.0, %v334
  %v336 = vsel %vm43, %v329, %v335
  %v337 = vmul.f32 %v336, %v267
  %339 = vrot.lane.b32.xlu0 %v336, 64
  %v340 = vpop.permute.xlu0 %339
  %v342 = vmul.f32 %v336, %v340
  %344 = vrot.lane.b32.xlu0 %v342, 32
  %v345 = vpop.permute.xlu0 %344
  %v347 = vadd.f32 %v337, %v345
  %v348 = vtanh.pop %v347
  %350 = vrot.lane.b32.xlu0 %v348, 64
  %v351 = vpop.permute.xlu0 %350
  %v353 = vmul.f32 %v336, %v351
  %355 = vrot.lane.b32.xlu0 %v353, 32
  %v356 = vpop.permute.xlu0 %355
  %s358 = scalar_lea.vmem [#allocation2], 8
  %359 = vst.msk [vmem:[%s358] sm:$0xff] %vm95, %v356
  %s360 = scalar_lea.vmem [#allocation3], 16
  %v361 = vld [vmem:[%s360] sm:$0xff]
  %v362 = vpack.c.bf16 %v353, %v353
  %364 = vrot.lane.b32.xlu0 %v362, 32
  %v365 = vpop.permute.xlu0 %364
  %v367 = vsel %vm95, %v365, 0
  %369 = vmatprep.subr.bf16.mxu0 0
  %370 = vmatpush1.bf16.msra.mxu0 0
  %371 = vmatprep.subr.bf16.mxu0 0
  %372 = vmatpush1.bf16.msra.mxu0 0
  %373 = vmatprep.subr.bf16.mxu0 0
  %374 = vmatpush1.bf16.msra.mxu0 0
  %375 = vmatprep.subr.bf16.mxu0 0
  %376 = vmatpush1.bf16.msra.mxu0 0
  %377 = vmatprep.subr.bf16.mxu0 0
  %378 = vmatpush1.bf16.msra.mxu0 0
  %379 = vmatprep.subr.bf16.mxu0 0
  %380 = vmatpush1.bf16.msra.mxu0 0
  %381 = vmatprep.subr.bf16.mxu0 0
  %382 = vmatpush1.bf16.msra.mxu0 %v198
  %383 = vmatprep.subr.bf16.mxu0 0
  %384 = vmatpush1.bf16.msra.mxu0 %v197
  %385 = vmatprep.subr.bf16.mxu0 0
  %386 = vmatpush2.bf16.msra.mxu0 0
  %387 = vmatprep.subr.bf16.mxu0 0
  %388 = vmatpush2.bf16.msra.mxu0 0
  %389 = vmatprep.subr.bf16.mxu0 0
  %390 = vmatpush2.bf16.msra.mxu0 0
  %391 = vmatprep.subr.bf16.mxu0 0
  %392 = vmatpush2.bf16.msra.mxu0 0
  %393 = vmatprep.subr.bf16.mxu0 0
  %394 = vmatpush2.bf16.msra.mxu0 0
  %395 = vmatprep.subr.bf16.mxu0 0
  %396 = vmatpush2.bf16.msra.mxu0 0
  %397 = vmatprep.subr.bf16.mxu0 0
  %398 = vmatpush2.bf16.msra.mxu0 0
  %399 = vmatprep.subr.bf16.mxu0 0
  %400 = vmatpush2.bf16.msra.mxu0 0
  %401 = vmatprep.mubr.bf16.mxu0 0
  %402 = vmatmul.mubr.bf16.gmra.mxu0 %v367
  %v403 = vpop.f32.mrf.mxu0
  %v404 = vadd.f32 0.0, %v403
  %v405 = vpop.f32.mrf.mxu0
  %v406 = vpop.f32.mrf.mxu0
  %v407 = vpop.f32.mrf.mxu0
  %408 = vdwg.mxu0
  %v409 = vadd.f32 %v361, %v404
  %v410 = vtanh.pop %v409
  %v411 = vxor.u32 %v409, 2147483648
  %v412 = vmul.f32 %v411, 1.442695
  %v413 = vpow.pop %v412
  %v414 = vadd.f32 %v413, 1.0
  %v415 = vrcp.pop %v414
  %v416 = vmul.f32 1.0, %v415
  %v417 = vsel %vm43, %v410, %v416
  %v418 = vmul.f32 %v417, %v347
  %420 = vrot.lane.b32.xlu0 %v417, 64
  %v421 = vpop.permute.xlu0 %420
  %v423 = vmul.f32 %v417, %v421
  %425 = vrot.lane.b32.xlu0 %v423, 32
  %v426 = vpop.permute.xlu0 %425
  %v428 = vadd.f32 %v418, %v426
  %v429 = vtanh.pop %v428
  %431 = vrot.lane.b32.xlu0 %v429, 64
  %v432 = vpop.permute.xlu0 %431
  %v434 = vmul.f32 %v417, %v432
  %436 = vrot.lane.b32.xlu0 %v434, 32
  %v437 = vpop.permute.xlu0 %436
  %s439 = scalar_lea.vmem [#allocation2], 16
  %440 = vst.msk [vmem:[%s439] sm:$0xff] %vm95, %v437
  %s441 = scalar_lea.vmem [#allocation3], 24
  %v442 = vld [vmem:[%s441] sm:$0xff]
  %v443 = vpack.c.bf16 %v434, %v434
  %445 = vrot.lane.b32.xlu0 %v443, 32
  %v446 = vpop.permute.xlu0 %445
  %v448 = vsel %vm95, %v446, 0
  %450 = vmatprep.subr.bf16.mxu0 0
  %451 = vmatpush1.bf16.msra.mxu0 0
  %452 = vmatprep.subr.bf16.mxu0 0
  %453 = vmatpush1.bf16.msra.mxu0 0
  %454 = vmatprep.subr.bf16.mxu0 0
  %455 = vmatpush1.bf16.msra.mxu0 0
  %456 = vmatprep.subr.bf16.mxu0 0
  %457 = vmatpush1.bf16.msra.mxu0 0
  %458 = vmatprep.subr.bf16.mxu0 0
  %459 = vmatpush1.bf16.msra.mxu0 0
  %460 = vmatprep.subr.bf16.mxu0 0
  %461 = vmatpush1.bf16.msra.mxu0 0
  %462 = vmatprep.subr.bf16.mxu0 0
  %463 = vmatpush1.bf16.msra.mxu0 %v198
  %464 = vmatprep.subr.bf16.mxu0 0
  %465 = vmatpush1.bf16.msra.mxu0 %v197
  %466 = vmatprep.subr.bf16.mxu0 0
  %467 = vmatpush2.bf16.msra.mxu0 0
  %468 = vmatprep.subr.bf16.mxu0 0
  %469 = vmatpush2.bf16.msra.mxu0 0
  %470 = vmatprep.subr.bf16.mxu0 0
  %471 = vmatpush2.bf16.msra.mxu0 0
  %472 = vmatprep.subr.bf16.mxu0 0
  %473 = vmatpush2.bf16.msra.mxu0 0
  %474 = vmatprep.subr.bf16.mxu0 0
  %475 = vmatpush2.bf16.msra.mxu0 0
  %476 = vmatprep.subr.bf16.mxu0 0
  %477 = vmatpush2.bf16.msra.mxu0 0
  %478 = vmatprep.subr.bf16.mxu0 0
  %479 = vmatpush2.bf16.msra.mxu0 0
  %480 = vmatprep.subr.bf16.mxu0 0
  %481 = vmatpush2.bf16.msra.mxu0 0
  %482 = vmatprep.mubr.bf16.mxu0 0
  %483 = vmatmul.mubr.bf16.gmra.mxu0 %v448
  %v484 = vpop.f32.mrf.mxu0
  %v485 = vadd.f32 0.0, %v484
  %v486 = vpop.f32.mrf.mxu0
  %v487 = vpop.f32.mrf.mxu0
  %v488 = vpop.f32.mrf.mxu0
  %489 = vdwg.mxu0
  %v490 = vadd.f32 %v442, %v485
  %v491 = vtanh.pop %v490
  %v492 = vxor.u32 %v490, 2147483648
  %v493 = vmul.f32 %v492, 1.442695
  %v494 = vpow.pop %v493
  %v495 = vadd.f32 %v494, 1.0
  %v496 = vrcp.pop %v495
  %v497 = vmul.f32 1.0, %v496
  %v498 = vsel %vm43, %v491, %v497
  %v499 = vmul.f32 %v498, %v428
  %501 = vrot.lane.b32.xlu0 %v498, 64
  %v502 = vpop.permute.xlu0 %501
  %v504 = vmul.f32 %v498, %v502
  %506 = vrot.lane.b32.xlu0 %v504, 32
  %v507 = vpop.permute.xlu0 %506
  %v509 = vadd.f32 %v499, %v507
  %v510 = vtanh.pop %v509
  %512 = vrot.lane.b32.xlu0 %v510, 64
  %v513 = vpop.permute.xlu0 %512
  %v515 = vmul.f32 %v498, %v513
  %517 = vrot.lane.b32.xlu0 %v515, 32
  %v518 = vpop.permute.xlu0 %517
  %s520 = scalar_lea.vmem [#allocation2], 24
  %521 = vst.msk [vmem:[%s520] sm:$0xff] %vm95, %v518
  %s522 = scalar_lea.vmem [#allocation3], 32
  %v523 = vld [vmem:[%s522] sm:$0xff]
  %v524 = vpack.c.bf16 %v515, %v515
  %526 = vrot.lane.b32.xlu0 %v524, 32
  %v527 = vpop.permute.xlu0 %526
  %v529 = vsel %vm95, %v527, 0
  %531 = vmatprep.subr.bf16.mxu0 0
  %532 = vmatpush1.bf16.msra.mxu0 0
  %533 = vmatprep.subr.bf16.mxu0 0
  %534 = vmatpush1.bf16.msra.mxu0 0
  %535 = vmatprep.subr.bf16.mxu0 0
  %536 = vmatpush1.bf16.msra.mxu0 0
  %537 = vmatprep.subr.bf16.mxu0 0
  %538 = vmatpush1.bf16.msra.mxu0 0
  %539 = vmatprep.subr.bf16.mxu0 0
  %540 = vmatpush1.bf16.msra.mxu0 0
  %541 = vmatprep.subr.bf16.mxu0 0
  %542 = vmatpush1.bf16.msra.mxu0 0
  %543 = vmatprep.subr.bf16.mxu0 0
  %544 = vmatpush1.bf16.msra.mxu0 %v198
  %545 = vmatprep.subr.bf16.mxu0 0
  %546 = vmatpush1.bf16.msra.mxu0 %v197
  %547 = vmatprep.subr.bf16.mxu0 0
  %548 = vmatpush2.bf16.msra.mxu0 0
  %549 = vmatprep.subr.bf16.mxu0 0
  %550 = vmatpush2.bf16.msra.mxu0 0
  %551 = vmatprep.subr.bf16.mxu0 0
  %552 = vmatpush2.bf16.msra.mxu0 0
  %553 = vmatprep.subr.bf16.mxu0 0
  %554 = vmatpush2.bf16.msra.mxu0 0
  %555 = vmatprep.subr.bf16.mxu0 0
  %556 = vmatpush2.bf16.msra.mxu0 0
  %557 = vmatprep.subr.bf16.mxu0 0
  %558 = vmatpush2.bf16.msra.mxu0 0
  %559 = vmatprep.subr.bf16.mxu0 0
  %560 = vmatpush2.bf16.msra.mxu0 0
  %561 = vmatprep.subr.bf16.mxu0 0
  %562 = vmatpush2.bf16.msra.mxu0 0
  %563 = vmatprep.mubr.bf16.mxu0 0
  %564 = vmatmul.mubr.bf16.gmra.mxu0 %v529
  %v565 = vpop.f32.mrf.mxu0
  %v566 = vadd.f32 0.0, %v565
  %v567 = vpop.f32.mrf.mxu0
  %v568 = vpop.f32.mrf.mxu0
  %v569 = vpop.f32.mrf.mxu0
  %570 = vdwg.mxu0
  %v571 = vadd.f32 %v523, %v566
  %v572 = vtanh.pop %v571
  %v573 = vxor.u32 %v571, 2147483648
  %v574 = vmul.f32 %v573, 1.442695
  %v575 = vpow.pop %v574
  %v576 = vadd.f32 %v575, 1.0
  %v577 = vrcp.pop %v576
  %v578 = vmul.f32 1.0, %v577
  %v579 = vsel %vm43, %v572, %v578
  %v580 = vmul.f32 %v579, %v509
  %582 = vrot.lane.b32.xlu0 %v579, 64
  %v583 = vpop.permute.xlu0 %582
  %v585 = vmul.f32 %v579, %v583
  %587 = vrot.lane.b32.xlu0 %v585, 32
  %v588 = vpop.permute.xlu0 %587
  %v590 = vadd.f32 %v580, %v588
  %v591 = vtanh.pop %v590
  %593 = vrot.lane.b32.xlu0 %v591, 64
  %v594 = vpop.permute.xlu0 %593
  %v596 = vmul.f32 %v579, %v594
  %598 = vrot.lane.b32.xlu0 %v596, 32
  %v599 = vpop.permute.xlu0 %598
  %s601 = scalar_lea.vmem [#allocation2], 32
  %602 = vst.msk [vmem:[%s601] sm:$0xff] %vm95, %v599
  %s603 = scalar_lea.vmem [#allocation3], 40
  %v604 = vld [vmem:[%s603] sm:$0xff]
  %v605 = vpack.c.bf16 %v596, %v596
  %607 = vrot.lane.b32.xlu0 %v605, 32
  %v608 = vpop.permute.xlu0 %607
  %v610 = vsel %vm95, %v608, 0
  %612 = vmatprep.subr.bf16.mxu0 0
  %613 = vmatpush1.bf16.msra.mxu0 0
  %614 = vmatprep.subr.bf16.mxu0 0
  %615 = vmatpush1.bf16.msra.mxu0 0
  %616 = vmatprep.subr.bf16.mxu0 0
  %617 = vmatpush1.bf16.msra.mxu0 0
  %618 = vmatprep.subr.bf16.mxu0 0
  %619 = vmatpush1.bf16.msra.mxu0 0
  %620 = vmatprep.subr.bf16.mxu0 0
  %621 = vmatpush1.bf16.msra.mxu0 0
  %622 = vmatprep.subr.bf16.mxu0 0
  %623 = vmatpush1.bf16.msra.mxu0 0
  %624 = vmatprep.subr.bf16.mxu0 0
  %625 = vmatpush1.bf16.msra.mxu0 %v198
  %626 = vmatprep.subr.bf16.mxu0 0
  %627 = vmatpush1.bf16.msra.mxu0 %v197
  %628 = vmatprep.subr.bf16.mxu0 0
  %629 = vmatpush2.bf16.msra.mxu0 0
  %630 = vmatprep.subr.bf16.mxu0 0
  %631 = vmatpush2.bf16.msra.mxu0 0
  %632 = vmatprep.subr.bf16.mxu0 0
  %633 = vmatpush2.bf16.msra.mxu0 0
  %634 = vmatprep.subr.bf16.mxu0 0
  %635 = vmatpush2.bf16.msra.mxu0 0
  %636 = vmatprep.subr.bf16.mxu0 0
  %637 = vmatpush2.bf16.msra.mxu0 0
  %638 = vmatprep.subr.bf16.mxu0 0
  %639 = vmatpush2.bf16.msra.mxu0 0
  %640 = vmatprep.subr.bf16.mxu0 0
  %641 = vmatpush2.bf16.msra.mxu0 0
  %642 = vmatprep.subr.bf16.mxu0 0
  %643 = vmatpush2.bf16.msra.mxu0 0
  %644 = vmatprep.mubr.bf16.mxu0 0
  %645 = vmatmul.mubr.bf16.gmra.mxu0 %v610
  %v646 = vpop.f32.mrf.mxu0
  %v647 = vadd.f32 0.0, %v646
  %v648 = vpop.f32.mrf.mxu0
  %v649 = vpop.f32.mrf.mxu0
  %v650 = vpop.f32.mrf.mxu0
  %651 = vdwg.mxu0
  %v652 = vadd.f32 %v604, %v647
  %v653 = vtanh.pop %v652
  %v654 = vxor.u32 %v652, 2147483648
  %v655 = vmul.f32 %v654, 1.442695
  %v656 = vpow.pop %v655
  %v657 = vadd.f32 %v656, 1.0
  %v658 = vrcp.pop %v657
  %v659 = vmul.f32 1.0, %v658
  %v660 = vsel %vm43, %v653, %v659
  %v661 = vmul.f32 %v660, %v590
  %663 = vrot.lane.b32.xlu0 %v660, 64
  %v664 = vpop.permute.xlu0 %663
  %v666 = vmul.f32 %v660, %v664
  %668 = vrot.lane.b32.xlu0 %v666, 32
  %v669 = vpop.permute.xlu0 %668
  %v671 = vadd.f32 %v661, %v669
  %v672 = vtanh.pop %v671
  %674 = vrot.lane.b32.xlu0 %v672, 64
  %v675 = vpop.permute.xlu0 %674
  %v677 = vmul.f32 %v660, %v675
  %679 = vrot.lane.b32.xlu0 %v677, 32
  %v680 = vpop.permute.xlu0 %679
  %s682 = scalar_lea.vmem [#allocation2], 40
  %683 = vst.msk [vmem:[%s682] sm:$0xff] %vm95, %v680
  %s684 = scalar_lea.vmem [#allocation3], 48
  %v685 = vld [vmem:[%s684] sm:$0xff]
  %v686 = vpack.c.bf16 %v677, %v677
  %688 = vrot.lane.b32.xlu0 %v686, 32
  %v689 = vpop.permute.xlu0 %688
  %v691 = vsel %vm95, %v689, 0
  %693 = vmatprep.subr.bf16.mxu0 0
  %694 = vmatpush1.bf16.msra.mxu0 0
  %695 = vmatprep.subr.bf16.mxu0 0
  %696 = vmatpush1.bf16.msra.mxu0 0
  %697 = vmatprep.subr.bf16.mxu0 0
  %698 = vmatpush1.bf16.msra.mxu0 0
  %699 = vmatprep.subr.bf16.mxu0 0
  %700 = vmatpush1.bf16.msra.mxu0 0
  %701 = vmatprep.subr.bf16.mxu0 0
  %702 = vmatpush1.bf16.msra.mxu0 0
  %703 = vmatprep.subr.bf16.mxu0 0
  %704 = vmatpush1.bf16.msra.mxu0 0
  %705 = vmatprep.subr.bf16.mxu0 0
  %706 = vmatpush1.bf16.msra.mxu0 %v198
  %707 = vmatprep.subr.bf16.mxu0 0
  %708 = vmatpush1.bf16.msra.mxu0 %v197
  %709 = vmatprep.subr.bf16.mxu0 0
  %710 = vmatpush2.bf16.msra.mxu0 0
  %711 = vmatprep.subr.bf16.mxu0 0
  %712 = vmatpush2.bf16.msra.mxu0 0
  %713 = vmatprep.subr.bf16.mxu0 0
  %714 = vmatpush2.bf16.msra.mxu0 0
  %715 = vmatprep.subr.bf16.mxu0 0
  %716 = vmatpush2.bf16.msra.mxu0 0
  %717 = vmatprep.subr.bf16.mxu0 0
  %718 = vmatpush2.bf16.msra.mxu0 0
  %719 = vmatprep.subr.bf16.mxu0 0
  %720 = vmatpush2.bf16.msra.mxu0 0
  %721 = vmatprep.subr.bf16.mxu0 0
  %722 = vmatpush2.bf16.msra.mxu0 0
  %723 = vmatprep.subr.bf16.mxu0 0
  %724 = vmatpush2.bf16.msra.mxu0 0
  %725 = vmatprep.mubr.bf16.mxu0 0
  %726 = vmatmul.mubr.bf16.gmra.mxu0 %v691
  %v727 = vpop.f32.mrf.mxu0
  %v728 = vadd.f32 0.0, %v727
  %v729 = vpop.f32.mrf.mxu0
  %v730 = vpop.f32.mrf.mxu0
  %v731 = vpop.f32.mrf.mxu0
  %732 = vdwg.mxu0
  %v733 = vadd.f32 %v685, %v728
  %v734 = vtanh.pop %v733
  %v735 = vxor.u32 %v733, 2147483648
  %v736 = vmul.f32 %v735, 1.442695
  %v737 = vpow.pop %v736
  %v738 = vadd.f32 %v737, 1.0
  %v739 = vrcp.pop %v738
  %v740 = vmul.f32 1.0, %v739
  %v741 = vsel %vm43, %v734, %v740
  %v742 = vmul.f32 %v741, %v671
  %744 = vrot.lane.b32.xlu0 %v741, 64
  %v745 = vpop.permute.xlu0 %744
  %v747 = vmul.f32 %v741, %v745
  %749 = vrot.lane.b32.xlu0 %v747, 32
  %v750 = vpop.permute.xlu0 %749
  %v752 = vadd.f32 %v742, %v750
  %v753 = vtanh.pop %v752
  %755 = vrot.lane.b32.xlu0 %v753, 64
  %v756 = vpop.permute.xlu0 %755
  %v758 = vmul.f32 %v741, %v756
  %760 = vrot.lane.b32.xlu0 %v758, 32
  %v761 = vpop.permute.xlu0 %760
  %s763 = scalar_lea.vmem [#allocation2], 48
  %764 = vst.msk [vmem:[%s763] sm:$0xff] %vm95, %v761
  %s765 = scalar_lea.vmem [#allocation3], 56
  %v766 = vld [vmem:[%s765] sm:$0xff]
  %v767 = vpack.c.bf16 %v758, %v758
  %769 = vrot.lane.b32.xlu0 %v767, 32
  %v770 = vpop.permute.xlu0 %769
  %v772 = vsel %vm95, %v770, 0
  %774 = vmatprep.subr.bf16.mxu0 0
  %775 = vmatpush1.bf16.msra.mxu0 0
  %776 = vmatprep.subr.bf16.mxu0 0
  %777 = vmatpush1.bf16.msra.mxu0 0
  %778 = vmatprep.subr.bf16.mxu0 0
  %779 = vmatpush1.bf16.msra.mxu0 0
  %780 = vmatprep.subr.bf16.mxu0 0
  %781 = vmatpush1.bf16.msra.mxu0 0
  %782 = vmatprep.subr.bf16.mxu0 0
  %783 = vmatpush1.bf16.msra.mxu0 0
  %784 = vmatprep.subr.bf16.mxu0 0
  %785 = vmatpush1.bf16.msra.mxu0 0
  %786 = vmatprep.subr.bf16.mxu0 0
  %787 = vmatpush1.bf16.msra.mxu0 %v198
  %788 = vmatprep.subr.bf16.mxu0 0
  %789 = vmatpush1.bf16.msra.mxu0 %v197
  %790 = vmatprep.subr.bf16.mxu0 0
  %791 = vmatpush2.bf16.msra.mxu0 0
  %792 = vmatprep.subr.bf16.mxu0 0
  %793 = vmatpush2.bf16.msra.mxu0 0
  %794 = vmatprep.subr.bf16.mxu0 0
  %795 = vmatpush2.bf16.msra.mxu0 0
  %796 = vmatprep.subr.bf16.mxu0 0
  %797 = vmatpush2.bf16.msra.mxu0 0
  %798 = vmatprep.subr.bf16.mxu0 0
  %799 = vmatpush2.bf16.msra.mxu0 0
  %800 = vmatprep.subr.bf16.mxu0 0
  %801 = vmatpush2.bf16.msra.mxu0 0
  %802 = vmatprep.subr.bf16.mxu0 0
  %803 = vmatpush2.bf16.msra.mxu0 0
  %804 = vmatprep.subr.bf16.mxu0 0
  %805 = vmatpush2.bf16.msra.mxu0 0
  %806 = vmatprep.mubr.bf16.mxu0 0
  %807 = vmatmul.mubr.bf16.gmra.mxu0 %v772
  %v808 = vpop.f32.mrf.mxu0
  %v809 = vadd.f32 0.0, %v808
  %v810 = vpop.f32.mrf.mxu0
  %v811 = vpop.f32.mrf.mxu0
  %v812 = vpop.f32.mrf.mxu0
  %813 = vdwg.mxu0
  %v814 = vadd.f32 %v766, %v809
  %v815 = vtanh.pop %v814
  %v816 = vxor.u32 %v814, 2147483648
  %v817 = vmul.f32 %v816, 1.442695
  %v818 = vpow.pop %v817
  %v819 = vadd.f32 %v818, 1.0
  %v820 = vrcp.pop %v819
  %v821 = vmul.f32 1.0, %v820
  %v822 = vsel %vm43, %v815, %v821
  %v823 = vmul.f32 %v822, %v752
  %825 = vrot.lane.b32.xlu0 %v822, 64
  %v826 = vpop.permute.xlu0 %825
  %v828 = vmul.f32 %v822, %v826
  %830 = vrot.lane.b32.xlu0 %v828, 32
  %v831 = vpop.permute.xlu0 %830
  %v833 = vadd.f32 %v823, %v831
  %v834 = vtanh.pop %v833
  %836 = vrot.lane.b32.xlu0 %v834, 64
  %v837 = vpop.permute.xlu0 %836
  %v839 = vmul.f32 %v822, %v837
  %841 = vrot.lane.b32.xlu0 %v839, 32
  %v842 = vpop.permute.xlu0 %841
  %s844 = scalar_lea.vmem [#allocation2], 56
  %845 = vst.msk [vmem:[%s844] sm:$0xff] %vm95, %v842
  %v846 = vld [vmem:[#allocation2] sm:$0xff]
  %v847 = vld [vmem:[#allocation2 + $0x8] sm:$0xff]
  %v848 = vld [vmem:[#allocation2 + $0x10] sm:$0xff]
  %v849 = vld [vmem:[#allocation2 + $0x18] sm:$0xff]
  %v850 = vld [vmem:[#allocation2 + $0x20] sm:$0xff]
  %v851 = vld [vmem:[#allocation2 + $0x28] sm:$0xff]
  %v852 = vld [vmem:[#allocation2 + $0x30] sm:$0xff]
  %v853 = vld [vmem:[#allocation2 + $0x38] sm:$0xff]
  %v854 = vpack.c.bf16 %v847, %v846
  %v855 = vpack.c.bf16 %v849, %v848
  %v856 = vpack.c.bf16 %v851, %v850
  %v857 = vpack.c.bf16 %v853, %v852
  %v858 = vld [vmem:[%s4] sm:$0xf]
  %v859 = vld [vmem:[%s4 + $0x4] sm:$0xf]
  %v860 = vld [vmem:[%s4 + $0x8] sm:$0xf]
  %v861 = vld [vmem:[%s4 + $0xc] sm:$0xf]
  %v862 = vld [vmem:[%s8] sm:$0x1]
  %v864 = vlaneseq
  %v865 = vshrl.u32 %v864, 7
  %v866 = vsub.s32 0, %v865
  %v867 = vrot.slane %v862, %v866
  %v873 = vunpack.c.l.b16 %v858
  %v874 = vunpack.c.l.b16 %v859
  %v875 = vunpack.c.l.b16 %v860
  %v876 = vunpack.c.l.b16 %v861
  %v877 = vpack.c.b16 %v874, %v873
  %v878 = vpack.c.b16 %v876, %v875
  %v882 = vsel %vm95, %v854, 0
  %v885 = vsel %vm95, %v855, 0
  %v888 = vsel %vm95, %v856, 0
  %v891 = vsel %vm95, %v857, 0
  %893 = vmatprep.subr.bf16.mxu0 0
  %894 = vmatpush1.bf16.msra.mxu0 0
  %895 = vmatprep.subr.bf16.mxu0 0
  %896 = vmatpush1.bf16.msra.mxu0 0
  %897 = vmatprep.subr.bf16.mxu0 0
  %898 = vmatpush1.bf16.msra.mxu0 0
  %899 = vmatprep.subr.bf16.mxu0 0
  %900 = vmatpush1.bf16.msra.mxu0 0
  %901 = vmatprep.subr.bf16.mxu0 0
  %902 = vmatpush1.bf16.msra.mxu0 0
  %903 = vmatprep.subr.bf16.mxu0 0
  %904 = vmatpush1.bf16.msra.mxu0 0
  %905 = vmatprep.subr.bf16.mxu0 0
  %906 = vmatpush1.bf16.msra.mxu0 %v878
  %907 = vmatprep.subr.bf16.mxu0 0
  %908 = vmatpush1.bf16.msra.mxu0 %v877
  %909 = vmatprep.subr.bf16.mxu0 0
  %910 = vmatpush2.bf16.msra.mxu0 0
  %911 = vmatprep.subr.bf16.mxu0 0
  %912 = vmatpush2.bf16.msra.mxu0 0
  %913 = vmatprep.subr.bf16.mxu0 0
  %914 = vmatpush2.bf16.msra.mxu0 0
  %915 = vmatprep.subr.bf16.mxu0 0
  %916 = vmatpush2.bf16.msra.mxu0 0
  %917 = vmatprep.subr.bf16.mxu0 0
  %918 = vmatpush2.bf16.msra.mxu0 0
  %919 = vmatprep.subr.bf16.mxu0 0
  %920 = vmatpush2.bf16.msra.mxu0 0
  %921 = vmatprep.subr.bf16.mxu0 0
  %922 = vmatpush2.bf16.msra.mxu0 0
  %923 = vmatprep.subr.bf16.mxu0 0
  %924 = vmatpush2.bf16.msra.mxu0 0
  %925 = vmatprep.mubr.bf16.mxu0 0
  %926 = vmatmul.mubr.bf16.gmra.mxu0 %v882
  %v927 = vpop.f32.mrf.mxu0
  %v928 = vadd.f32 %v867, %v927
  %v929 = vpop.f32.mrf.mxu0
  %v930 = vpop.f32.mrf.mxu0
  %v931 = vadd.f32 %v867, %v930
  %v932 = vpop.f32.mrf.mxu0
  %933 = vmatprep.mubr.bf16.mxu0 0
  %934 = vmatmul.mubr.bf16.gmra.mxu0 %v885
  %v935 = vpop.f32.mrf.mxu0
  %v936 = vadd.f32 %v867, %v935
  %v937 = vpop.f32.mrf.mxu0
  %v938 = vpop.f32.mrf.mxu0
  %v939 = vadd.f32 %v867, %v938
  %v940 = vpop.f32.mrf.mxu0
  %941 = vmatprep.mubr.bf16.mxu0 0
  %942 = vmatmul.mubr.bf16.gmra.mxu0 %v888
  %v943 = vpop.f32.mrf.mxu0
  %v944 = vadd.f32 %v867, %v943
  %v945 = vpop.f32.mrf.mxu0
  %v946 = vpop.f32.mrf.mxu0
  %v947 = vadd.f32 %v867, %v946
  %v948 = vpop.f32.mrf.mxu0
  %949 = vmatprep.mubr.bf16.mxu0 0
  %950 = vmatmul.mubr.bf16.gmra.mxu0 %v891
  %v951 = vpop.f32.mrf.mxu0
  %v952 = vadd.f32 %v867, %v951
  %v953 = vpop.f32.mrf.mxu0
  %v954 = vpop.f32.mrf.mxu0
  %v955 = vadd.f32 %v867, %v954
  %v956 = vpop.f32.mrf.mxu0
  %957 = vdwg.mxu0
  %958 = vst [vmem:[#allocation3] sm:$0xff] %v928
  %959 = vst [vmem:[#allocation3 + $0x8] sm:$0xff] %v931
  %960 = vst [vmem:[#allocation3 + $0x10] sm:$0xff] %v936
  %961 = vst [vmem:[#allocation3 + $0x18] sm:$0xff] %v939
  %962 = vst [vmem:[#allocation3 + $0x20] sm:$0xff] %v944
  %963 = vst [vmem:[#allocation3 + $0x28] sm:$0xff] %v947
  %964 = vst [vmem:[#allocation3 + $0x30] sm:$0xff] %v952
  %965 = vst [vmem:[#allocation3 + $0x38] sm:$0xff] %v955
  %v966 = vld [vmem:[%s6] sm:$0xf]
  %v967 = vld [vmem:[%s6 + $0x4] sm:$0xf]
  %v968 = vld [vmem:[%s6 + $0x8] sm:$0xf]
  %v969 = vld [vmem:[%s6 + $0xc] sm:$0xf]
  %s970 = scalar_lea.vmem %s1, 8
  %v971 = vld [vmem:[%s970] sm:$0xff]
  %s972 = scalar_lea.vmem %s2, 8
  %v973 = vld [vmem:[%s972] sm:$0xff]
  %v974 = vld [vmem:[#allocation3] sm:$0xff]
  %v975 = vpack.c.bf16 %v971, %v971
  %v980 = vunpack.c.l.b16 %v966
  %v981 = vunpack.c.l.b16 %v967
  %v982 = vunpack.c.l.b16 %v968
  %v983 = vunpack.c.l.b16 %v969
  %v984 = vpack.c.b16 %v981, %v980
  %v985 = vpack.c.b16 %v983, %v982
  %v989 = vsel %vm95, %v975, 0
  %991 = vmatprep.subr.bf16.mxu0 0
  %992 = vmatpush1.bf16.msra.mxu0 0
  %993 = vmatprep.subr.bf16.mxu0 0
  %994 = vmatpush1.bf16.msra.mxu0 0
  %995 = vmatprep.subr.bf16.mxu0 0
  %996 = vmatpush1.bf16.msra.mxu0 0
  %997 = vmatprep.subr.bf16.mxu0 0
  %998 = vmatpush1.bf16.msra.mxu0 0
  %999 = vmatprep.subr.bf16.mxu0 0
  %1000 = vmatpush1.bf16.msra.mxu0 0
  %1001 = vmatprep.subr.bf16.mxu0 0
  %1002 = vmatpush1.bf16.msra.mxu0 0
  %1003 = vmatprep.subr.bf16.mxu0 0
  %1004 = vmatpush1.bf16.msra.mxu0 %v985
  %1005 = vmatprep.subr.bf16.mxu0 0
  %1006 = vmatpush1.bf16.msra.mxu0 %v984
  %1007 = vmatprep.subr.bf16.mxu0 0
  %1008 = vmatpush2.bf16.msra.mxu0 0
  %1009 = vmatprep.subr.bf16.mxu0 0
  %1010 = vmatpush2.bf16.msra.mxu0 0
  %1011 = vmatprep.subr.bf16.mxu0 0
  %1012 = vmatpush2.bf16.msra.mxu0 0
  %1013 = vmatprep.subr.bf16.mxu0 0
  %1014 = vmatpush2.bf16.msra.mxu0 0
  %1015 = vmatprep.subr.bf16.mxu0 0
  %1016 = vmatpush2.bf16.msra.mxu0 0
  %1017 = vmatprep.subr.bf16.mxu0 0
  %1018 = vmatpush2.bf16.msra.mxu0 0
  %1019 = vmatprep.subr.bf16.mxu0 0
  %1020 = vmatpush2.bf16.msra.mxu0 0
  %1021 = vmatprep.subr.bf16.mxu0 0
  %1022 = vmatpush2.bf16.msra.mxu0 0
  %1023 = vmatprep.mubr.bf16.mxu0 0
  %1024 = vmatmul.mubr.bf16.gmra.mxu0 %v989
  %v1025 = vpop.f32.mrf.mxu0
  %v1026 = vadd.f32 0.0, %v1025
  %v1027 = vpop.f32.mrf.mxu0
  %v1028 = vpop.f32.mrf.mxu0
  %v1029 = vpop.f32.mrf.mxu0
  %1030 = vdwg.mxu0
  %v1031 = vadd.f32 %v974, %v1026
  %v1032 = vtanh.pop %v1031
  %v1033 = vxor.u32 %v1031, 2147483648
  %v1034 = vmul.f32 %v1033, 1.442695
  %v1035 = vpow.pop %v1034
  %v1036 = vadd.f32 %v1035, 1.0
  %v1037 = vrcp.pop %v1036
  %v1038 = vmul.f32 1.0, %v1037
  %v1039 = vsel %vm43, %v1032, %v1038
  %1041 = vrot.lane.b32.xlu0 %v973, 32
  %v1042 = vpop.permute.xlu0 %1041
  %v1044 = vmul.f32 %v1039, %v1042
  %1046 = vrot.lane.b32.xlu0 %v1039, 64
  %v1047 = vpop.permute.xlu0 %1046
  %v1049 = vmul.f32 %v1039, %v1047
  %1051 = vrot.lane.b32.xlu0 %v1049, 32
  %v1052 = vpop.permute.xlu0 %1051
  %v1054 = vadd.f32 %v1044, %v1052
  %v1055 = vtanh.pop %v1054
  %1057 = vrot.lane.b32.xlu0 %v1055, 64
  %v1058 = vpop.permute.xlu0 %1057
  %v1060 = vmul.f32 %v1039, %v1058
  %1062 = vrot.lane.b32.xlu0 %v1060, 32
  %v1063 = vpop.permute.xlu0 %1062
  %1065 = vst.msk [vmem:[#allocation2] sm:$0xff] %vm95, %v1063
  %v1066 = vld [vmem:[%s279] sm:$0xff]
  %v1067 = vpack.c.bf16 %v1060, %v1060
  %1069 = vrot.lane.b32.xlu0 %v1067, 32
  %v1070 = vpop.permute.xlu0 %1069
  %v1072 = vsel %vm95, %v1070, 0
  %1074 = vmatprep.subr.bf16.mxu0 0
  %1075 = vmatpush1.bf16.msra.mxu0 0
  %1076 = vmatprep.subr.bf16.mxu0 0
  %1077 = vmatpush1.bf16.msra.mxu0 0
  %1078 = vmatprep.subr.bf16.mxu0 0
  %1079 = vmatpush1.bf16.msra.mxu0 0
  %1080 = vmatprep.subr.bf16.mxu0 0
  %1081 = vmatpush1.bf16.msra.mxu0 0
  %1082 = vmatprep.subr.bf16.mxu0 0
  %1083 = vmatpush1.bf16.msra.mxu0 0
  %1084 = vmatprep.subr.bf16.mxu0 0
  %1085 = vmatpush1.bf16.msra.mxu0 0
  %1086 = vmatprep.subr.bf16.mxu0 0
  %1087 = vmatpush1.bf16.msra.mxu0 %v985
  %1088 = vmatprep.subr.bf16.mxu0 0
  %1089 = vmatpush1.bf16.msra.mxu0 %v984
  %1090 = vmatprep.subr.bf16.mxu0 0
  %1091 = vmatpush2.bf16.msra.mxu0 0
  %1092 = vmatprep.subr.bf16.mxu0 0
  %1093 = vmatpush2.bf16.msra.mxu0 0
  %1094 = vmatprep.subr.bf16.mxu0 0
  %1095 = vmatpush2.bf16.msra.mxu0 0
  %1096 = vmatprep.subr.bf16.mxu0 0
  %1097 = vmatpush2.bf16.msra.mxu0 0
  %1098 = vmatprep.subr.bf16.mxu0 0
  %1099 = vmatpush2.bf16.msra.mxu0 0
  %1100 = vmatprep.subr.bf16.mxu0 0
  %1101 = vmatpush2.bf16.msra.mxu0 0
  %1102 = vmatprep.subr.bf16.mxu0 0
  %1103 = vmatpush2.bf16.msra.mxu0 0
  %1104 = vmatprep.subr.bf16.mxu0 0
  %1105 = vmatpush2.bf16.msra.mxu0 0
  %1106 = vmatprep.mubr.bf16.mxu0 0
  %1107 = vmatmul.mubr.bf16.gmra.mxu0 %v1072
  %v1108 = vpop.f32.mrf.mxu0
  %v1109 = vadd.f32 0.0, %v1108
  %v1110 = vpop.f32.mrf.mxu0
  %v1111 = vpop.f32.mrf.mxu0
  %v1112 = vpop.f32.mrf.mxu0
  %1113 = vdwg.mxu0
  %v1114 = vadd.f32 %v1066, %v1109
  %v1115 = vtanh.pop %v1114
  %v1116 = vxor.u32 %v1114, 2147483648
  %v1117 = vmul.f32 %v1116, 1.442695
  %v1118 = vpow.pop %v1117
  %v1119 = vadd.f32 %v1118, 1.0
  %v1120 = vrcp.pop %v1119
  %v1121 = vmul.f32 1.0, %v1120
  %v1122 = vsel %vm43, %v1115, %v1121
  %v1123 = vmul.f32 %v1122, %v1054
  %1125 = vrot.lane.b32.xlu0 %v1122, 64
  %v1126 = vpop.permute.xlu0 %1125
  %v1128 = vmul.f32 %v1122, %v1126
  %1130 = vrot.lane.b32.xlu0 %v1128, 32
  %v1131 = vpop.permute.xlu0 %1130
  %v1133 = vadd.f32 %v1123, %v1131
  %v1134 = vtanh.pop %v1133
  %1136 = vrot.lane.b32.xlu0 %v1134, 64
  %v1137 = vpop.permute.xlu0 %1136
  %v1139 = vmul.f32 %v1122, %v1137
  %1141 = vrot.lane.b32.xlu0 %v1139, 32
  %v1142 = vpop.permute.xlu0 %1141
  %1144 = vst.msk [vmem:[%s358] sm:$0xff] %vm95, %v1142
  %v1145 = vld [vmem:[%s360] sm:$0xff]
  %v1146 = vpack.c.bf16 %v1139, %v1139
  %1148 = vrot.lane.b32.xlu0 %v1146, 32
  %v1149 = vpop.permute.xlu0 %1148
  %v1151 = vsel %vm95, %v1149, 0
  %1153 = vmatprep.subr.bf16.mxu0 0
  %1154 = vmatpush1.bf16.msra.mxu0 0
  %1155 = vmatprep.subr.bf16.mxu0 0
  %1156 = vmatpush1.bf16.msra.mxu0 0
  %1157 = vmatprep.subr.bf16.mxu0 0
  %1158 = vmatpush1.bf16.msra.mxu0 0
  %1159 = vmatprep.subr.bf16.mxu0 0
  %1160 = vmatpush1.bf16.msra.mxu0 0
  %1161 = vmatprep.subr.bf16.mxu0 0
  %1162 = vmatpush1.bf16.msra.mxu0 0
  %1163 = vmatprep.subr.bf16.mxu0 0
  %1164 = vmatpush1.bf16.msra.mxu0 0
  %1165 = vmatprep.subr.bf16.mxu0 0
  %1166 = vmatpush1.bf16.msra.mxu0 %v985
  %1167 = vmatprep.subr.bf16.mxu0 0
  %1168 = vmatpush1.bf16.msra.mxu0 %v984
  %1169 = vmatprep.subr.bf16.mxu0 0
  %1170 = vmatpush2.bf16.msra.mxu0 0
  %1171 = vmatprep.subr.bf16.mxu0 0
  %1172 = vmatpush2.bf16.msra.mxu0 0
  %1173 = vmatprep.subr.bf16.mxu0 0
  %1174 = vmatpush2.bf16.msra.mxu0 0
  %1175 = vmatprep.subr.bf16.mxu0 0
  %1176 = vmatpush2.bf16.msra.mxu0 0
  %1177 = vmatprep.subr.bf16.mxu0 0
  %1178 = vmatpush2.bf16.msra.mxu0 0
  %1179 = vmatprep.subr.bf16.mxu0 0
  %1180 = vmatpush2.bf16.msra.mxu0 0
  %1181 = vmatprep.subr.bf16.mxu0 0
  %1182 = vmatpush2.bf16.msra.mxu0 0
  %1183 = vmatprep.subr.bf16.mxu0 0
  %1184 = vmatpush2.bf16.msra.mxu0 0
  %1185 = vmatprep.mubr.bf16.mxu0 0
  %1186 = vmatmul.mubr.bf16.gmra.mxu0 %v1151
  %v1187 = vpop.f32.mrf.mxu0
  %v1188 = vadd.f32 0.0, %v1187
  %v1189 = vpop.f32.mrf.mxu0
  %v1190 = vpop.f32.mrf.mxu0
  %v1191 = vpop.f32.mrf.mxu0
  %1192 = vdwg.mxu0
  %v1193 = vadd.f32 %v1145, %v1188
  %v1194 = vtanh.pop %v1193
  %v1195 = vxor.u32 %v1193, 2147483648
  %v1196 = vmul.f32 %v1195, 1.442695
  %v1197 = vpow.pop %v1196
  %v1198 = vadd.f32 %v1197, 1.0
  %v1199 = vrcp.pop %v1198
  %v1200 = vmul.f32 1.0, %v1199
  %v1201 = vsel %vm43, %v1194, %v1200
  %v1202 = vmul.f32 %v1201, %v1133
  %1204 = vrot.lane.b32.xlu0 %v1201, 64
  %v1205 = vpop.permute.xlu0 %1204
  %v1207 = vmul.f32 %v1201, %v1205
  %1209 = vrot.lane.b32.xlu0 %v1207, 32
  %v1210 = vpop.permute.xlu0 %1209
  %v1212 = vadd.f32 %v1202, %v1210
  %v1213 = vtanh.pop %v1212
  %1215 = vrot.lane.b32.xlu0 %v1213, 64
  %v1216 = vpop.permute.xlu0 %1215
  %v1218 = vmul.f32 %v1201, %v1216
  %1220 = vrot.lane.b32.xlu0 %v1218, 32
  %v1221 = vpop.permute.xlu0 %1220
  %1223 = vst.msk [vmem:[%s439] sm:$0xff] %vm95, %v1221
  %v1224 = vld [vmem:[%s441] sm:$0xff]
  %v1225 = vpack.c.bf16 %v1218, %v1218
  %1227 = vrot.lane.b32.xlu0 %v1225, 32
  %v1228 = vpop.permute.xlu0 %1227
  %v1230 = vsel %vm95, %v1228, 0
  %1232 = vmatprep.subr.bf16.mxu0 0
  %1233 = vmatpush1.bf16.msra.mxu0 0
  %1234 = vmatprep.subr.bf16.mxu0 0
  %1235 = vmatpush1.bf16.msra.mxu0 0
  %1236 = vmatprep.subr.bf16.mxu0 0
  %1237 = vmatpush1.bf16.msra.mxu0 0
  %1238 = vmatprep.subr.bf16.mxu0 0
  %1239 = vmatpush1.bf16.msra.mxu0 0
  %1240 = vmatprep.subr.bf16.mxu0 0
  %1241 = vmatpush1.bf16.msra.mxu0 0
  %1242 = vmatprep.subr.bf16.mxu0 0
  %1243 = vmatpush1.bf16.msra.mxu0 0
  %1244 = vmatprep.subr.bf16.mxu0 0
  %1245 = vmatpush1.bf16.msra.mxu0 %v985
  %1246 = vmatprep.subr.bf16.mxu0 0
  %1247 = vmatpush1.bf16.msra.mxu0 %v984
  %1248 = vmatprep.subr.bf16.mxu0 0
  %1249 = vmatpush2.bf16.msra.mxu0 0
  %1250 = vmatprep.subr.bf16.mxu0 0
  %1251 = vmatpush2.bf16.msra.mxu0 0
  %1252 = vmatprep.subr.bf16.mxu0 0
  %1253 = vmatpush2.bf16.msra.mxu0 0
  %1254 = vmatprep.subr.bf16.mxu0 0
  %1255 = vmatpush2.bf16.msra.mxu0 0
  %1256 = vmatprep.subr.bf16.mxu0 0
  %1257 = vmatpush2.bf16.msra.mxu0 0
  %1258 = vmatprep.subr.bf16.mxu0 0
  %1259 = vmatpush2.bf16.msra.mxu0 0
  %1260 = vmatprep.subr.bf16.mxu0 0
  %1261 = vmatpush2.bf16.msra.mxu0 0
  %1262 = vmatprep.subr.bf16.mxu0 0
  %1263 = vmatpush2.bf16.msra.mxu0 0
  %1264 = vmatprep.mubr.bf16.mxu0 0
  %1265 = vmatmul.mubr.bf16.gmra.mxu0 %v1230
  %v1266 = vpop.f32.mrf.mxu0
  %v1267 = vadd.f32 0.0, %v1266
  %v1268 = vpop.f32.mrf.mxu0
  %v1269 = vpop.f32.mrf.mxu0
  %v1270 = vpop.f32.mrf.mxu0
  %1271 = vdwg.mxu0
  %v1272 = vadd.f32 %v1224, %v1267
  %v1273 = vtanh.pop %v1272
  %v1274 = vxor.u32 %v1272, 2147483648
  %v1275 = vmul.f32 %v1274, 1.442695
  %v1276 = vpow.pop %v1275
  %v1277 = vadd.f32 %v1276, 1.0
  %v1278 = vrcp.pop %v1277
  %v1279 = vmul.f32 1.0, %v1278
  %v1280 = vsel %vm43, %v1273, %v1279
  %v1281 = vmul.f32 %v1280, %v1212
  %1283 = vrot.lane.b32.xlu0 %v1280, 64
  %v1284 = vpop.permute.xlu0 %1283
  %v1286 = vmul.f32 %v1280, %v1284
  %1288 = vrot.lane.b32.xlu0 %v1286, 32
  %v1289 = vpop.permute.xlu0 %1288
  %v1291 = vadd.f32 %v1281, %v1289
  %v1292 = vtanh.pop %v1291
  %1294 = vrot.lane.b32.xlu0 %v1292, 64
  %v1295 = vpop.permute.xlu0 %1294
  %v1297 = vmul.f32 %v1280, %v1295
  %1299 = vrot.lane.b32.xlu0 %v1297, 32
  %v1300 = vpop.permute.xlu0 %1299
  %1302 = vst.msk [vmem:[%s520] sm:$0xff] %vm95, %v1300
  %v1303 = vld [vmem:[%s522] sm:$0xff]
  %v1304 = vpack.c.bf16 %v1297, %v1297
  %1306 = vrot.lane.b32.xlu0 %v1304, 32
  %v1307 = vpop.permute.xlu0 %1306
  %v1309 = vsel %vm95, %v1307, 0
  %1311 = vmatprep.subr.bf16.mxu0 0
  %1312 = vmatpush1.bf16.msra.mxu0 0
  %1313 = vmatprep.subr.bf16.mxu0 0
  %1314 = vmatpush1.bf16.msra.mxu0 0
  %1315 = vmatprep.subr.bf16.mxu0 0
  %1316 = vmatpush1.bf16.msra.mxu0 0
  %1317 = vmatprep.subr.bf16.mxu0 0
  %1318 = vmatpush1.bf16.msra.mxu0 0
  %1319 = vmatprep.subr.bf16.mxu0 0
  %1320 = vmatpush1.bf16.msra.mxu0 0
  %1321 = vmatprep.subr.bf16.mxu0 0
  %1322 = vmatpush1.bf16.msra.mxu0 0
  %1323 = vmatprep.subr.bf16.mxu0 0
  %1324 = vmatpush1.bf16.msra.mxu0 %v985
  %1325 = vmatprep.subr.bf16.mxu0 0
  %1326 = vmatpush1.bf16.msra.mxu0 %v984
  %1327 = vmatprep.subr.bf16.mxu0 0
  %1328 = vmatpush2.bf16.msra.mxu0 0
  %1329 = vmatprep.subr.bf16.mxu0 0
  %1330 = vmatpush2.bf16.msra.mxu0 0
  %1331 = vmatprep.subr.bf16.mxu0 0
  %1332 = vmatpush2.bf16.msra.mxu0 0
  %1333 = vmatprep.subr.bf16.mxu0 0
  %1334 = vmatpush2.bf16.msra.mxu0 0
  %1335 = vmatprep.subr.bf16.mxu0 0
  %1336 = vmatpush2.bf16.msra.mxu0 0
  %1337 = vmatprep.subr.bf16.mxu0 0
  %1338 = vmatpush2.bf16.msra.mxu0 0
  %1339 = vmatprep.subr.bf16.mxu0 0
  %1340 = vmatpush2.bf16.msra.mxu0 0
  %1341 = vmatprep.subr.bf16.mxu0 0
  %1342 = vmatpush2.bf16.msra.mxu0 0
  %1343 = vmatprep.mubr.bf16.mxu0 0
  %1344 = vmatmul.mubr.bf16.gmra.mxu0 %v1309
  %v1345 = vpop.f32.mrf.mxu0
  %v1346 = vadd.f32 0.0, %v1345
  %v1347 = vpop.f32.mrf.mxu0
  %v1348 = vpop.f32.mrf.mxu0
  %v1349 = vpop.f32.mrf.mxu0
  %1350 = vdwg.mxu0
  %v1351 = vadd.f32 %v1303, %v1346
  %v1352 = vtanh.pop %v1351
  %v1353 = vxor.u32 %v1351, 2147483648
  %v1354 = vmul.f32 %v1353, 1.442695
  %v1355 = vpow.pop %v1354
  %v1356 = vadd.f32 %v1355, 1.0
  %v1357 = vrcp.pop %v1356
  %v1358 = vmul.f32 1.0, %v1357
  %v1359 = vsel %vm43, %v1352, %v1358
  %v1360 = vmul.f32 %v1359, %v1291
  %1362 = vrot.lane.b32.xlu0 %v1359, 64
  %v1363 = vpop.permute.xlu0 %1362
  %v1365 = vmul.f32 %v1359, %v1363
  %1367 = vrot.lane.b32.xlu0 %v1365, 32
  %v1368 = vpop.permute.xlu0 %1367
  %v1370 = vadd.f32 %v1360, %v1368
  %v1371 = vtanh.pop %v1370
  %1373 = vrot.lane.b32.xlu0 %v1371, 64
  %v1374 = vpop.permute.xlu0 %1373
  %v1376 = vmul.f32 %v1359, %v1374
  %1378 = vrot.lane.b32.xlu0 %v1376, 32
  %v1379 = vpop.permute.xlu0 %1378
  %1381 = vst.msk [vmem:[%s601] sm:$0xff] %vm95, %v1379
  %v1382 = vld [vmem:[%s603] sm:$0xff]
  %v1383 = vpack.c.bf16 %v1376, %v1376
  %1385 = vrot.lane.b32.xlu0 %v1383, 32
  %v1386 = vpop.permute.xlu0 %1385
  %v1388 = vsel %vm95, %v1386, 0
  %1390 = vmatprep.subr.bf16.mxu0 0
  %1391 = vmatpush1.bf16.msra.mxu0 0
  %1392 = vmatprep.subr.bf16.mxu0 0
  %1393 = vmatpush1.bf16.msra.mxu0 0
  %1394 = vmatprep.subr.bf16.mxu0 0
  %1395 = vmatpush1.bf16.msra.mxu0 0
  %1396 = vmatprep.subr.bf16.mxu0 0
  %1397 = vmatpush1.bf16.msra.mxu0 0
  %1398 = vmatprep.subr.bf16.mxu0 0
  %1399 = vmatpush1.bf16.msra.mxu0 0
  %1400 = vmatprep.subr.bf16.mxu0 0
  %1401 = vmatpush1.bf16.msra.mxu0 0
  %1402 = vmatprep.subr.bf16.mxu0 0
  %1403 = vmatpush1.bf16.msra.mxu0 %v985
  %1404 = vmatprep.subr.bf16.mxu0 0
  %1405 = vmatpush1.bf16.msra.mxu0 %v984
  %1406 = vmatprep.subr.bf16.mxu0 0
  %1407 = vmatpush2.bf16.msra.mxu0 0
  %1408 = vmatprep.subr.bf16.mxu0 0
  %1409 = vmatpush2.bf16.msra.mxu0 0
  %1410 = vmatprep.subr.bf16.mxu0 0
  %1411 = vmatpush2.bf16.msra.mxu0 0
  %1412 = vmatprep.subr.bf16.mxu0 0
  %1413 = vmatpush2.bf16.msra.mxu0 0
  %1414 = vmatprep.subr.bf16.mxu0 0
  %1415 = vmatpush2.bf16.msra.mxu0 0
  %1416 = vmatprep.subr.bf16.mxu0 0
  %1417 = vmatpush2.bf16.msra.mxu0 0
  %1418 = vmatprep.subr.bf16.mxu0 0
  %1419 = vmatpush2.bf16.msra.mxu0 0
  %1420 = vmatprep.subr.bf16.mxu0 0
  %1421 = vmatpush2.bf16.msra.mxu0 0
  %1422 = vmatprep.mubr.bf16.mxu0 0
  %1423 = vmatmul.mubr.bf16.gmra.mxu0 %v1388
  %v1424 = vpop.f32.mrf.mxu0
  %v1425 = vadd.f32 0.0, %v1424
  %v1426 = vpop.f32.mrf.mxu0
  %v1427 = vpop.f32.mrf.mxu0
  %v1428 = vpop.f32.mrf.mxu0
  %1429 = vdwg.mxu0
  %v1430 = vadd.f32 %v1382, %v1425
  %v1431 = vtanh.pop %v1430
  %v1432 = vxor.u32 %v1430, 2147483648
  %v1433 = vmul.f32 %v1432, 1.442695
  %v1434 = vpow.pop %v1433
  %v1435 = vadd.f32 %v1434, 1.0
  %v1436 = vrcp.pop %v1435
  %v1437 = vmul.f32 1.0, %v1436
  %v1438 = vsel %vm43, %v1431, %v1437
  %v1439 = vmul.f32 %v1438, %v1370
  %1441 = vrot.lane.b32.xlu0 %v1438, 64
  %v1442 = vpop.permute.xlu0 %1441
  %v1444 = vmul.f32 %v1438, %v1442
  %1446 = vrot.lane.b32.xlu0 %v1444, 32
  %v1447 = vpop.permute.xlu0 %1446
  %v1449 = vadd.f32 %v1439, %v1447
  %v1450 = vtanh.pop %v1449
  %1452 = vrot.lane.b32.xlu0 %v1450, 64
  %v1453 = vpop.permute.xlu0 %1452
  %v1455 = vmul.f32 %v1438, %v1453
  %1457 = vrot.lane.b32.xlu0 %v1455, 32
  %v1458 = vpop.permute.xlu0 %1457
  %1460 = vst.msk [vmem:[%s682] sm:$0xff] %vm95, %v1458
  %v1461 = vld [vmem:[%s684] sm:$0xff]
  %v1462 = vpack.c.bf16 %v1455, %v1455
  %1464 = vrot.lane.b32.xlu0 %v1462, 32
  %v1465 = vpop.permute.xlu0 %1464
  %v1467 = vsel %vm95, %v1465, 0
  %1469 = vmatprep.subr.bf16.mxu0 0
  %1470 = vmatpush1.bf16.msra.mxu0 0
  %1471 = vmatprep.subr.bf16.mxu0 0
  %1472 = vmatpush1.bf16.msra.mxu0 0
  %1473 = vmatprep.subr.bf16.mxu0 0
  %1474 = vmatpush1.bf16.msra.mxu0 0
  %1475 = vmatprep.subr.bf16.mxu0 0
  %1476 = vmatpush1.bf16.msra.mxu0 0
  %1477 = vmatprep.subr.bf16.mxu0 0
  %1478 = vmatpush1.bf16.msra.mxu0 0
  %1479 = vmatprep.subr.bf16.mxu0 0
  %1480 = vmatpush1.bf16.msra.mxu0 0
  %1481 = vmatprep.subr.bf16.mxu0 0
  %1482 = vmatpush1.bf16.msra.mxu0 %v985
  %1483 = vmatprep.subr.bf16.mxu0 0
  %1484 = vmatpush1.bf16.msra.mxu0 %v984
  %1485 = vmatprep.subr.bf16.mxu0 0
  %1486 = vmatpush2.bf16.msra.mxu0 0
  %1487 = vmatprep.subr.bf16.mxu0 0
  %1488 = vmatpush2.bf16.msra.mxu0 0
  %1489 = vmatprep.subr.bf16.mxu0 0
  %1490 = vmatpush2.bf16.msra.mxu0 0
  %1491 = vmatprep.subr.bf16.mxu0 0
  %1492 = vmatpush2.bf16.msra.mxu0 0
  %1493 = vmatprep.subr.bf16.mxu0 0
  %1494 = vmatpush2.bf16.msra.mxu0 0
  %1495 = vmatprep.subr.bf16.mxu0 0
  %1496 = vmatpush2.bf16.msra.mxu0 0
  %1497 = vmatprep.subr.bf16.mxu0 0
  %1498 = vmatpush2.bf16.msra.mxu0 0
  %1499 = vmatprep.subr.bf16.mxu0 0
  %1500 = vmatpush2.bf16.msra.mxu0 0
  %1501 = vmatprep.mubr.bf16.mxu0 0
  %1502 = vmatmul.mubr.bf16.gmra.mxu0 %v1467
  %v1503 = vpop.f32.mrf.mxu0
  %v1504 = vadd.f32 0.0, %v1503
  %v1505 = vpop.f32.mrf.mxu0
  %v1506 = vpop.f32.mrf.mxu0
  %v1507 = vpop.f32.mrf.mxu0
  %1508 = vdwg.mxu0
  %v1509 = vadd.f32 %v1461, %v1504
  %v1510 = vtanh.pop %v1509
  %v1511 = vxor.u32 %v1509, 2147483648
  %v1512 = vmul.f32 %v1511, 1.442695
  %v1513 = vpow.pop %v1512
  %v1514 = vadd.f32 %v1513, 1.0
  %v1515 = vrcp.pop %v1514
  %v1516 = vmul.f32 1.0, %v1515
  %v1517 = vsel %vm43, %v1510, %v1516
  %v1518 = vmul.f32 %v1517, %v1449
  %1520 = vrot.lane.b32.xlu0 %v1517, 64
  %v1521 = vpop.permute.xlu0 %1520
  %v1523 = vmul.f32 %v1517, %v1521
  %1525 = vrot.lane.b32.xlu0 %v1523, 32
  %v1526 = vpop.permute.xlu0 %1525
  %v1528 = vadd.f32 %v1518, %v1526
  %v1529 = vtanh.pop %v1528
  %1531 = vrot.lane.b32.xlu0 %v1529, 64
  %v1532 = vpop.permute.xlu0 %1531
  %v1534 = vmul.f32 %v1517, %v1532
  %1536 = vrot.lane.b32.xlu0 %v1534, 32
  %v1537 = vpop.permute.xlu0 %1536
  %1539 = vst.msk [vmem:[%s763] sm:$0xff] %vm95, %v1537
  %v1540 = vld [vmem:[%s765] sm:$0xff]
  %v1541 = vpack.c.bf16 %v1534, %v1534
  %1543 = vrot.lane.b32.xlu0 %v1541, 32
  %v1544 = vpop.permute.xlu0 %1543
  %v1546 = vsel %vm95, %v1544, 0
  %1548 = vmatprep.subr.bf16.mxu0 0
  %1549 = vmatpush1.bf16.msra.mxu0 0
  %1550 = vmatprep.subr.bf16.mxu0 0
  %1551 = vmatpush1.bf16.msra.mxu0 0
  %1552 = vmatprep.subr.bf16.mxu0 0
  %1553 = vmatpush1.bf16.msra.mxu0 0
  %1554 = vmatprep.subr.bf16.mxu0 0
  %1555 = vmatpush1.bf16.msra.mxu0 0
  %1556 = vmatprep.subr.bf16.mxu0 0
  %1557 = vmatpush1.bf16.msra.mxu0 0
  %1558 = vmatprep.subr.bf16.mxu0 0
  %1559 = vmatpush1.bf16.msra.mxu0 0
  %1560 = vmatprep.subr.bf16.mxu0 0
  %1561 = vmatpush1.bf16.msra.mxu0 %v985
  %1562 = vmatprep.subr.bf16.mxu0 0
  %1563 = vmatpush1.bf16.msra.mxu0 %v984
  %1564 = vmatprep.subr.bf16.mxu0 0
  %1565 = vmatpush2.bf16.msra.mxu0 0
  %1566 = vmatprep.subr.bf16.mxu0 0
  %1567 = vmatpush2.bf16.msra.mxu0 0
  %1568 = vmatprep.subr.bf16.mxu0 0
  %1569 = vmatpush2.bf16.msra.mxu0 0
  %1570 = vmatprep.subr.bf16.mxu0 0
  %1571 = vmatpush2.bf16.msra.mxu0 0
  %1572 = vmatprep.subr.bf16.mxu0 0
  %1573 = vmatpush2.bf16.msra.mxu0 0
  %1574 = vmatprep.subr.bf16.mxu0 0
  %1575 = vmatpush2.bf16.msra.mxu0 0
  %1576 = vmatprep.subr.bf16.mxu0 0
  %1577 = vmatpush2.bf16.msra.mxu0 0
  %1578 = vmatprep.subr.bf16.mxu0 0
  %1579 = vmatpush2.bf16.msra.mxu0 0
  %1580 = vmatprep.mubr.bf16.mxu0 0
  %1581 = vmatmul.mubr.bf16.gmra.mxu0 %v1546
  %v1582 = vpop.f32.mrf.mxu0
  %v1583 = vadd.f32 0.0, %v1582
  %v1584 = vpop.f32.mrf.mxu0
  %v1585 = vpop.f32.mrf.mxu0
  %v1586 = vpop.f32.mrf.mxu0
  %1587 = vdwg.mxu0
  %v1588 = vadd.f32 %v1540, %v1583
  %v1589 = vtanh.pop %v1588
  %v1590 = vxor.u32 %v1588, 2147483648
  %v1591 = vmul.f32 %v1590, 1.442695
  %v1592 = vpow.pop %v1591
  %v1593 = vadd.f32 %v1592, 1.0
  %v1594 = vrcp.pop %v1593
  %v1595 = vmul.f32 1.0, %v1594
  %v1596 = vsel %vm43, %v1589, %v1595
  %v1597 = vmul.f32 %v1596, %v1528
  %1599 = vrot.lane.b32.xlu0 %v1596, 64
  %v1600 = vpop.permute.xlu0 %1599
  %v1602 = vmul.f32 %v1596, %v1600
  %1604 = vrot.lane.b32.xlu0 %v1602, 32
  %v1605 = vpop.permute.xlu0 %1604
  %v1607 = vadd.f32 %v1597, %v1605
  %v1608 = vtanh.pop %v1607
  %1610 = vrot.lane.b32.xlu0 %v1608, 64
  %v1611 = vpop.permute.xlu0 %1610
  %v1613 = vmul.f32 %v1596, %v1611
  %1615 = vrot.lane.b32.xlu0 %v1613, 32
  %v1616 = vpop.permute.xlu0 %1615
  %1618 = vst.msk [vmem:[%s844] sm:$0xff] %vm95, %v1616
  %v1619 = vld [vmem:[#allocation2] sm:$0xff]
  %v1620 = vld [vmem:[#allocation2 + $0x8] sm:$0xff]
  %v1621 = vld [vmem:[#allocation2 + $0x10] sm:$0xff]
  %v1622 = vld [vmem:[#allocation2 + $0x18] sm:$0xff]
  %v1623 = vld [vmem:[#allocation2 + $0x20] sm:$0xff]
  %v1624 = vld [vmem:[#allocation2 + $0x28] sm:$0xff]
  %v1625 = vld [vmem:[#allocation2 + $0x30] sm:$0xff]
  %v1626 = vld [vmem:[#allocation2 + $0x38] sm:$0xff]
  %v1627 = vpack.c.bf16 %v1620, %v1619
  %v1628 = vpack.c.bf16 %v1622, %v1621
  %v1629 = vpack.c.bf16 %v1624, %v1623
  %v1630 = vpack.c.bf16 %v1626, %v1625
  %v1631 = vld [vmem:[%s9] sm:$0xf]
  %v1632 = vld [vmem:[%s9 + $0x4] sm:$0xf]
  %v1633 = vld [vmem:[%s9 + $0x8] sm:$0xf]
  %v1634 = vld [vmem:[%s9 + $0xc] sm:$0xf]
  %v1635 = vld [vmem:[%s10] sm:$0x1]
  %v1637 = vlaneseq
  %v1638 = vshrl.u32 %v1637, 7
  %v1639 = vsub.s32 0, %v1638
  %v1640 = vrot.slane %v1635, %v1639
  %v1646 = vunpack.c.l.b16 %v1631
  %v1647 = vunpack.c.l.b16 %v1632
  %v1648 = vunpack.c.l.b16 %v1633
  %v1649 = vunpack.c.l.b16 %v1634
  %v1650 = vpack.c.b16 %v1647, %v1646
  %v1651 = vpack.c.b16 %v1649, %v1648
  %v1655 = vsel %vm95, %v1627, 0
  %v1658 = vsel %vm95, %v1628, 0
  %v1661 = vsel %vm95, %v1629, 0
  %v1664 = vsel %vm95, %v1630, 0
  %1666 = vmatprep.subr.bf16.mxu0 0
  %1667 = vmatpush1.bf16.msra.mxu0 0
  %1668 = vmatprep.subr.bf16.mxu0 0
  %1669 = vmatpush1.bf16.msra.mxu0 0
  %1670 = vmatprep.subr.bf16.mxu0 0
  %1671 = vmatpush1.bf16.msra.mxu0 0
  %1672 = vmatprep.subr.bf16.mxu0 0
  %1673 = vmatpush1.bf16.msra.mxu0 0
  %1674 = vmatprep.subr.bf16.mxu0 0
  %1675 = vmatpush1.bf16.msra.mxu0 0
  %1676 = vmatprep.subr.bf16.mxu0 0
  %1677 = vmatpush1.bf16.msra.mxu0 0
  %1678 = vmatprep.subr.bf16.mxu0 0
  %1679 = vmatpush1.bf16.msra.mxu0 %v1651
  %1680 = vmatprep.subr.bf16.mxu0 0
  %1681 = vmatpush1.bf16.msra.mxu0 %v1650
  %1682 = vmatprep.subr.bf16.mxu0 0
  %1683 = vmatpush2.bf16.msra.mxu0 0
  %1684 = vmatprep.subr.bf16.mxu0 0
  %1685 = vmatpush2.bf16.msra.mxu0 0
  %1686 = vmatprep.subr.bf16.mxu0 0
  %1687 = vmatpush2.bf16.msra.mxu0 0
  %1688 = vmatprep.subr.bf16.mxu0 0
  %1689 = vmatpush2.bf16.msra.mxu0 0
  %1690 = vmatprep.subr.bf16.mxu0 0
  %1691 = vmatpush2.bf16.msra.mxu0 0
  %1692 = vmatprep.subr.bf16.mxu0 0
  %1693 = vmatpush2.bf16.msra.mxu0 0
  %1694 = vmatprep.subr.bf16.mxu0 0
  %1695 = vmatpush2.bf16.msra.mxu0 0
  %1696 = vmatprep.subr.bf16.mxu0 0
  %1697 = vmatpush2.bf16.msra.mxu0 0
  %1698 = vmatprep.mubr.bf16.mxu0 0
  %1699 = vmatmul.mubr.bf16.gmra.mxu0 %v1655
  %v1700 = vpop.f32.mrf.mxu0
  %v1701 = vadd.f32 %v1640, %v1700
  %v1702 = vpop.f32.mrf.mxu0
  %v1703 = vpop.f32.mrf.mxu0
  %v1704 = vadd.f32 %v1640, %v1703
  %v1705 = vpop.f32.mrf.mxu0
  %1706 = vmatprep.mubr.bf16.mxu0 0
  %1707 = vmatmul.mubr.bf16.gmra.mxu0 %v1658
  %v1708 = vpop.f32.mrf.mxu0
  %v1709 = vadd.f32 %v1640, %v1708
  %v1710 = vpop.f32.mrf.mxu0
  %v1711 = vpop.f32.mrf.mxu0
  %v1712 = vadd.f32 %v1640, %v1711
  %v1713 = vpop.f32.mrf.mxu0
  %1714 = vmatprep.mubr.bf16.mxu0 0
  %1715 = vmatmul.mubr.bf16.gmra.mxu0 %v1661
  %v1716 = vpop.f32.mrf.mxu0
  %v1717 = vadd.f32 %v1640, %v1716
  %v1718 = vpop.f32.mrf.mxu0
  %v1719 = vpop.f32.mrf.mxu0
  %v1720 = vadd.f32 %v1640, %v1719
  %v1721 = vpop.f32.mrf.mxu0
  %1722 = vmatprep.mubr.bf16.mxu0 0
  %1723 = vmatmul.mubr.bf16.gmra.mxu0 %v1664
  %v1724 = vpop.f32.mrf.mxu0
  %v1725 = vadd.f32 %v1640, %v1724
  %v1726 = vpop.f32.mrf.mxu0
  %v1727 = vpop.f32.mrf.mxu0
  %v1728 = vadd.f32 %v1640, %v1727
  %v1729 = vpop.f32.mrf.mxu0
  %1730 = vdwg.mxu0
  %1731 = vst [vmem:[%s11] sm:$0xff] %v1701
  %1732 = vst [vmem:[%s11 + $0x8] sm:$0xff] %v1704
  %1733 = vst [vmem:[%s11 + $0x10] sm:$0xff] %v1709
  %1734 = vst [vmem:[%s11 + $0x18] sm:$0xff] %v1712
  %1735 = vst [vmem:[%s11 + $0x20] sm:$0xff] %v1717
  %1736 = vst [vmem:[%s11 + $0x28] sm:$0xff] %v1720
  %1737 = vst [vmem:[%s11 + $0x30] sm:$0xff] %v1725
  %1738 = vst [vmem:[%s11 + $0x38] sm:$0xff] %v1728
  // Predicated region
  $region46: #{seq2seq_forward.3} parent=0 // pred_check
    _
  $region47: #{seq2seq_forward.3} parent=0 // pred_check_branch
    %1740 = sbr.rel (0) target = $region49
  $region48: #{seq2seq_forward.3} parent=0 // pred_region
    _
  $region49: #{seq2seq_forward.3} parent=0 // pred_fallthru
    _
  // Predicated region
  $region50: #{seq2seq_forward.3} parent=0 // pred_check
    _
  $region51: #{seq2seq_forward.3} parent=0 // pred_check_branch
    %1742 = sbr.rel (0) target = $region53
  $region52: #{seq2seq_forward.3} parent=0 // pred_region
    _
  $region53: #{seq2seq_forward.3} parent=0 // pred_fallthru
    _

// kernel: seq2seq_forward.2
$region0: #{seq2seq_forward.2}
  #allocation0 [shape = 'u32[]', space=smem, size = 0x4, offset = 0x4, fixed_abs, tag = 'smem constant byte address 0x4 - core index']
  #allocation1 [shape = 'u32[144,128]{1,0:T(1,128)}', space=vmem, size = 0x12000, scoped, tag = 'internal scratch']
  #allocation2 [shape = 'f32[10,8,32]{2,1,0:T(8,128)}', space=vmem, size = 0xa000, scoped, tag = 'scratch operand']
  #allocation3 [shape = 'f32[10,8,128]{2,1,0:T(8,128)}', space=vmem, size = 0xa000, scoped, tag = 'scratch operand']
  %s0 = inlined_call_operand.vmem [shape: bf16[10,8,32], index: 0, kind: input, shape index: {}]
  %s1 = inlined_call_operand.vmem [shape: s32[8,1], index: 1, kind: input, shape index: {}]
  %s2 = inlined_call_operand.vmem [shape: f32[2,8,32], index: 2, kind: input, shape index: {}, may-alias: {2,3}]
  %s3 = inlined_call_operand.vmem [shape: f32[2,8,32], index: 3, kind: input, shape index: {}, may-alias: {2,3}]
  %s4 = inlined_call_operand.vmem [shape: bf16[32,128], index: 4, kind: input, shape index: {}]
  %s5 = inlined_call_operand.vmem [shape: bf16[32,128], index: 5, kind: input, shape index: {}]
  %s6 = inlined_call_operand.vmem [shape: bf16[32,128], index: 6, kind: input, shape index: {}]
  %s7 = inlined_call_operand.vmem [shape: bf16[32,128], index: 7, kind: input, shape index: {}]
  %s8 = inlined_call_operand.vmem [shape: f32[1,128], index: 8, kind: input, shape index: {}]
  %s9 = inlined_call_operand.vmem [shape: f32[1,128], index: 9, kind: input, shape index: {}]
  %s10 = inlined_call_operand.vmem [shape: f32[2,8,32], index: 10, kind: output, shape index: {0}]
  %s11 = inlined_call_operand.vmem [shape: f32[2,8,32], index: 11, kind: output, shape index: {1}]
  %12 = xla_tuple %s10, %s11
  %s13 = sld [smem:[#allocation0]]
  $region58: #{seq2seq_forward.2} parent=0
    _
  %s15 = ssub.s32 1, %s13
  %s16 = scalar_select 0, %s15, %s13
  // Predicated region
  $region2: #{seq2seq_forward.2} parent=0 // pred_check
    _
  $region3: #{seq2seq_forward.2} parent=0 // pred_check_branch
    %18 = sbr.rel (0) target = $region5
  $region4: #{seq2seq_forward.2} parent=0 // pred_region
    _
  $region5: #{seq2seq_forward.2} parent=0 // pred_fallthru
    _
  // Predicated region
  $region6: #{seq2seq_forward.2} parent=0 // pred_check
    _
  $region7: #{seq2seq_forward.2} parent=0 // pred_check_branch
    %20 = sbr.rel (0) target = $region9
  $region8: #{seq2seq_forward.2} parent=0 // pred_region
    _
  $region9: #{seq2seq_forward.2} parent=0 // pred_fallthru
    _
  // Predicated region
  $region10: #{seq2seq_forward.2} parent=0 // pred_check
    _
  $region11: #{seq2seq_forward.2} parent=0 // pred_check_branch
    %22 = sbr.rel (0) target = $region13
  $region12: #{seq2seq_forward.2} parent=0 // pred_region
    _
  $region13: #{seq2seq_forward.2} parent=0 // pred_fallthru
    _
  // Predicated region
  $region14: #{seq2seq_forward.2} parent=0 // pred_check
    _
  $region15: #{seq2seq_forward.2} parent=0 // pred_check_branch
    %24 = sbr.rel (0) target = $region17
  $region16: #{seq2seq_forward.2} parent=0 // pred_region
    _
  $region17: #{seq2seq_forward.2} parent=0 // pred_fallthru
    _
  // Predicated region
  $region18: #{seq2seq_forward.2} parent=0 // pred_check
    _
  $region19: #{seq2seq_forward.2} parent=0 // pred_check_branch
    %26 = sbr.rel (0) target = $region21
  $region20: #{seq2seq_forward.2} parent=0 // pred_region
    _
  $region21: #{seq2seq_forward.2} parent=0 // pred_fallthru
    _
  // Predicated region
  $region22: #{seq2seq_forward.2} parent=0 // pred_check
    _
  $region23: #{seq2seq_forward.2} parent=0 // pred_check_branch
    %28 = sbr.rel (0) target = $region25
  $region24: #{seq2seq_forward.2} parent=0 // pred_region
    _
  $region25: #{seq2seq_forward.2} parent=0 // pred_fallthru
    _
  // Predicated region
  $region26: #{seq2seq_forward.2} parent=0 // pred_check
    _
  $region27: #{seq2seq_forward.2} parent=0 // pred_check_branch
    %30 = sbr.rel (0) target = $region29
  $region28: #{seq2seq_forward.2} parent=0 // pred_region
    _
  $region29: #{seq2seq_forward.2} parent=0 // pred_fallthru
    _
  // Predicated region
  $region30: #{seq2seq_forward.2} parent=0 // pred_check
    _
  $region31: #{seq2seq_forward.2} parent=0 // pred_check_branch
    %32 = sbr.rel (0) target = $region33
  $region32: #{seq2seq_forward.2} parent=0 // pred_region
    _
  $region33: #{seq2seq_forward.2} parent=0 // pred_fallthru
    _
  // Predicated region
  $region34: #{seq2seq_forward.2} parent=0 // pred_check
    _
  $region35: #{seq2seq_forward.2} parent=0 // pred_check_branch
    %34 = sbr.rel (0) target = $region37
  $region36: #{seq2seq_forward.2} parent=0 // pred_region
    _
  $region37: #{seq2seq_forward.2} parent=0 // pred_fallthru
    _
  // Predicated region
  $region38: #{seq2seq_forward.2} parent=0 // pred_check
    _
  $region39: #{seq2seq_forward.2} parent=0 // pred_check_branch
    %36 = sbr.rel (0) target = $region41
  $region40: #{seq2seq_forward.2} parent=0 // pred_region
    _
  $region41: #{seq2seq_forward.2} parent=0 // pred_fallthru
    _
  %v38 = vlaneseq
  %v39 = vand.u32 %v38, 127
  %vm40 = vcmp.ge.s32.totalorder %v39, 64
  %vm41 = vcmp.lt.s32.totalorder %v39, 96
  %vm42 = vmand %vm40, %vm41
  %v43 = vld [vmem:[%s0] sm:$0xf]
  %v44 = vld [vmem:[%s0 + $0x4] sm:$0xf]
  %v45 = vld [vmem:[%s0 + $0x8] sm:$0xf]
  %v46 = vld [vmem:[%s0 + $0xc] sm:$0xf]
  %v47 = vld [vmem:[%s0 + $0x10] sm:$0xf]
  %v48 = vld [vmem:[%s0 + $0x14] sm:$0xf]
  %v49 = vld [vmem:[%s0 + $0x18] sm:$0xf]
  %v50 = vld [vmem:[%s0 + $0x1c] sm:$0xf]
  %v51 = vld [vmem:[%s0 + $0x20] sm:$0xf]
  %v52 = vld [vmem:[%s0 + $0x24] sm:$0xf]
  %v53 = vld [vmem:[%s4] sm:$0xf]
  %v54 = vld [vmem:[%s4 + $0x4] sm:$0xf]
  %v55 = vld [vmem:[%s4 + $0x8] sm:$0xf]
  %v56 = vld [vmem:[%s4 + $0xc] sm:$0xf]
  %v57 = vld [vmem:[%s8] sm:$0x1]
  %v59 = vlaneseq
  %v60 = vshrl.u32 %v59, 7
  %v61 = vsub.s32 0, %v60
  %v62 = vrot.slane %v57, %v61
  %v74 = vunpack.c.l.b16 %v43
  %v75 = vunpack.c.l.b16 %v44
  %v76 = vunpack.c.l.b16 %v45
  %v77 = vunpack.c.l.b16 %v46
  %v78 = vunpack.c.l.b16 %v47
  %v79 = vunpack.c.l.b16 %v48
  %v80 = vunpack.c.l.b16 %v49
  %v81 = vunpack.c.l.b16 %v50
  %v82 = vunpack.c.l.b16 %v51
  %v83 = vunpack.c.l.b16 %v52
  %v84 = vpack.c.b16 %v75, %v74
  %v85 = vpack.c.b16 %v77, %v76
  %v86 = vpack.c.b16 %v79, %v78
  %v87 = vpack.c.b16 %v81, %v80
  %v88 = vpack.c.b16 %v83, %v82
  %v93 = vunpack.c.l.b16 %v53
  %v94 = vunpack.c.l.b16 %v54
  %v95 = vunpack.c.l.b16 %v55
  %v96 = vunpack.c.l.b16 %v56
  %v97 = vpack.c.b16 %v94, %v93
  %v98 = vpack.c.b16 %v96, %v95
  %vm101 = vcmask 261120
  %v103 = vsel %vm101, %v84, 0
  %v106 = vsel %vm101, %v85, 0
  %v109 = vsel %vm101, %v86, 0
  %v112 = vsel %vm101, %v87, 0
  %v115 = vsel %vm101, %v88, 0
  %117 = vmatprep.subr.bf16.mxu0 0
  %118 = vmatpush1.bf16.msra.mxu0 0
  %119 = vmatprep.subr.bf16.mxu0 0
  %120 = vmatpush1.bf16.msra.mxu0 0
  %121 = vmatprep.subr.bf16.mxu0 0
  %122 = vmatpush1.bf16.msra.mxu0 0
  %123 = vmatprep.subr.bf16.mxu0 0
  %124 = vmatpush1.bf16.msra.mxu0 0
  %125 = vmatprep.subr.bf16.mxu0 0
  %126 = vmatpush1.bf16.msra.mxu0 0
  %127 = vmatprep.subr.bf16.mxu0 0
  %128 = vmatpush1.bf16.msra.mxu0 0
  %129 = vmatprep.subr.bf16.mxu0 0
  %130 = vmatpush1.bf16.msra.mxu0 %v98
  %131 = vmatprep.subr.bf16.mxu0 0
  %132 = vmatpush1.bf16.msra.mxu0 %v97
  %133 = vmatprep.subr.bf16.mxu0 0
  %134 = vmatpush2.bf16.msra.mxu0 0
  %135 = vmatprep.subr.bf16.mxu0 0
  %136 = vmatpush2.bf16.msra.mxu0 0
  %137 = vmatprep.subr.bf16.mxu0 0
  %138 = vmatpush2.bf16.msra.mxu0 0
  %139 = vmatprep.subr.bf16.mxu0 0
  %140 = vmatpush2.bf16.msra.mxu0 0
  %141 = vmatprep.subr.bf16.mxu0 0
  %142 = vmatpush2.bf16.msra.mxu0 0
  %143 = vmatprep.subr.bf16.mxu0 0
  %144 = vmatpush2.bf16.msra.mxu0 0
  %145 = vmatprep.subr.bf16.mxu0 0
  %146 = vmatpush2.bf16.msra.mxu0 0
  %147 = vmatprep.subr.bf16.mxu0 0
  %148 = vmatpush2.bf16.msra.mxu0 0
  %149 = vmatprep.mubr.bf16.mxu0 0
  %150 = vmatmul.mubr.bf16.gmra.mxu0 %v103
  %v151 = vpop.f32.mrf.mxu0
  %v152 = vadd.f32 %v62, %v151
  %v153 = vpop.f32.mrf.mxu0
  %v154 = vpop.f32.mrf.mxu0
  %v155 = vadd.f32 %v62, %v154
  %v156 = vpop.f32.mrf.mxu0
  %157 = vmatprep.mubr.bf16.mxu0 0
  %158 = vmatmul.mubr.bf16.gmra.mxu0 %v106
  %v159 = vpop.f32.mrf.mxu0
  %v160 = vadd.f32 %v62, %v159
  %v161 = vpop.f32.mrf.mxu0
  %v162 = vpop.f32.mrf.mxu0
  %v163 = vadd.f32 %v62, %v162
  %v164 = vpop.f32.mrf.mxu0
  %165 = vmatprep.mubr.bf16.mxu0 0
  %166 = vmatmul.mubr.bf16.gmra.mxu0 %v109
  %v167 = vpop.f32.mrf.mxu0
  %v168 = vadd.f32 %v62, %v167
  %v169 = vpop.f32.mrf.mxu0
  %v170 = vpop.f32.mrf.mxu0
  %v171 = vadd.f32 %v62, %v170
  %v172 = vpop.f32.mrf.mxu0
  %173 = vmatprep.mubr.bf16.mxu0 0
  %174 = vmatmul.mubr.bf16.gmra.mxu0 %v112
  %v175 = vpop.f32.mrf.mxu0
  %v176 = vadd.f32 %v62, %v175
  %v177 = vpop.f32.mrf.mxu0
  %v178 = vpop.f32.mrf.mxu0
  %v179 = vadd.f32 %v62, %v178
  %v180 = vpop.f32.mrf.mxu0
  %181 = vmatprep.mubr.bf16.mxu0 0
  %182 = vmatmul.mubr.bf16.gmra.mxu0 %v115
  %v183 = vpop.f32.mrf.mxu0
  %v184 = vadd.f32 %v62, %v183
  %v185 = vpop.f32.mrf.mxu0
  %v186 = vpop.f32.mrf.mxu0
  %v187 = vadd.f32 %v62, %v186
  %v188 = vpop.f32.mrf.mxu0
  %189 = vdwg.mxu0
  %190 = vst [vmem:[#allocation3] sm:$0xff] %v152
  %191 = vst [vmem:[#allocation3 + $0x8] sm:$0xff] %v155
  %192 = vst [vmem:[#allocation3 + $0x10] sm:$0xff] %v160
  %193 = vst [vmem:[#allocation3 + $0x18] sm:$0xff] %v163
  %194 = vst [vmem:[#allocation3 + $0x20] sm:$0xff] %v168
  %195 = vst [vmem:[#allocation3 + $0x28] sm:$0xff] %v171
  %196 = vst [vmem:[#allocation3 + $0x30] sm:$0xff] %v176
  %197 = vst [vmem:[#allocation3 + $0x38] sm:$0xff] %v179
  %198 = vst [vmem:[#allocation3 + $0x40] sm:$0xff] %v184
  %199 = vst [vmem:[#allocation3 + $0x48] sm:$0xff] %v187
  %v200 = vld [vmem:[%s6] sm:$0xf]
  %v201 = vld [vmem:[%s6 + $0x4] sm:$0xf]
  %v202 = vld [vmem:[%s6 + $0x8] sm:$0xf]
  %v203 = vld [vmem:[%s6 + $0xc] sm:$0xf]
  %v204 = vld [vmem:[%s2] sm:$0xff]
  %v205 = vld [vmem:[%s3] sm:$0xff]
  %v206 = vld [vmem:[#allocation3] sm:$0xff]
  %v207 = vpack.c.bf16 %v204, %v204
  %v212 = vunpack.c.l.b16 %v200
  %v213 = vunpack.c.l.b16 %v201
  %v214 = vunpack.c.l.b16 %v202
  %v215 = vunpack.c.l.b16 %v203
  %v216 = vpack.c.b16 %v213, %v212
  %v217 = vpack.c.b16 %v215, %v214
  %v221 = vsel %vm101, %v207, 0
  %223 = vmatprep.subr.bf16.mxu0 0
  %224 = vmatpush1.bf16.msra.mxu0 0
  %225 = vmatprep.subr.bf16.mxu0 0
  %226 = vmatpush1.bf16.msra.mxu0 0
  %227 = vmatprep.subr.bf16.mxu0 0
  %228 = vmatpush1.bf16.msra.mxu0 0
  %229 = vmatprep.subr.bf16.mxu0 0
  %230 = vmatpush1.bf16.msra.mxu0 0
  %231 = vmatprep.subr.bf16.mxu0 0
  %232 = vmatpush1.bf16.msra.mxu0 0
  %233 = vmatprep.subr.bf16.mxu0 0
  %234 = vmatpush1.bf16.msra.mxu0 0
  %235 = vmatprep.subr.bf16.mxu0 0
  %236 = vmatpush1.bf16.msra.mxu0 %v217
  %237 = vmatprep.subr.bf16.mxu0 0
  %238 = vmatpush1.bf16.msra.mxu0 %v216
  %239 = vmatprep.subr.bf16.mxu0 0
  %240 = vmatpush2.bf16.msra.mxu0 0
  %241 = vmatprep.subr.bf16.mxu0 0
  %242 = vmatpush2.bf16.msra.mxu0 0
  %243 = vmatprep.subr.bf16.mxu0 0
  %244 = vmatpush2.bf16.msra.mxu0 0
  %245 = vmatprep.subr.bf16.mxu0 0
  %246 = vmatpush2.bf16.msra.mxu0 0
  %247 = vmatprep.subr.bf16.mxu0 0
  %248 = vmatpush2.bf16.msra.mxu0 0
  %249 = vmatprep.subr.bf16.mxu0 0
  %250 = vmatpush2.bf16.msra.mxu0 0
  %251 = vmatprep.subr.bf16.mxu0 0
  %252 = vmatpush2.bf16.msra.mxu0 0
  %253 = vmatprep.subr.bf16.mxu0 0
  %254 = vmatpush2.bf16.msra.mxu0 0
  %255 = vmatprep.mubr.bf16.mxu0 0
  %256 = vmatmul.mubr.bf16.gmra.mxu0 %v221
  %v257 = vpop.f32.mrf.mxu0
  %v258 = vadd.f32 0.0, %v257
  %v259 = vpop.f32.mrf.mxu0
  %v260 = vpop.f32.mrf.mxu0
  %v261 = vpop.f32.mrf.mxu0
  %262 = vdwg.mxu0
  %v263 = vadd.f32 %v206, %v258
  %v264 = vtanh.pop %v263
  %v265 = vxor.u32 %v263, 2147483648
  %v266 = vmul.f32 %v265, 1.442695
  %v267 = vpow.pop %v266
  %v268 = vadd.f32 %v267, 1.0
  %v269 = vrcp.pop %v268
  %v270 = vmul.f32 1.0, %v269
  %v271 = vsel %vm42, %v264, %v270
  %273 = vrot.lane.b32.xlu0 %v205, 32
  %v274 = vpop.permute.xlu0 %273
  %v276 = vmul.f32 %v271, %v274
  %278 = vrot.lane.b32.xlu0 %v271, 64
  %v279 = vpop.permute.xlu0 %278
  %v281 = vmul.f32 %v271, %v279
  %283 = vrot.lane.b32.xlu0 %v281, 32
  %v284 = vpop.permute.xlu0 %283
  %v286 = vadd.f32 %v276, %v284
  %v287 = vtanh.pop %v286
  %289 = vrot.lane.b32.xlu0 %v287, 64
  %v290 = vpop.permute.xlu0 %289
  %v292 = vmul.f32 %v271, %v290
  %v293 = vld [vmem:[%s1] sm:$0xff]
  %vm294 = vcmp.gt.s32.totalorder %v293, 0
  %v295 = vsel %vm294, 1, 0
  %296 = vset.pattern.permute.xlu0 0
  %297 = vperm.xlu0 %296, %v295
  %v298 = vpop.permute.xlu0 %297
  %vm299 = vcmp.eq.s32.totalorder %v298, 1
  %301 = vrot.lane.b32.xlu0 %v204, 96
  %v302 = vpop.permute.xlu0 %301
  %v304 = vsel %vm299, %v292, %v302
  %v305 = vsel %vm299, %v286, %v274
  %307 = vrot.lane.b32.xlu0 %v304, 32
  %v308 = vpop.permute.xlu0 %307
  %310 = vst.msk [vmem:[#allocation2] sm:$0xff] %vm101, %v308
  %s311 = scalar_lea.vmem [#allocation3], 8
  %v312 = vld [vmem:[%s311] sm:$0xff]
  %v313 = vpack.c.bf16 %v304, %v304
  %315 = vrot.lane.b32.xlu0 %v313, 32
  %v316 = vpop.permute.xlu0 %315
  %v318 = vsel %vm101, %v316, 0
  %320 = vmatprep.subr.bf16.mxu0 0
  %321 = vmatpush1.bf16.msra.mxu0 0
  %322 = vmatprep.subr.bf16.mxu0 0
  %323 = vmatpush1.bf16.msra.mxu0 0
  %324 = vmatprep.subr.bf16.mxu0 0
  %325 = vmatpush1.bf16.msra.mxu0 0
  %326 = vmatprep.subr.bf16.mxu0 0
  %327 = vmatpush1.bf16.msra.mxu0 0
  %328 = vmatprep.subr.bf16.mxu0 0
  %329 = vmatpush1.bf16.msra.mxu0 0
  %330 = vmatprep.subr.bf16.mxu0 0
  %331 = vmatpush1.bf16.msra.mxu0 0
  %332 = vmatprep.subr.bf16.mxu0 0
  %333 = vmatpush1.bf16.msra.mxu0 %v217
  %334 = vmatprep.subr.bf16.mxu0 0
  %335 = vmatpush1.bf16.msra.mxu0 %v216
  %336 = vmatprep.subr.bf16.mxu0 0
  %337 = vmatpush2.bf16.msra.mxu0 0
  %338 = vmatprep.subr.bf16.mxu0 0
  %339 = vmatpush2.bf16.msra.mxu0 0
  %340 = vmatprep.subr.bf16.mxu0 0
  %341 = vmatpush2.bf16.msra.mxu0 0
  %342 = vmatprep.subr.bf16.mxu0 0
  %343 = vmatpush2.bf16.msra.mxu0 0
  %344 = vmatprep.subr.bf16.mxu0 0
  %345 = vmatpush2.bf16.msra.mxu0 0
  %346 = vmatprep.subr.bf16.mxu0 0
  %347 = vmatpush2.bf16.msra.mxu0 0
  %348 = vmatprep.subr.bf16.mxu0 0
  %349 = vmatpush2.bf16.msra.mxu0 0
  %350 = vmatprep.subr.bf16.mxu0 0
  %351 = vmatpush2.bf16.msra.mxu0 0
  %352 = vmatprep.mubr.bf16.mxu0 0
  %353 = vmatmul.mubr.bf16.gmra.mxu0 %v318
  %v354 = vpop.f32.mrf.mxu0
  %v355 = vadd.f32 0.0, %v354
  %v356 = vpop.f32.mrf.mxu0
  %v357 = vpop.f32.mrf.mxu0
  %v358 = vpop.f32.mrf.mxu0
  %359 = vdwg.mxu0
  %v360 = vadd.f32 %v312, %v355
  %v361 = vtanh.pop %v360
  %v362 = vxor.u32 %v360, 2147483648
  %v363 = vmul.f32 %v362, 1.442695
  %v364 = vpow.pop %v363
  %v365 = vadd.f32 %v364, 1.0
  %v366 = vrcp.pop %v365
  %v367 = vmul.f32 1.0, %v366
  %v368 = vsel %vm42, %v361, %v367
  %v369 = vmul.f32 %v368, %v305
  %371 = vrot.lane.b32.xlu0 %v368, 64
  %v372 = vpop.permute.xlu0 %371
  %v374 = vmul.f32 %v368, %v372
  %376 = vrot.lane.b32.xlu0 %v374, 32
  %v377 = vpop.permute.xlu0 %376
  %v379 = vadd.f32 %v369, %v377
  %v380 = vtanh.pop %v379
  %382 = vrot.lane.b32.xlu0 %v380, 64
  %v383 = vpop.permute.xlu0 %382
  %v385 = vmul.f32 %v368, %v383
  %v386 = vld [vmem:[%s1] sm:$0xff]
  %vm387 = vcmp.gt.s32.totalorder %v386, 1
  %v388 = vsel %vm387, 1, 0
  %389 = vset.pattern.permute.xlu0 0
  %390 = vperm.xlu0 %389, %v388
  %v391 = vpop.permute.xlu0 %390
  %vm392 = vcmp.eq.s32.totalorder %v391, 1
  %v393 = vsel %vm392, %v385, %v304
  %v394 = vsel %vm392, %v379, %v305
  %396 = vrot.lane.b32.xlu0 %v393, 32
  %v397 = vpop.permute.xlu0 %396
  %s399 = scalar_lea.vmem [#allocation2], 8
  %400 = vst.msk [vmem:[%s399] sm:$0xff] %vm101, %v397
  %s401 = scalar_lea.vmem [#allocation3], 16
  %v402 = vld [vmem:[%s401] sm:$0xff]
  %v403 = vpack.c.bf16 %v393, %v393
  %405 = vrot.lane.b32.xlu0 %v403, 32
  %v406 = vpop.permute.xlu0 %405
  %v408 = vsel %vm101, %v406, 0
  %410 = vmatprep.subr.bf16.mxu0 0
  %411 = vmatpush1.bf16.msra.mxu0 0
  %412 = vmatprep.subr.bf16.mxu0 0
  %413 = vmatpush1.bf16.msra.mxu0 0
  %414 = vmatprep.subr.bf16.mxu0 0
  %415 = vmatpush1.bf16.msra.mxu0 0
  %416 = vmatprep.subr.bf16.mxu0 0
  %417 = vmatpush1.bf16.msra.mxu0 0
  %418 = vmatprep.subr.bf16.mxu0 0
  %419 = vmatpush1.bf16.msra.mxu0 0
  %420 = vmatprep.subr.bf16.mxu0 0
  %421 = vmatpush1.bf16.msra.mxu0 0
  %422 = vmatprep.subr.bf16.mxu0 0
  %423 = vmatpush1.bf16.msra.mxu0 %v217
  %424 = vmatprep.subr.bf16.mxu0 0
  %425 = vmatpush1.bf16.msra.mxu0 %v216
  %426 = vmatprep.subr.bf16.mxu0 0
  %427 = vmatpush2.bf16.msra.mxu0 0
  %428 = vmatprep.subr.bf16.mxu0 0
  %429 = vmatpush2.bf16.msra.mxu0 0
  %430 = vmatprep.subr.bf16.mxu0 0
  %431 = vmatpush2.bf16.msra.mxu0 0
  %432 = vmatprep.subr.bf16.mxu0 0
  %433 = vmatpush2.bf16.msra.mxu0 0
  %434 = vmatprep.subr.bf16.mxu0 0
  %435 = vmatpush2.bf16.msra.mxu0 0
  %436 = vmatprep.subr.bf16.mxu0 0
  %437 = vmatpush2.bf16.msra.mxu0 0
  %438 = vmatprep.subr.bf16.mxu0 0
  %439 = vmatpush2.bf16.msra.mxu0 0
  %440 = vmatprep.subr.bf16.mxu0 0
  %441 = vmatpush2.bf16.msra.mxu0 0
  %442 = vmatprep.mubr.bf16.mxu0 0
  %443 = vmatmul.mubr.bf16.gmra.mxu0 %v408
  %v444 = vpop.f32.mrf.mxu0
  %v445 = vadd.f32 0.0, %v444
  %v446 = vpop.f32.mrf.mxu0
  %v447 = vpop.f32.mrf.mxu0
  %v448 = vpop.f32.mrf.mxu0
  %449 = vdwg.mxu0
  %v450 = vadd.f32 %v402, %v445
  %v451 = vtanh.pop %v450
  %v452 = vxor.u32 %v450, 2147483648
  %v453 = vmul.f32 %v452, 1.442695
  %v454 = vpow.pop %v453
  %v455 = vadd.f32 %v454, 1.0
  %v456 = vrcp.pop %v455
  %v457 = vmul.f32 1.0, %v456
  %v458 = vsel %vm42, %v451, %v457
  %v459 = vmul.f32 %v458, %v394
  %461 = vrot.lane.b32.xlu0 %v458, 64
  %v462 = vpop.permute.xlu0 %461
  %v464 = vmul.f32 %v458, %v462
  %466 = vrot.lane.b32.xlu0 %v464, 32
  %v467 = vpop.permute.xlu0 %466
  %v469 = vadd.f32 %v459, %v467
  %v470 = vtanh.pop %v469
  %472 = vrot.lane.b32.xlu0 %v470, 64
  %v473 = vpop.permute.xlu0 %472
  %v475 = vmul.f32 %v458, %v473
  %v476 = vld [vmem:[%s1] sm:$0xff]
  %vm477 = vcmp.gt.s32.totalorder %v476, 2
  %v478 = vsel %vm477, 1, 0
  %479 = vset.pattern.permute.xlu0 0
  %480 = vperm.xlu0 %479, %v478
  %v481 = vpop.permute.xlu0 %480
  %vm482 = vcmp.eq.s32.totalorder %v481, 1
  %v483 = vsel %vm482, %v475, %v393
  %v484 = vsel %vm482, %v469, %v394
  %486 = vrot.lane.b32.xlu0 %v483, 32
  %v487 = vpop.permute.xlu0 %486
  %s489 = scalar_lea.vmem [#allocation2], 16
  %490 = vst.msk [vmem:[%s489] sm:$0xff] %vm101, %v487
  %s491 = scalar_lea.vmem [#allocation3], 24
  %v492 = vld [vmem:[%s491] sm:$0xff]
  %v493 = vpack.c.bf16 %v483, %v483
  %495 = vrot.lane.b32.xlu0 %v493, 32
  %v496 = vpop.permute.xlu0 %495
  %v498 = vsel %vm101, %v496, 0
  %500 = vmatprep.subr.bf16.mxu0 0
  %501 = vmatpush1.bf16.msra.mxu0 0
  %502 = vmatprep.subr.bf16.mxu0 0
  %503 = vmatpush1.bf16.msra.mxu0 0
  %504 = vmatprep.subr.bf16.mxu0 0
  %505 = vmatpush1.bf16.msra.mxu0 0
  %506 = vmatprep.subr.bf16.mxu0 0
  %507 = vmatpush1.bf16.msra.mxu0 0
  %508 = vmatprep.subr.bf16.mxu0 0
  %509 = vmatpush1.bf16.msra.mxu0 0
  %510 = vmatprep.subr.bf16.mxu0 0
  %511 = vmatpush1.bf16.msra.mxu0 0
  %512 = vmatprep.subr.bf16.mxu0 0
  %513 = vmatpush1.bf16.msra.mxu0 %v217
  %514 = vmatprep.subr.bf16.mxu0 0
  %515 = vmatpush1.bf16.msra.mxu0 %v216
  %516 = vmatprep.subr.bf16.mxu0 0
  %517 = vmatpush2.bf16.msra.mxu0 0
  %518 = vmatprep.subr.bf16.mxu0 0
  %519 = vmatpush2.bf16.msra.mxu0 0
  %520 = vmatprep.subr.bf16.mxu0 0
  %521 = vmatpush2.bf16.msra.mxu0 0
  %522 = vmatprep.subr.bf16.mxu0 0
  %523 = vmatpush2.bf16.msra.mxu0 0
  %524 = vmatprep.subr.bf16.mxu0 0
  %525 = vmatpush2.bf16.msra.mxu0 0
  %526 = vmatprep.subr.bf16.mxu0 0
  %527 = vmatpush2.bf16.msra.mxu0 0
  %528 = vmatprep.subr.bf16.mxu0 0
  %529 = vmatpush2.bf16.msra.mxu0 0
  %530 = vmatprep.subr.bf16.mxu0 0
  %531 = vmatpush2.bf16.msra.mxu0 0
  %532 = vmatprep.mubr.bf16.mxu0 0
  %533 = vmatmul.mubr.bf16.gmra.mxu0 %v498
  %v534 = vpop.f32.mrf.mxu0
  %v535 = vadd.f32 0.0, %v534
  %v536 = vpop.f32.mrf.mxu0
  %v537 = vpop.f32.mrf.mxu0
  %v538 = vpop.f32.mrf.mxu0
  %539 = vdwg.mxu0
  %v540 = vadd.f32 %v492, %v535
  %v541 = vtanh.pop %v540
  %v542 = vxor.u32 %v540, 2147483648
  %v543 = vmul.f32 %v542, 1.442695
  %v544 = vpow.pop %v543
  %v545 = vadd.f32 %v544, 1.0
  %v546 = vrcp.pop %v545
  %v547 = vmul.f32 1.0, %v546
  %v548 = vsel %vm42, %v541, %v547
  %v549 = vmul.f32 %v548, %v484
  %551 = vrot.lane.b32.xlu0 %v548, 64
  %v552 = vpop.permute.xlu0 %551
  %v554 = vmul.f32 %v548, %v552
  %556 = vrot.lane.b32.xlu0 %v554, 32
  %v557 = vpop.permute.xlu0 %556
  %v559 = vadd.f32 %v549, %v557
  %v560 = vtanh.pop %v559
  %562 = vrot.lane.b32.xlu0 %v560, 64
  %v563 = vpop.permute.xlu0 %562
  %v565 = vmul.f32 %v548, %v563
  %v566 = vld [vmem:[%s1] sm:$0xff]
  %vm567 = vcmp.gt.s32.totalorder %v566, 3
  %v568 = vsel %vm567, 1, 0
  %569 = vset.pattern.permute.xlu0 0
  %570 = vperm.xlu0 %569, %v568
  %v571 = vpop.permute.xlu0 %570
  %vm572 = vcmp.eq.s32.totalorder %v571, 1
  %v573 = vsel %vm572, %v565, %v483
  %v574 = vsel %vm572, %v559, %v484
  %576 = vrot.lane.b32.xlu0 %v573, 32
  %v577 = vpop.permute.xlu0 %576
  %s579 = scalar_lea.vmem [#allocation2], 24
  %580 = vst.msk [vmem:[%s579] sm:$0xff] %vm101, %v577
  %s581 = scalar_lea.vmem [#allocation3], 32
  %v582 = vld [vmem:[%s581] sm:$0xff]
  %v583 = vpack.c.bf16 %v573, %v573
  %585 = vrot.lane.b32.xlu0 %v583, 32
  %v586 = vpop.permute.xlu0 %585
  %v588 = vsel %vm101, %v586, 0
  %590 = vmatprep.subr.bf16.mxu0 0
  %591 = vmatpush1.bf16.msra.mxu0 0
  %592 = vmatprep.subr.bf16.mxu0 0
  %593 = vmatpush1.bf16.msra.mxu0 0
  %594 = vmatprep.subr.bf16.mxu0 0
  %595 = vmatpush1.bf16.msra.mxu0 0
  %596 = vmatprep.subr.bf16.mxu0 0
  %597 = vmatpush1.bf16.msra.mxu0 0
  %598 = vmatprep.subr.bf16.mxu0 0
  %599 = vmatpush1.bf16.msra.mxu0 0
  %600 = vmatprep.subr.bf16.mxu0 0
  %601 = vmatpush1.bf16.msra.mxu0 0
  %602 = vmatprep.subr.bf16.mxu0 0
  %603 = vmatpush1.bf16.msra.mxu0 %v217
  %604 = vmatprep.subr.bf16.mxu0 0
  %605 = vmatpush1.bf16.msra.mxu0 %v216
  %606 = vmatprep.subr.bf16.mxu0 0
  %607 = vmatpush2.bf16.msra.mxu0 0
  %608 = vmatprep.subr.bf16.mxu0 0
  %609 = vmatpush2.bf16.msra.mxu0 0
  %610 = vmatprep.subr.bf16.mxu0 0
  %611 = vmatpush2.bf16.msra.mxu0 0
  %612 = vmatprep.subr.bf16.mxu0 0
  %613 = vmatpush2.bf16.msra.mxu0 0
  %614 = vmatprep.subr.bf16.mxu0 0
  %615 = vmatpush2.bf16.msra.mxu0 0
  %616 = vmatprep.subr.bf16.mxu0 0
  %617 = vmatpush2.bf16.msra.mxu0 0
  %618 = vmatprep.subr.bf16.mxu0 0
  %619 = vmatpush2.bf16.msra.mxu0 0
  %620 = vmatprep.subr.bf16.mxu0 0
  %621 = vmatpush2.bf16.msra.mxu0 0
  %622 = vmatprep.mubr.bf16.mxu0 0
  %623 = vmatmul.mubr.bf16.gmra.mxu0 %v588
  %v624 = vpop.f32.mrf.mxu0
  %v625 = vadd.f32 0.0, %v624
  %v626 = vpop.f32.mrf.mxu0
  %v627 = vpop.f32.mrf.mxu0
  %v628 = vpop.f32.mrf.mxu0
  %629 = vdwg.mxu0
  %v630 = vadd.f32 %v582, %v625
  %v631 = vtanh.pop %v630
  %v632 = vxor.u32 %v630, 2147483648
  %v633 = vmul.f32 %v632, 1.442695
  %v634 = vpow.pop %v633
  %v635 = vadd.f32 %v634, 1.0
  %v636 = vrcp.pop %v635
  %v637 = vmul.f32 1.0, %v636
  %v638 = vsel %vm42, %v631, %v637
  %v639 = vmul.f32 %v638, %v574
  %641 = vrot.lane.b32.xlu0 %v638, 64
  %v642 = vpop.permute.xlu0 %641
  %v644 = vmul.f32 %v638, %v642
  %646 = vrot.lane.b32.xlu0 %v644, 32
  %v647 = vpop.permute.xlu0 %646
  %v649 = vadd.f32 %v639, %v647
  %v650 = vtanh.pop %v649
  %652 = vrot.lane.b32.xlu0 %v650, 64
  %v653 = vpop.permute.xlu0 %652
  %v655 = vmul.f32 %v638, %v653
  %v656 = vld [vmem:[%s1] sm:$0xff]
  %vm657 = vcmp.gt.s32.totalorder %v656, 4
  %v658 = vsel %vm657, 1, 0
  %659 = vset.pattern.permute.xlu0 0
  %660 = vperm.xlu0 %659, %v658
  %v661 = vpop.permute.xlu0 %660
  %vm662 = vcmp.eq.s32.totalorder %v661, 1
  %v663 = vsel %vm662, %v655, %v573
  %v664 = vsel %vm662, %v649, %v574
  %666 = vrot.lane.b32.xlu0 %v663, 32
  %v667 = vpop.permute.xlu0 %666
  %s669 = scalar_lea.vmem [#allocation2], 32
  %670 = vst.msk [vmem:[%s669] sm:$0xff] %vm101, %v667
  %s671 = scalar_lea.vmem [#allocation3], 40
  %v672 = vld [vmem:[%s671] sm:$0xff]
  %v673 = vpack.c.bf16 %v663, %v663
  %675 = vrot.lane.b32.xlu0 %v673, 32
  %v676 = vpop.permute.xlu0 %675
  %v678 = vsel %vm101, %v676, 0
  %680 = vmatprep.subr.bf16.mxu0 0
  %681 = vmatpush1.bf16.msra.mxu0 0
  %682 = vmatprep.subr.bf16.mxu0 0
  %683 = vmatpush1.bf16.msra.mxu0 0
  %684 = vmatprep.subr.bf16.mxu0 0
  %685 = vmatpush1.bf16.msra.mxu0 0
  %686 = vmatprep.subr.bf16.mxu0 0
  %687 = vmatpush1.bf16.msra.mxu0 0
  %688 = vmatprep.subr.bf16.mxu0 0
  %689 = vmatpush1.bf16.msra.mxu0 0
  %690 = vmatprep.subr.bf16.mxu0 0
  %691 = vmatpush1.bf16.msra.mxu0 0
  %692 = vmatprep.subr.bf16.mxu0 0
  %693 = vmatpush1.bf16.msra.mxu0 %v217
  %694 = vmatprep.subr.bf16.mxu0 0
  %695 = vmatpush1.bf16.msra.mxu0 %v216
  %696 = vmatprep.subr.bf16.mxu0 0
  %697 = vmatpush2.bf16.msra.mxu0 0
  %698 = vmatprep.subr.bf16.mxu0 0
  %699 = vmatpush2.bf16.msra.mxu0 0
  %700 = vmatprep.subr.bf16.mxu0 0
  %701 = vmatpush2.bf16.msra.mxu0 0
  %702 = vmatprep.subr.bf16.mxu0 0
  %703 = vmatpush2.bf16.msra.mxu0 0
  %704 = vmatprep.subr.bf16.mxu0 0
  %705 = vmatpush2.bf16.msra.mxu0 0
  %706 = vmatprep.subr.bf16.mxu0 0
  %707 = vmatpush2.bf16.msra.mxu0 0
  %708 = vmatprep.subr.bf16.mxu0 0
  %709 = vmatpush2.bf16.msra.mxu0 0
  %710 = vmatprep.subr.bf16.mxu0 0
  %711 = vmatpush2.bf16.msra.mxu0 0
  %712 = vmatprep.mubr.bf16.mxu0 0
  %713 = vmatmul.mubr.bf16.gmra.mxu0 %v678
  %v714 = vpop.f32.mrf.mxu0
  %v715 = vadd.f32 0.0, %v714
  %v716 = vpop.f32.mrf.mxu0
  %v717 = vpop.f32.mrf.mxu0
  %v718 = vpop.f32.mrf.mxu0
  %719 = vdwg.mxu0
  %v720 = vadd.f32 %v672, %v715
  %v721 = vtanh.pop %v720
  %v722 = vxor.u32 %v720, 2147483648
  %v723 = vmul.f32 %v722, 1.442695
  %v724 = vpow.pop %v723
  %v725 = vadd.f32 %v724, 1.0
  %v726 = vrcp.pop %v725
  %v727 = vmul.f32 1.0, %v726
  %v728 = vsel %vm42, %v721, %v727
  %v729 = vmul.f32 %v728, %v664
  %731 = vrot.lane.b32.xlu0 %v728, 64
  %v732 = vpop.permute.xlu0 %731
  %v734 = vmul.f32 %v728, %v732
  %736 = vrot.lane.b32.xlu0 %v734, 32
  %v737 = vpop.permute.xlu0 %736
  %v739 = vadd.f32 %v729, %v737
  %v740 = vtanh.pop %v739
  %742 = vrot.lane.b32.xlu0 %v740, 64
  %v743 = vpop.permute.xlu0 %742
  %v745 = vmul.f32 %v728, %v743
  %v746 = vld [vmem:[%s1] sm:$0xff]
  %vm747 = vcmp.gt.s32.totalorder %v746, 5
  %v748 = vsel %vm747, 1, 0
  %749 = vset.pattern.permute.xlu0 0
  %750 = vperm.xlu0 %749, %v748
  %v751 = vpop.permute.xlu0 %750
  %vm752 = vcmp.eq.s32.totalorder %v751, 1
  %v753 = vsel %vm752, %v745, %v663
  %v754 = vsel %vm752, %v739, %v664
  %756 = vrot.lane.b32.xlu0 %v753, 32
  %v757 = vpop.permute.xlu0 %756
  %s759 = scalar_lea.vmem [#allocation2], 40
  %760 = vst.msk [vmem:[%s759] sm:$0xff] %vm101, %v757
  %s761 = scalar_lea.vmem [#allocation3], 48
  %v762 = vld [vmem:[%s761] sm:$0xff]
  %v763 = vpack.c.bf16 %v753, %v753
  %765 = vrot.lane.b32.xlu0 %v763, 32
  %v766 = vpop.permute.xlu0 %765
  %v768 = vsel %vm101, %v766, 0
  %770 = vmatprep.subr.bf16.mxu0 0
  %771 = vmatpush1.bf16.msra.mxu0 0
  %772 = vmatprep.subr.bf16.mxu0 0
  %773 = vmatpush1.bf16.msra.mxu0 0
  %774 = vmatprep.subr.bf16.mxu0 0
  %775 = vmatpush1.bf16.msra.mxu0 0
  %776 = vmatprep.subr.bf16.mxu0 0
  %777 = vmatpush1.bf16.msra.mxu0 0
  %778 = vmatprep.subr.bf16.mxu0 0
  %779 = vmatpush1.bf16.msra.mxu0 0
  %780 = vmatprep.subr.bf16.mxu0 0
  %781 = vmatpush1.bf16.msra.mxu0 0
  %782 = vmatprep.subr.bf16.mxu0 0
  %783 = vmatpush1.bf16.msra.mxu0 %v217
  %784 = vmatprep.subr.bf16.mxu0 0
  %785 = vmatpush1.bf16.msra.mxu0 %v216
  %786 = vmatprep.subr.bf16.mxu0 0
  %787 = vmatpush2.bf16.msra.mxu0 0
  %788 = vmatprep.subr.bf16.mxu0 0
  %789 = vmatpush2.bf16.msra.mxu0 0
  %790 = vmatprep.subr.bf16.mxu0 0
  %791 = vmatpush2.bf16.msra.mxu0 0
  %792 = vmatprep.subr.bf16.mxu0 0
  %793 = vmatpush2.bf16.msra.mxu0 0
  %794 = vmatprep.subr.bf16.mxu0 0
  %795 = vmatpush2.bf16.msra.mxu0 0
  %796 = vmatprep.subr.bf16.mxu0 0
  %797 = vmatpush2.bf16.msra.mxu0 0
  %798 = vmatprep.subr.bf16.mxu0 0
  %799 = vmatpush2.bf16.msra.mxu0 0
  %800 = vmatprep.subr.bf16.mxu0 0
  %801 = vmatpush2.bf16.msra.mxu0 0
  %802 = vmatprep.mubr.bf16.mxu0 0
  %803 = vmatmul.mubr.bf16.gmra.mxu0 %v768
  %v804 = vpop.f32.mrf.mxu0
  %v805 = vadd.f32 0.0, %v804
  %v806 = vpop.f32.mrf.mxu0
  %v807 = vpop.f32.mrf.mxu0
  %v808 = vpop.f32.mrf.mxu0
  %809 = vdwg.mxu0
  %v810 = vadd.f32 %v762, %v805
  %v811 = vtanh.pop %v810
  %v812 = vxor.u32 %v810, 2147483648
  %v813 = vmul.f32 %v812, 1.442695
  %v814 = vpow.pop %v813
  %v815 = vadd.f32 %v814, 1.0
  %v816 = vrcp.pop %v815
  %v817 = vmul.f32 1.0, %v816
  %v818 = vsel %vm42, %v811, %v817
  %v819 = vmul.f32 %v818, %v754
  %821 = vrot.lane.b32.xlu0 %v818, 64
  %v822 = vpop.permute.xlu0 %821
  %v824 = vmul.f32 %v818, %v822
  %826 = vrot.lane.b32.xlu0 %v824, 32
  %v827 = vpop.permute.xlu0 %826
  %v829 = vadd.f32 %v819, %v827
  %v830 = vtanh.pop %v829
  %832 = vrot.lane.b32.xlu0 %v830, 64
  %v833 = vpop.permute.xlu0 %832
  %v835 = vmul.f32 %v818, %v833
  %v836 = vld [vmem:[%s1] sm:$0xff]
  %vm837 = vcmp.gt.s32.totalorder %v836, 6
  %v838 = vsel %vm837, 1, 0
  %839 = vset.pattern.permute.xlu0 0
  %840 = vperm.xlu0 %839, %v838
  %v841 = vpop.permute.xlu0 %840
  %vm842 = vcmp.eq.s32.totalorder %v841, 1
  %v843 = vsel %vm842, %v835, %v753
  %v844 = vsel %vm842, %v829, %v754
  %846 = vrot.lane.b32.xlu0 %v843, 32
  %v847 = vpop.permute.xlu0 %846
  %s849 = scalar_lea.vmem [#allocation2], 48
  %850 = vst.msk [vmem:[%s849] sm:$0xff] %vm101, %v847
  %s851 = scalar_lea.vmem [#allocation3], 56
  %v852 = vld [vmem:[%s851] sm:$0xff]
  %v853 = vpack.c.bf16 %v843, %v843
  %855 = vrot.lane.b32.xlu0 %v853, 32
  %v856 = vpop.permute.xlu0 %855
  %v858 = vsel %vm101, %v856, 0
  %860 = vmatprep.subr.bf16.mxu0 0
  %861 = vmatpush1.bf16.msra.mxu0 0
  %862 = vmatprep.subr.bf16.mxu0 0
  %863 = vmatpush1.bf16.msra.mxu0 0
  %864 = vmatprep.subr.bf16.mxu0 0
  %865 = vmatpush1.bf16.msra.mxu0 0
  %866 = vmatprep.subr.bf16.mxu0 0
  %867 = vmatpush1.bf16.msra.mxu0 0
  %868 = vmatprep.subr.bf16.mxu0 0
  %869 = vmatpush1.bf16.msra.mxu0 0
  %870 = vmatprep.subr.bf16.mxu0 0
  %871 = vmatpush1.bf16.msra.mxu0 0
  %872 = vmatprep.subr.bf16.mxu0 0
  %873 = vmatpush1.bf16.msra.mxu0 %v217
  %874 = vmatprep.subr.bf16.mxu0 0
  %875 = vmatpush1.bf16.msra.mxu0 %v216
  %876 = vmatprep.subr.bf16.mxu0 0
  %877 = vmatpush2.bf16.msra.mxu0 0
  %878 = vmatprep.subr.bf16.mxu0 0
  %879 = vmatpush2.bf16.msra.mxu0 0
  %880 = vmatprep.subr.bf16.mxu0 0
  %881 = vmatpush2.bf16.msra.mxu0 0
  %882 = vmatprep.subr.bf16.mxu0 0
  %883 = vmatpush2.bf16.msra.mxu0 0
  %884 = vmatprep.subr.bf16.mxu0 0
  %885 = vmatpush2.bf16.msra.mxu0 0
  %886 = vmatprep.subr.bf16.mxu0 0
  %887 = vmatpush2.bf16.msra.mxu0 0
  %888 = vmatprep.subr.bf16.mxu0 0
  %889 = vmatpush2.bf16.msra.mxu0 0
  %890 = vmatprep.subr.bf16.mxu0 0
  %891 = vmatpush2.bf16.msra.mxu0 0
  %892 = vmatprep.mubr.bf16.mxu0 0
  %893 = vmatmul.mubr.bf16.gmra.mxu0 %v858
  %v894 = vpop.f32.mrf.mxu0
  %v895 = vadd.f32 0.0, %v894
  %v896 = vpop.f32.mrf.mxu0
  %v897 = vpop.f32.mrf.mxu0
  %v898 = vpop.f32.mrf.mxu0
  %899 = vdwg.mxu0
  %v900 = vadd.f32 %v852, %v895
  %v901 = vtanh.pop %v900
  %v902 = vxor.u32 %v900, 2147483648
  %v903 = vmul.f32 %v902, 1.442695
  %v904 = vpow.pop %v903
  %v905 = vadd.f32 %v904, 1.0
  %v906 = vrcp.pop %v905
  %v907 = vmul.f32 1.0, %v906
  %v908 = vsel %vm42, %v901, %v907
  %v909 = vmul.f32 %v908, %v844
  %911 = vrot.lane.b32.xlu0 %v908, 64
  %v912 = vpop.permute.xlu0 %911
  %v914 = vmul.f32 %v908, %v912
  %916 = vrot.lane.b32.xlu0 %v914, 32
  %v917 = vpop.permute.xlu0 %916
  %v919 = vadd.f32 %v909, %v917
  %v920 = vtanh.pop %v919
  %922 = vrot.lane.b32.xlu0 %v920, 64
  %v923 = vpop.permute.xlu0 %922
  %v925 = vmul.f32 %v908, %v923
  %v926 = vld [vmem:[%s1] sm:$0xff]
  %vm927 = vcmp.gt.s32.totalorder %v926, 7
  %v928 = vsel %vm927, 1, 0
  %929 = vset.pattern.permute.xlu0 0
  %930 = vperm.xlu0 %929, %v928
  %v931 = vpop.permute.xlu0 %930
  %vm932 = vcmp.eq.s32.totalorder %v931, 1
  %v933 = vsel %vm932, %v925, %v843
  %v934 = vsel %vm932, %v919, %v844
  %936 = vrot.lane.b32.xlu0 %v933, 32
  %v937 = vpop.permute.xlu0 %936
  %s939 = scalar_lea.vmem [#allocation2], 56
  %940 = vst.msk [vmem:[%s939] sm:$0xff] %vm101, %v937
  %s941 = scalar_lea.vmem [#allocation3], 64
  %v942 = vld [vmem:[%s941] sm:$0xff]
  %v943 = vpack.c.bf16 %v933, %v933
  %945 = vrot.lane.b32.xlu0 %v943, 32
  %v946 = vpop.permute.xlu0 %945
  %v948 = vsel %vm101, %v946, 0
  %950 = vmatprep.subr.bf16.mxu0 0
  %951 = vmatpush1.bf16.msra.mxu0 0
  %952 = vmatprep.subr.bf16.mxu0 0
  %953 = vmatpush1.bf16.msra.mxu0 0
  %954 = vmatprep.subr.bf16.mxu0 0
  %955 = vmatpush1.bf16.msra.mxu0 0
  %956 = vmatprep.subr.bf16.mxu0 0
  %957 = vmatpush1.bf16.msra.mxu0 0
  %958 = vmatprep.subr.bf16.mxu0 0
  %959 = vmatpush1.bf16.msra.mxu0 0
  %960 = vmatprep.subr.bf16.mxu0 0
  %961 = vmatpush1.bf16.msra.mxu0 0
  %962 = vmatprep.subr.bf16.mxu0 0
  %963 = vmatpush1.bf16.msra.mxu0 %v217
  %964 = vmatprep.subr.bf16.mxu0 0
  %965 = vmatpush1.bf16.msra.mxu0 %v216
  %966 = vmatprep.subr.bf16.mxu0 0
  %967 = vmatpush2.bf16.msra.mxu0 0
  %968 = vmatprep.subr.bf16.mxu0 0
  %969 = vmatpush2.bf16.msra.mxu0 0
  %970 = vmatprep.subr.bf16.mxu0 0
  %971 = vmatpush2.bf16.msra.mxu0 0
  %972 = vmatprep.subr.bf16.mxu0 0
  %973 = vmatpush2.bf16.msra.mxu0 0
  %974 = vmatprep.subr.bf16.mxu0 0
  %975 = vmatpush2.bf16.msra.mxu0 0
  %976 = vmatprep.subr.bf16.mxu0 0
  %977 = vmatpush2.bf16.msra.mxu0 0
  %978 = vmatprep.subr.bf16.mxu0 0
  %979 = vmatpush2.bf16.msra.mxu0 0
  %980 = vmatprep.subr.bf16.mxu0 0
  %981 = vmatpush2.bf16.msra.mxu0 0
  %982 = vmatprep.mubr.bf16.mxu0 0
  %983 = vmatmul.mubr.bf16.gmra.mxu0 %v948
  %v984 = vpop.f32.mrf.mxu0
  %v985 = vadd.f32 0.0, %v984
  %v986 = vpop.f32.mrf.mxu0
  %v987 = vpop.f32.mrf.mxu0
  %v988 = vpop.f32.mrf.mxu0
  %989 = vdwg.mxu0
  %v990 = vadd.f32 %v942, %v985
  %v991 = vtanh.pop %v990
  %v992 = vxor.u32 %v990, 2147483648
  %v993 = vmul.f32 %v992, 1.442695
  %v994 = vpow.pop %v993
  %v995 = vadd.f32 %v994, 1.0
  %v996 = vrcp.pop %v995
  %v997 = vmul.f32 1.0, %v996
  %v998 = vsel %vm42, %v991, %v997
  %v999 = vmul.f32 %v998, %v934
  %1001 = vrot.lane.b32.xlu0 %v998, 64
  %v1002 = vpop.permute.xlu0 %1001
  %v1004 = vmul.f32 %v998, %v1002
  %1006 = vrot.lane.b32.xlu0 %v1004, 32
  %v1007 = vpop.permute.xlu0 %1006
  %v1009 = vadd.f32 %v999, %v1007
  %v1010 = vtanh.pop %v1009
  %1012 = vrot.lane.b32.xlu0 %v1010, 64
  %v1013 = vpop.permute.xlu0 %1012
  %v1015 = vmul.f32 %v998, %v1013
  %v1016 = vld [vmem:[%s1] sm:$0xff]
  %vm1017 = vcmp.gt.s32.totalorder %v1016, 8
  %v1018 = vsel %vm1017, 1, 0
  %1019 = vset.pattern.permute.xlu0 0
  %1020 = vperm.xlu0 %1019, %v1018
  %v1021 = vpop.permute.xlu0 %1020
  %vm1022 = vcmp.eq.s32.totalorder %v1021, 1
  %v1023 = vsel %vm1022, %v1015, %v933
  %v1024 = vsel %vm1022, %v1009, %v934
  %1026 = vrot.lane.b32.xlu0 %v1023, 32
  %v1027 = vpop.permute.xlu0 %1026
  %s1029 = scalar_lea.vmem [#allocation2], 64
  %1030 = vst.msk [vmem:[%s1029] sm:$0xff] %vm101, %v1027
  %s1031 = scalar_lea.vmem [#allocation3], 72
  %v1032 = vld [vmem:[%s1031] sm:$0xff]
  %v1033 = vpack.c.bf16 %v1023, %v1023
  %1035 = vrot.lane.b32.xlu0 %v1033, 32
  %v1036 = vpop.permute.xlu0 %1035
  %v1038 = vsel %vm101, %v1036, 0
  %1040 = vmatprep.subr.bf16.mxu0 0
  %1041 = vmatpush1.bf16.msra.mxu0 0
  %1042 = vmatprep.subr.bf16.mxu0 0
  %1043 = vmatpush1.bf16.msra.mxu0 0
  %1044 = vmatprep.subr.bf16.mxu0 0
  %1045 = vmatpush1.bf16.msra.mxu0 0
  %1046 = vmatprep.subr.bf16.mxu0 0
  %1047 = vmatpush1.bf16.msra.mxu0 0
  %1048 = vmatprep.subr.bf16.mxu0 0
  %1049 = vmatpush1.bf16.msra.mxu0 0
  %1050 = vmatprep.subr.bf16.mxu0 0
  %1051 = vmatpush1.bf16.msra.mxu0 0
  %1052 = vmatprep.subr.bf16.mxu0 0
  %1053 = vmatpush1.bf16.msra.mxu0 %v217
  %1054 = vmatprep.subr.bf16.mxu0 0
  %1055 = vmatpush1.bf16.msra.mxu0 %v216
  %1056 = vmatprep.subr.bf16.mxu0 0
  %1057 = vmatpush2.bf16.msra.mxu0 0
  %1058 = vmatprep.subr.bf16.mxu0 0
  %1059 = vmatpush2.bf16.msra.mxu0 0
  %1060 = vmatprep.subr.bf16.mxu0 0
  %1061 = vmatpush2.bf16.msra.mxu0 0
  %1062 = vmatprep.subr.bf16.mxu0 0
  %1063 = vmatpush2.bf16.msra.mxu0 0
  %1064 = vmatprep.subr.bf16.mxu0 0
  %1065 = vmatpush2.bf16.msra.mxu0 0
  %1066 = vmatprep.subr.bf16.mxu0 0
  %1067 = vmatpush2.bf16.msra.mxu0 0
  %1068 = vmatprep.subr.bf16.mxu0 0
  %1069 = vmatpush2.bf16.msra.mxu0 0
  %1070 = vmatprep.subr.bf16.mxu0 0
  %1071 = vmatpush2.bf16.msra.mxu0 0
  %1072 = vmatprep.mubr.bf16.mxu0 0
  %1073 = vmatmul.mubr.bf16.gmra.mxu0 %v1038
  %v1074 = vpop.f32.mrf.mxu0
  %v1075 = vadd.f32 0.0, %v1074
  %v1076 = vpop.f32.mrf.mxu0
  %v1077 = vpop.f32.mrf.mxu0
  %v1078 = vpop.f32.mrf.mxu0
  %1079 = vdwg.mxu0
  %v1080 = vadd.f32 %v1032, %v1075
  %v1081 = vtanh.pop %v1080
  %v1082 = vxor.u32 %v1080, 2147483648
  %v1083 = vmul.f32 %v1082, 1.442695
  %v1084 = vpow.pop %v1083
  %v1085 = vadd.f32 %v1084, 1.0
  %v1086 = vrcp.pop %v1085
  %v1087 = vmul.f32 1.0, %v1086
  %v1088 = vsel %vm42, %v1081, %v1087
  %v1089 = vmul.f32 %v1088, %v1024
  %1091 = vrot.lane.b32.xlu0 %v1088, 64
  %v1092 = vpop.permute.xlu0 %1091
  %v1094 = vmul.f32 %v1088, %v1092
  %1096 = vrot.lane.b32.xlu0 %v1094, 32
  %v1097 = vpop.permute.xlu0 %1096
  %v1099 = vadd.f32 %v1089, %v1097
  %v1100 = vtanh.pop %v1099
  %1102 = vrot.lane.b32.xlu0 %v1100, 64
  %v1103 = vpop.permute.xlu0 %1102
  %v1105 = vmul.f32 %v1088, %v1103
  %v1106 = vld [vmem:[%s1] sm:$0xff]
  %vm1107 = vcmp.gt.s32.totalorder %v1106, 9
  %v1108 = vsel %vm1107, 1, 0
  %1109 = vset.pattern.permute.xlu0 0
  %1110 = vperm.xlu0 %1109, %v1108
  %v1111 = vpop.permute.xlu0 %1110
  %vm1112 = vcmp.eq.s32.totalorder %v1111, 1
  %v1113 = vsel %vm1112, %v1105, %v1023
  %v1114 = vsel %vm1112, %v1099, %v1024
  %1116 = vrot.lane.b32.xlu0 %v1113, 32
  %v1117 = vpop.permute.xlu0 %1116
  %s1119 = scalar_lea.vmem [#allocation2], 72
  %1120 = vst.msk [vmem:[%s1119] sm:$0xff] %vm101, %v1117
  %1121 = vst.msk [vmem:[%s10] sm:$0xff] %vm101, %v1117
  %1123 = vrot.lane.b32.xlu0 %v1114, 96
  %v1124 = vpop.permute.xlu0 %1123
  %1126 = vst.msk [vmem:[%s11] sm:$0xff] %vm101, %v1124
  %v1127 = vld [vmem:[#allocation2] sm:$0xff]
  %v1128 = vld [vmem:[#allocation2 + $0x8] sm:$0xff]
  %v1129 = vld [vmem:[#allocation2 + $0x10] sm:$0xff]
  %v1130 = vld [vmem:[#allocation2 + $0x18] sm:$0xff]
  %v1131 = vld [vmem:[#allocation2 + $0x20] sm:$0xff]
  %v1132 = vld [vmem:[#allocation2 + $0x28] sm:$0xff]
  %v1133 = vld [vmem:[#allocation2 + $0x30] sm:$0xff]
  %v1134 = vld [vmem:[#allocation2 + $0x38] sm:$0xff]
  %v1135 = vld [vmem:[#allocation2 + $0x40] sm:$0xff]
  %v1136 = vld [vmem:[#allocation2 + $0x48] sm:$0xff]
  %v1137 = vpack.c.bf16 %v1128, %v1127
  %v1138 = vpack.c.bf16 %v1130, %v1129
  %v1139 = vpack.c.bf16 %v1132, %v1131
  %v1140 = vpack.c.bf16 %v1134, %v1133
  %v1141 = vpack.c.bf16 %v1136, %v1135
  %v1142 = vld [vmem:[%s5] sm:$0xf]
  %v1143 = vld [vmem:[%s5 + $0x4] sm:$0xf]
  %v1144 = vld [vmem:[%s5 + $0x8] sm:$0xf]
  %v1145 = vld [vmem:[%s5 + $0xc] sm:$0xf]
  %v1146 = vld [vmem:[%s9] sm:$0x1]
  %v1148 = vlaneseq
  %v1149 = vshrl.u32 %v1148, 7
  %v1150 = vsub.s32 0, %v1149
  %v1151 = vrot.slane %v1146, %v1150
  %v1157 = vunpack.c.l.b16 %v1142
  %v1158 = vunpack.c.l.b16 %v1143
  %v1159 = vunpack.c.l.b16 %v1144
  %v1160 = vunpack.c.l.b16 %v1145
  %v1161 = vpack.c.b16 %v1158, %v1157
  %v1162 = vpack.c.b16 %v1160, %v1159
  %v1166 = vsel %vm101, %v1137, 0
  %v1169 = vsel %vm101, %v1138, 0
  %v1172 = vsel %vm101, %v1139, 0
  %v1175 = vsel %vm101, %v1140, 0
  %v1178 = vsel %vm101, %v1141, 0
  %1180 = vmatprep.subr.bf16.mxu0 0
  %1181 = vmatpush1.bf16.msra.mxu0 0
  %1182 = vmatprep.subr.bf16.mxu0 0
  %1183 = vmatpush1.bf16.msra.mxu0 0
  %1184 = vmatprep.subr.bf16.mxu0 0
  %1185 = vmatpush1.bf16.msra.mxu0 0
  %1186 = vmatprep.subr.bf16.mxu0 0
  %1187 = vmatpush1.bf16.msra.mxu0 0
  %1188 = vmatprep.subr.bf16.mxu0 0
  %1189 = vmatpush1.bf16.msra.mxu0 0
  %1190 = vmatprep.subr.bf16.mxu0 0
  %1191 = vmatpush1.bf16.msra.mxu0 0
  %1192 = vmatprep.subr.bf16.mxu0 0
  %1193 = vmatpush1.bf16.msra.mxu0 %v1162
  %1194 = vmatprep.subr.bf16.mxu0 0
  %1195 = vmatpush1.bf16.msra.mxu0 %v1161
  %1196 = vmatprep.subr.bf16.mxu0 0
  %1197 = vmatpush2.bf16.msra.mxu0 0
  %1198 = vmatprep.subr.bf16.mxu0 0
  %1199 = vmatpush2.bf16.msra.mxu0 0
  %1200 = vmatprep.subr.bf16.mxu0 0
  %1201 = vmatpush2.bf16.msra.mxu0 0
  %1202 = vmatprep.subr.bf16.mxu0 0
  %1203 = vmatpush2.bf16.msra.mxu0 0
  %1204 = vmatprep.subr.bf16.mxu0 0
  %1205 = vmatpush2.bf16.msra.mxu0 0
  %1206 = vmatprep.subr.bf16.mxu0 0
  %1207 = vmatpush2.bf16.msra.mxu0 0
  %1208 = vmatprep.subr.bf16.mxu0 0
  %1209 = vmatpush2.bf16.msra.mxu0 0
  %1210 = vmatprep.subr.bf16.mxu0 0
  %1211 = vmatpush2.bf16.msra.mxu0 0
  %1212 = vmatprep.mubr.bf16.mxu0 0
  %1213 = vmatmul.mubr.bf16.gmra.mxu0 %v1166
  %v1214 = vpop.f32.mrf.mxu0
  %v1215 = vadd.f32 %v1151, %v1214
  %v1216 = vpop.f32.mrf.mxu0
  %v1217 = vpop.f32.mrf.mxu0
  %v1218 = vadd.f32 %v1151, %v1217
  %v1219 = vpop.f32.mrf.mxu0
  %1220 = vmatprep.mubr.bf16.mxu0 0
  %1221 = vmatmul.mubr.bf16.gmra.mxu0 %v1169
  %v1222 = vpop.f32.mrf.mxu0
  %v1223 = vadd.f32 %v1151, %v1222
  %v1224 = vpop.f32.mrf.mxu0
  %v1225 = vpop.f32.mrf.mxu0
  %v1226 = vadd.f32 %v1151, %v1225
  %v1227 = vpop.f32.mrf.mxu0
  %1228 = vmatprep.mubr.bf16.mxu0 0
  %1229 = vmatmul.mubr.bf16.gmra.mxu0 %v1172
  %v1230 = vpop.f32.mrf.mxu0
  %v1231 = vadd.f32 %v1151, %v1230
  %v1232 = vpop.f32.mrf.mxu0
  %v1233 = vpop.f32.mrf.mxu0
  %v1234 = vadd.f32 %v1151, %v1233
  %v1235 = vpop.f32.mrf.mxu0
  %1236 = vmatprep.mubr.bf16.mxu0 0
  %1237 = vmatmul.mubr.bf16.gmra.mxu0 %v1175
  %v1238 = vpop.f32.mrf.mxu0
  %v1239 = vadd.f32 %v1151, %v1238
  %v1240 = vpop.f32.mrf.mxu0
  %v1241 = vpop.f32.mrf.mxu0
  %v1242 = vadd.f32 %v1151, %v1241
  %v1243 = vpop.f32.mrf.mxu0
  %1244 = vmatprep.mubr.bf16.mxu0 0
  %1245 = vmatmul.mubr.bf16.gmra.mxu0 %v1178
  %v1246 = vpop.f32.mrf.mxu0
  %v1247 = vadd.f32 %v1151, %v1246
  %v1248 = vpop.f32.mrf.mxu0
  %v1249 = vpop.f32.mrf.mxu0
  %v1250 = vadd.f32 %v1151, %v1249
  %v1251 = vpop.f32.mrf.mxu0
  %1252 = vdwg.mxu0
  %1253 = vst [vmem:[#allocation3] sm:$0xff] %v1215
  %1254 = vst [vmem:[#allocation3 + $0x8] sm:$0xff] %v1218
  %1255 = vst [vmem:[#allocation3 + $0x10] sm:$0xff] %v1223
  %1256 = vst [vmem:[#allocation3 + $0x18] sm:$0xff] %v1226
  %1257 = vst [vmem:[#allocation3 + $0x20] sm:$0xff] %v1231
  %1258 = vst [vmem:[#allocation3 + $0x28] sm:$0xff] %v1234
  %1259 = vst [vmem:[#allocation3 + $0x30] sm:$0xff] %v1239
  %1260 = vst [vmem:[#allocation3 + $0x38] sm:$0xff] %v1242
  %1261 = vst [vmem:[#allocation3 + $0x40] sm:$0xff] %v1247
  %1262 = vst [vmem:[#allocation3 + $0x48] sm:$0xff] %v1250
  %v1263 = vld [vmem:[%s7] sm:$0xf]
  %v1264 = vld [vmem:[%s7 + $0x4] sm:$0xf]
  %v1265 = vld [vmem:[%s7 + $0x8] sm:$0xf]
  %v1266 = vld [vmem:[%s7 + $0xc] sm:$0xf]
  %s1267 = scalar_lea.vmem %s2, 8
  %v1268 = vld [vmem:[%s1267] sm:$0xff]
  %s1269 = scalar_lea.vmem %s3, 8
  %v1270 = vld [vmem:[%s1269] sm:$0xff]
  %v1271 = vld [vmem:[#allocation3] sm:$0xff]
  %v1272 = vpack.c.bf16 %v1268, %v1268
  %v1277 = vunpack.c.l.b16 %v1263
  %v1278 = vunpack.c.l.b16 %v1264
  %v1279 = vunpack.c.l.b16 %v1265
  %v1280 = vunpack.c.l.b16 %v1266
  %v1281 = vpack.c.b16 %v1278, %v1277
  %v1282 = vpack.c.b16 %v1280, %v1279
  %v1286 = vsel %vm101, %v1272, 0
  %1288 = vmatprep.subr.bf16.mxu0 0
  %1289 = vmatpush1.bf16.msra.mxu0 0
  %1290 = vmatprep.subr.bf16.mxu0 0
  %1291 = vmatpush1.bf16.msra.mxu0 0
  %1292 = vmatprep.subr.bf16.mxu0 0
  %1293 = vmatpush1.bf16.msra.mxu0 0
  %1294 = vmatprep.subr.bf16.mxu0 0
  %1295 = vmatpush1.bf16.msra.mxu0 0
  %1296 = vmatprep.subr.bf16.mxu0 0
  %1297 = vmatpush1.bf16.msra.mxu0 0
  %1298 = vmatprep.subr.bf16.mxu0 0
  %1299 = vmatpush1.bf16.msra.mxu0 0
  %1300 = vmatprep.subr.bf16.mxu0 0
  %1301 = vmatpush1.bf16.msra.mxu0 %v1282
  %1302 = vmatprep.subr.bf16.mxu0 0
  %1303 = vmatpush1.bf16.msra.mxu0 %v1281
  %1304 = vmatprep.subr.bf16.mxu0 0
  %1305 = vmatpush2.bf16.msra.mxu0 0
  %1306 = vmatprep.subr.bf16.mxu0 0
  %1307 = vmatpush2.bf16.msra.mxu0 0
  %1308 = vmatprep.subr.bf16.mxu0 0
  %1309 = vmatpush2.bf16.msra.mxu0 0
  %1310 = vmatprep.subr.bf16.mxu0 0
  %1311 = vmatpush2.bf16.msra.mxu0 0
  %1312 = vmatprep.subr.bf16.mxu0 0
  %1313 = vmatpush2.bf16.msra.mxu0 0
  %1314 = vmatprep.subr.bf16.mxu0 0
  %1315 = vmatpush2.bf16.msra.mxu0 0
  %1316 = vmatprep.subr.bf16.mxu0 0
  %1317 = vmatpush2.bf16.msra.mxu0 0
  %1318 = vmatprep.subr.bf16.mxu0 0
  %1319 = vmatpush2.bf16.msra.mxu0 0
  %1320 = vmatprep.mubr.bf16.mxu0 0
  %1321 = vmatmul.mubr.bf16.gmra.mxu0 %v1286
  %v1322 = vpop.f32.mrf.mxu0
  %v1323 = vadd.f32 0.0, %v1322
  %v1324 = vpop.f32.mrf.mxu0
  %v1325 = vpop.f32.mrf.mxu0
  %v1326 = vpop.f32.mrf.mxu0
  %1327 = vdwg.mxu0
  %v1328 = vadd.f32 %v1271, %v1323
  %v1329 = vtanh.pop %v1328
  %v1330 = vxor.u32 %v1328, 2147483648
  %v1331 = vmul.f32 %v1330, 1.442695
  %v1332 = vpow.pop %v1331
  %v1333 = vadd.f32 %v1332, 1.0
  %v1334 = vrcp.pop %v1333
  %v1335 = vmul.f32 1.0, %v1334
  %v1336 = vsel %vm42, %v1329, %v1335
  %1338 = vrot.lane.b32.xlu0 %v1270, 32
  %v1339 = vpop.permute.xlu0 %1338
  %v1341 = vmul.f32 %v1336, %v1339
  %1343 = vrot.lane.b32.xlu0 %v1336, 64
  %v1344 = vpop.permute.xlu0 %1343
  %v1346 = vmul.f32 %v1336, %v1344
  %1348 = vrot.lane.b32.xlu0 %v1346, 32
  %v1349 = vpop.permute.xlu0 %1348
  %v1351 = vadd.f32 %v1341, %v1349
  %v1352 = vtanh.pop %v1351
  %1354 = vrot.lane.b32.xlu0 %v1352, 64
  %v1355 = vpop.permute.xlu0 %1354
  %v1357 = vmul.f32 %v1336, %v1355
  %v1358 = vld [vmem:[%s1] sm:$0xff]
  %vm1359 = vcmp.gt.s32.totalorder %v1358, 0
  %v1360 = vsel %vm1359, 1, 0
  %1361 = vset.pattern.permute.xlu0 0
  %1362 = vperm.xlu0 %1361, %v1360
  %v1363 = vpop.permute.xlu0 %1362
  %vm1364 = vcmp.eq.s32.totalorder %v1363, 1
  %1366 = vrot.lane.b32.xlu0 %v1268, 96
  %v1367 = vpop.permute.xlu0 %1366
  %v1369 = vsel %vm1364, %v1357, %v1367
  %v1370 = vsel %vm1364, %v1351, %v1339
  %v1371 = vld [vmem:[%s311] sm:$0xff]
  %v1372 = vpack.c.bf16 %v1369, %v1369
  %1374 = vrot.lane.b32.xlu0 %v1372, 32
  %v1375 = vpop.permute.xlu0 %1374
  %v1377 = vsel %vm101, %v1375, 0
  %1379 = vmatprep.subr.bf16.mxu0 0
  %1380 = vmatpush1.bf16.msra.mxu0 0
  %1381 = vmatprep.subr.bf16.mxu0 0
  %1382 = vmatpush1.bf16.msra.mxu0 0
  %1383 = vmatprep.subr.bf16.mxu0 0
  %1384 = vmatpush1.bf16.msra.mxu0 0
  %1385 = vmatprep.subr.bf16.mxu0 0
  %1386 = vmatpush1.bf16.msra.mxu0 0
  %1387 = vmatprep.subr.bf16.mxu0 0
  %1388 = vmatpush1.bf16.msra.mxu0 0
  %1389 = vmatprep.subr.bf16.mxu0 0
  %1390 = vmatpush1.bf16.msra.mxu0 0
  %1391 = vmatprep.subr.bf16.mxu0 0
  %1392 = vmatpush1.bf16.msra.mxu0 %v1282
  %1393 = vmatprep.subr.bf16.mxu0 0
  %1394 = vmatpush1.bf16.msra.mxu0 %v1281
  %1395 = vmatprep.subr.bf16.mxu0 0
  %1396 = vmatpush2.bf16.msra.mxu0 0
  %1397 = vmatprep.subr.bf16.mxu0 0
  %1398 = vmatpush2.bf16.msra.mxu0 0
  %1399 = vmatprep.subr.bf16.mxu0 0
  %1400 = vmatpush2.bf16.msra.mxu0 0
  %1401 = vmatprep.subr.bf16.mxu0 0
  %1402 = vmatpush2.bf16.msra.mxu0 0
  %1403 = vmatprep.subr.bf16.mxu0 0
  %1404 = vmatpush2.bf16.msra.mxu0 0
  %1405 = vmatprep.subr.bf16.mxu0 0
  %1406 = vmatpush2.bf16.msra.mxu0 0
  %1407 = vmatprep.subr.bf16.mxu0 0
  %1408 = vmatpush2.bf16.msra.mxu0 0
  %1409 = vmatprep.subr.bf16.mxu0 0
  %1410 = vmatpush2.bf16.msra.mxu0 0
  %1411 = vmatprep.mubr.bf16.mxu0 0
  %1412 = vmatmul.mubr.bf16.gmra.mxu0 %v1377
  %v1413 = vpop.f32.mrf.mxu0
  %v1414 = vadd.f32 0.0, %v1413
  %v1415 = vpop.f32.mrf.mxu0
  %v1416 = vpop.f32.mrf.mxu0
  %v1417 = vpop.f32.mrf.mxu0
  %1418 = vdwg.mxu0
  %v1419 = vadd.f32 %v1371, %v1414
  %v1420 = vtanh.pop %v1419
  %v1421 = vxor.u32 %v1419, 2147483648
  %v1422 = vmul.f32 %v1421, 1.442695
  %v1423 = vpow.pop %v1422
  %v1424 = vadd.f32 %v1423, 1.0
  %v1425 = vrcp.pop %v1424
  %v1426 = vmul.f32 1.0, %v1425
  %v1427 = vsel %vm42, %v1420, %v1426
  %v1428 = vmul.f32 %v1427, %v1370
  %1430 = vrot.lane.b32.xlu0 %v1427, 64
  %v1431 = vpop.permute.xlu0 %1430
  %v1433 = vmul.f32 %v1427, %v1431
  %1435 = vrot.lane.b32.xlu0 %v1433, 32
  %v1436 = vpop.permute.xlu0 %1435
  %v1438 = vadd.f32 %v1428, %v1436
  %v1439 = vtanh.pop %v1438
  %1441 = vrot.lane.b32.xlu0 %v1439, 64
  %v1442 = vpop.permute.xlu0 %1441
  %v1444 = vmul.f32 %v1427, %v1442
  %vm1445 = vcmp.gt.s32.totalorder %v1358, 1
  %v1446 = vsel %vm1445, 1, 0
  %1447 = vset.pattern.permute.xlu0 0
  %1448 = vperm.xlu0 %1447, %v1446
  %v1449 = vpop.permute.xlu0 %1448
  %vm1450 = vcmp.eq.s32.totalorder %v1449, 1
  %v1451 = vsel %vm1450, %v1444, %v1369
  %v1452 = vsel %vm1450, %v1438, %v1370
  %v1453 = vld [vmem:[%s401] sm:$0xff]
  %v1454 = vpack.c.bf16 %v1451, %v1451
  %1456 = vrot.lane.b32.xlu0 %v1454, 32
  %v1457 = vpop.permute.xlu0 %1456
  %v1459 = vsel %vm101, %v1457, 0
  %1461 = vmatprep.subr.bf16.mxu0 0
  %1462 = vmatpush1.bf16.msra.mxu0 0
  %1463 = vmatprep.subr.bf16.mxu0 0
  %1464 = vmatpush1.bf16.msra.mxu0 0
  %1465 = vmatprep.subr.bf16.mxu0 0
  %1466 = vmatpush1.bf16.msra.mxu0 0
  %1467 = vmatprep.subr.bf16.mxu0 0
  %1468 = vmatpush1.bf16.msra.mxu0 0
  %1469 = vmatprep.subr.bf16.mxu0 0
  %1470 = vmatpush1.bf16.msra.mxu0 0
  %1471 = vmatprep.subr.bf16.mxu0 0
  %1472 = vmatpush1.bf16.msra.mxu0 0
  %1473 = vmatprep.subr.bf16.mxu0 0
  %1474 = vmatpush1.bf16.msra.mxu0 %v1282
  %1475 = vmatprep.subr.bf16.mxu0 0
  %1476 = vmatpush1.bf16.msra.mxu0 %v1281
  %1477 = vmatprep.subr.bf16.mxu0 0
  %1478 = vmatpush2.bf16.msra.mxu0 0
  %1479 = vmatprep.subr.bf16.mxu0 0
  %1480 = vmatpush2.bf16.msra.mxu0 0
  %1481 = vmatprep.subr.bf16.mxu0 0
  %1482 = vmatpush2.bf16.msra.mxu0 0
  %1483 = vmatprep.subr.bf16.mxu0 0
  %1484 = vmatpush2.bf16.msra.mxu0 0
  %1485 = vmatprep.subr.bf16.mxu0 0
  %1486 = vmatpush2.bf16.msra.mxu0 0
  %1487 = vmatprep.subr.bf16.mxu0 0
  %1488 = vmatpush2.bf16.msra.mxu0 0
  %1489 = vmatprep.subr.bf16.mxu0 0
  %1490 = vmatpush2.bf16.msra.mxu0 0
  %1491 = vmatprep.subr.bf16.mxu0 0
  %1492 = vmatpush2.bf16.msra.mxu0 0
  %1493 = vmatprep.mubr.bf16.mxu0 0
  %1494 = vmatmul.mubr.bf16.gmra.mxu0 %v1459
  %v1495 = vpop.f32.mrf.mxu0
  %v1496 = vadd.f32 0.0, %v1495
  %v1497 = vpop.f32.mrf.mxu0
  %v1498 = vpop.f32.mrf.mxu0
  %v1499 = vpop.f32.mrf.mxu0
  %1500 = vdwg.mxu0
  %v1501 = vadd.f32 %v1453, %v1496
  %v1502 = vtanh.pop %v1501
  %v1503 = vxor.u32 %v1501, 2147483648
  %v1504 = vmul.f32 %v1503, 1.442695
  %v1505 = vpow.pop %v1504
  %v1506 = vadd.f32 %v1505, 1.0
  %v1507 = vrcp.pop %v1506
  %v1508 = vmul.f32 1.0, %v1507
  %v1509 = vsel %vm42, %v1502, %v1508
  %v1510 = vmul.f32 %v1509, %v1452
  %1512 = vrot.lane.b32.xlu0 %v1509, 64
  %v1513 = vpop.permute.xlu0 %1512
  %v1515 = vmul.f32 %v1509, %v1513
  %1517 = vrot.lane.b32.xlu0 %v1515, 32
  %v1518 = vpop.permute.xlu0 %1517
  %v1520 = vadd.f32 %v1510, %v1518
  %v1521 = vtanh.pop %v1520
  %1523 = vrot.lane.b32.xlu0 %v1521, 64
  %v1524 = vpop.permute.xlu0 %1523
  %v1526 = vmul.f32 %v1509, %v1524
  %vm1527 = vcmp.gt.s32.totalorder %v1358, 2
  %v1528 = vsel %vm1527, 1, 0
  %1529 = vset.pattern.permute.xlu0 0
  %1530 = vperm.xlu0 %1529, %v1528
  %v1531 = vpop.permute.xlu0 %1530
  %vm1532 = vcmp.eq.s32.totalorder %v1531, 1
  %v1533 = vsel %vm1532, %v1526, %v1451
  %v1534 = vsel %vm1532, %v1520, %v1452
  %v1535 = vld [vmem:[%s491] sm:$0xff]
  %v1536 = vpack.c.bf16 %v1533, %v1533
  %1538 = vrot.lane.b32.xlu0 %v1536, 32
  %v1539 = vpop.permute.xlu0 %1538
  %v1541 = vsel %vm101, %v1539, 0
  %1543 = vmatprep.subr.bf16.mxu0 0
  %1544 = vmatpush1.bf16.msra.mxu0 0
  %1545 = vmatprep.subr.bf16.mxu0 0
  %1546 = vmatpush1.bf16.msra.mxu0 0
  %1547 = vmatprep.subr.bf16.mxu0 0
  %1548 = vmatpush1.bf16.msra.mxu0 0
  %1549 = vmatprep.subr.bf16.mxu0 0
  %1550 = vmatpush1.bf16.msra.mxu0 0
  %1551 = vmatprep.subr.bf16.mxu0 0
  %1552 = vmatpush1.bf16.msra.mxu0 0
  %1553 = vmatprep.subr.bf16.mxu0 0
  %1554 = vmatpush1.bf16.msra.mxu0 0
  %1555 = vmatprep.subr.bf16.mxu0 0
  %1556 = vmatpush1.bf16.msra.mxu0 %v1282
  %1557 = vmatprep.subr.bf16.mxu0 0
  %1558 = vmatpush1.bf16.msra.mxu0 %v1281
  %1559 = vmatprep.subr.bf16.mxu0 0
  %1560 = vmatpush2.bf16.msra.mxu0 0
  %1561 = vmatprep.subr.bf16.mxu0 0
  %1562 = vmatpush2.bf16.msra.mxu0 0
  %1563 = vmatprep.subr.bf16.mxu0 0
  %1564 = vmatpush2.bf16.msra.mxu0 0
  %1565 = vmatprep.subr.bf16.mxu0 0
  %1566 = vmatpush2.bf16.msra.mxu0 0
  %1567 = vmatprep.subr.bf16.mxu0 0
  %1568 = vmatpush2.bf16.msra.mxu0 0
  %1569 = vmatprep.subr.bf16.mxu0 0
  %1570 = vmatpush2.bf16.msra.mxu0 0
  %1571 = vmatprep.subr.bf16.mxu0 0
  %1572 = vmatpush2.bf16.msra.mxu0 0
  %1573 = vmatprep.subr.bf16.mxu0 0
  %1574 = vmatpush2.bf16.msra.mxu0 0
  %1575 = vmatprep.mubr.bf16.mxu0 0
  %1576 = vmatmul.mubr.bf16.gmra.mxu0 %v1541
  %v1577 = vpop.f32.mrf.mxu0
  %v1578 = vadd.f32 0.0, %v1577
  %v1579 = vpop.f32.mrf.mxu0
  %v1580 = vpop.f32.mrf.mxu0
  %v1581 = vpop.f32.mrf.mxu0
  %1582 = vdwg.mxu0
  %v1583 = vadd.f32 %v1535, %v1578
  %v1584 = vtanh.pop %v1583
  %v1585 = vxor.u32 %v1583, 2147483648
  %v1586 = vmul.f32 %v1585, 1.442695
  %v1587 = vpow.pop %v1586
  %v1588 = vadd.f32 %v1587, 1.0
  %v1589 = vrcp.pop %v1588
  %v1590 = vmul.f32 1.0, %v1589
  %v1591 = vsel %vm42, %v1584, %v1590
  %v1592 = vmul.f32 %v1591, %v1534
  %1594 = vrot.lane.b32.xlu0 %v1591, 64
  %v1595 = vpop.permute.xlu0 %1594
  %v1597 = vmul.f32 %v1591, %v1595
  %1599 = vrot.lane.b32.xlu0 %v1597, 32
  %v1600 = vpop.permute.xlu0 %1599
  %v1602 = vadd.f32 %v1592, %v1600
  %v1603 = vtanh.pop %v1602
  %1605 = vrot.lane.b32.xlu0 %v1603, 64
  %v1606 = vpop.permute.xlu0 %1605
  %v1608 = vmul.f32 %v1591, %v1606
  %vm1609 = vcmp.gt.s32.totalorder %v1358, 3
  %v1610 = vsel %vm1609, 1, 0
  %1611 = vset.pattern.permute.xlu0 0
  %1612 = vperm.xlu0 %1611, %v1610
  %v1613 = vpop.permute.xlu0 %1612
  %vm1614 = vcmp.eq.s32.totalorder %v1613, 1
  %v1615 = vsel %vm1614, %v1608, %v1533
  %v1616 = vsel %vm1614, %v1602, %v1534
  %v1617 = vld [vmem:[%s581] sm:$0xff]
  %v1618 = vpack.c.bf16 %v1615, %v1615
  %1620 = vrot.lane.b32.xlu0 %v1618, 32
  %v1621 = vpop.permute.xlu0 %1620
  %v1623 = vsel %vm101, %v1621, 0
  %1625 = vmatprep.subr.bf16.mxu0 0
  %1626 = vmatpush1.bf16.msra.mxu0 0
  %1627 = vmatprep.subr.bf16.mxu0 0
  %1628 = vmatpush1.bf16.msra.mxu0 0
  %1629 = vmatprep.subr.bf16.mxu0 0
  %1630 = vmatpush1.bf16.msra.mxu0 0
  %1631 = vmatprep.subr.bf16.mxu0 0
  %1632 = vmatpush1.bf16.msra.mxu0 0
  %1633 = vmatprep.subr.bf16.mxu0 0
  %1634 = vmatpush1.bf16.msra.mxu0 0
  %1635 = vmatprep.subr.bf16.mxu0 0
  %1636 = vmatpush1.bf16.msra.mxu0 0
  %1637 = vmatprep.subr.bf16.mxu0 0
  %1638 = vmatpush1.bf16.msra.mxu0 %v1282
  %1639 = vmatprep.subr.bf16.mxu0 0
  %1640 = vmatpush1.bf16.msra.mxu0 %v1281
  %1641 = vmatprep.subr.bf16.mxu0 0
  %1642 = vmatpush2.bf16.msra.mxu0 0
  %1643 = vmatprep.subr.bf16.mxu0 0
  %1644 = vmatpush2.bf16.msra.mxu0 0
  %1645 = vmatprep.subr.bf16.mxu0 0
  %1646 = vmatpush2.bf16.msra.mxu0 0
  %1647 = vmatprep.subr.bf16.mxu0 0
  %1648 = vmatpush2.bf16.msra.mxu0 0
  %1649 = vmatprep.subr.bf16.mxu0 0
  %1650 = vmatpush2.bf16.msra.mxu0 0
  %1651 = vmatprep.subr.bf16.mxu0 0
  %1652 = vmatpush2.bf16.msra.mxu0 0
  %1653 = vmatprep.subr.bf16.mxu0 0
  %1654 = vmatpush2.bf16.msra.mxu0 0
  %1655 = vmatprep.subr.bf16.mxu0 0
  %1656 = vmatpush2.bf16.msra.mxu0 0
  %1657 = vmatprep.mubr.bf16.mxu0 0
  %1658 = vmatmul.mubr.bf16.gmra.mxu0 %v1623
  %v1659 = vpop.f32.mrf.mxu0
  %v1660 = vadd.f32 0.0, %v1659
  %v1661 = vpop.f32.mrf.mxu0
  %v1662 = vpop.f32.mrf.mxu0
  %v1663 = vpop.f32.mrf.mxu0
  %1664 = vdwg.mxu0
  %v1665 = vadd.f32 %v1617, %v1660
  %v1666 = vtanh.pop %v1665
  %v1667 = vxor.u32 %v1665, 2147483648
  %v1668 = vmul.f32 %v1667, 1.442695
  %v1669 = vpow.pop %v1668
  %v1670 = vadd.f32 %v1669, 1.0
  %v1671 = vrcp.pop %v1670
  %v1672 = vmul.f32 1.0, %v1671
  %v1673 = vsel %vm42, %v1666, %v1672
  %v1674 = vmul.f32 %v1673, %v1616
  %1676 = vrot.lane.b32.xlu0 %v1673, 64
  %v1677 = vpop.permute.xlu0 %1676
  %v1679 = vmul.f32 %v1673, %v1677
  %1681 = vrot.lane.b32.xlu0 %v1679, 32
  %v1682 = vpop.permute.xlu0 %1681
  %v1684 = vadd.f32 %v1674, %v1682
  %v1685 = vtanh.pop %v1684
  %1687 = vrot.lane.b32.xlu0 %v1685, 64
  %v1688 = vpop.permute.xlu0 %1687
  %v1690 = vmul.f32 %v1673, %v1688
  %vm1691 = vcmp.gt.s32.totalorder %v1358, 4
  %v1692 = vsel %vm1691, 1, 0
  %1693 = vset.pattern.permute.xlu0 0
  %1694 = vperm.xlu0 %1693, %v1692
  %v1695 = vpop.permute.xlu0 %1694
  %vm1696 = vcmp.eq.s32.totalorder %v1695, 1
  %v1697 = vsel %vm1696, %v1690, %v1615
  %v1698 = vsel %vm1696, %v1684, %v1616
  %v1699 = vld [vmem:[%s671] sm:$0xff]
  %v1700 = vpack.c.bf16 %v1697, %v1697
  %1702 = vrot.lane.b32.xlu0 %v1700, 32
  %v1703 = vpop.permute.xlu0 %1702
  %v1705 = vsel %vm101, %v1703, 0
  %1707 = vmatprep.subr.bf16.mxu0 0
  %1708 = vmatpush1.bf16.msra.mxu0 0
  %1709 = vmatprep.subr.bf16.mxu0 0
  %1710 = vmatpush1.bf16.msra.mxu0 0
  %1711 = vmatprep.subr.bf16.mxu0 0
  %1712 = vmatpush1.bf16.msra.mxu0 0
  %1713 = vmatprep.subr.bf16.mxu0 0
  %1714 = vmatpush1.bf16.msra.mxu0 0
  %1715 = vmatprep.subr.bf16.mxu0 0
  %1716 = vmatpush1.bf16.msra.mxu0 0
  %1717 = vmatprep.subr.bf16.mxu0 0
  %1718 = vmatpush1.bf16.msra.mxu0 0
  %1719 = vmatprep.subr.bf16.mxu0 0
  %1720 = vmatpush1.bf16.msra.mxu0 %v1282
  %1721 = vmatprep.subr.bf16.mxu0 0
  %1722 = vmatpush1.bf16.msra.mxu0 %v1281
  %1723 = vmatprep.subr.bf16.mxu0 0
  %1724 = vmatpush2.bf16.msra.mxu0 0
  %1725 = vmatprep.subr.bf16.mxu0 0
  %1726 = vmatpush2.bf16.msra.mxu0 0
  %1727 = vmatprep.subr.bf16.mxu0 0
  %1728 = vmatpush2.bf16.msra.mxu0 0
  %1729 = vmatprep.subr.bf16.mxu0 0
  %1730 = vmatpush2.bf16.msra.mxu0 0
  %1731 = vmatprep.subr.bf16.mxu0 0
  %1732 = vmatpush2.bf16.msra.mxu0 0
  %1733 = vmatprep.subr.bf16.mxu0 0
  %1734 = vmatpush2.bf16.msra.mxu0 0
  %1735 = vmatprep.subr.bf16.mxu0 0
  %1736 = vmatpush2.bf16.msra.mxu0 0
  %1737 = vmatprep.subr.bf16.mxu0 0
  %1738 = vmatpush2.bf16.msra.mxu0 0
  %1739 = vmatprep.mubr.bf16.mxu0 0
  %1740 = vmatmul.mubr.bf16.gmra.mxu0 %v1705
  %v1741 = vpop.f32.mrf.mxu0
  %v1742 = vadd.f32 0.0, %v1741
  %v1743 = vpop.f32.mrf.mxu0
  %v1744 = vpop.f32.mrf.mxu0
  %v1745 = vpop.f32.mrf.mxu0
  %1746 = vdwg.mxu0
  %v1747 = vadd.f32 %v1699, %v1742
  %v1748 = vtanh.pop %v1747
  %v1749 = vxor.u32 %v1747, 2147483648
  %v1750 = vmul.f32 %v1749, 1.442695
  %v1751 = vpow.pop %v1750
  %v1752 = vadd.f32 %v1751, 1.0
  %v1753 = vrcp.pop %v1752
  %v1754 = vmul.f32 1.0, %v1753
  %v1755 = vsel %vm42, %v1748, %v1754
  %v1756 = vmul.f32 %v1755, %v1698
  %1758 = vrot.lane.b32.xlu0 %v1755, 64
  %v1759 = vpop.permute.xlu0 %1758
  %v1761 = vmul.f32 %v1755, %v1759
  %1763 = vrot.lane.b32.xlu0 %v1761, 32
  %v1764 = vpop.permute.xlu0 %1763
  %v1766 = vadd.f32 %v1756, %v1764
  %v1767 = vtanh.pop %v1766
  %1769 = vrot.lane.b32.xlu0 %v1767, 64
  %v1770 = vpop.permute.xlu0 %1769
  %v1772 = vmul.f32 %v1755, %v1770
  %vm1773 = vcmp.gt.s32.totalorder %v1358, 5
  %v1774 = vsel %vm1773, 1, 0
  %1775 = vset.pattern.permute.xlu0 0
  %1776 = vperm.xlu0 %1775, %v1774
  %v1777 = vpop.permute.xlu0 %1776
  %vm1778 = vcmp.eq.s32.totalorder %v1777, 1
  %v1779 = vsel %vm1778, %v1772, %v1697
  %v1780 = vsel %vm1778, %v1766, %v1698
  %v1781 = vld [vmem:[%s761] sm:$0xff]
  %v1782 = vpack.c.bf16 %v1779, %v1779
  %1784 = vrot.lane.b32.xlu0 %v1782, 32
  %v1785 = vpop.permute.xlu0 %1784
  %v1787 = vsel %vm101, %v1785, 0
  %1789 = vmatprep.subr.bf16.mxu0 0
  %1790 = vmatpush1.bf16.msra.mxu0 0
  %1791 = vmatprep.subr.bf16.mxu0 0
  %1792 = vmatpush1.bf16.msra.mxu0 0
  %1793 = vmatprep.subr.bf16.mxu0 0
  %1794 = vmatpush1.bf16.msra.mxu0 0
  %1795 = vmatprep.subr.bf16.mxu0 0
  %1796 = vmatpush1.bf16.msra.mxu0 0
  %1797 = vmatprep.subr.bf16.mxu0 0
  %1798 = vmatpush1.bf16.msra.mxu0 0
  %1799 = vmatprep.subr.bf16.mxu0 0
  %1800 = vmatpush1.bf16.msra.mxu0 0
  %1801 = vmatprep.subr.bf16.mxu0 0
  %1802 = vmatpush1.bf16.msra.mxu0 %v1282
  %1803 = vmatprep.subr.bf16.mxu0 0
  %1804 = vmatpush1.bf16.msra.mxu0 %v1281
  %1805 = vmatprep.subr.bf16.mxu0 0
  %1806 = vmatpush2.bf16.msra.mxu0 0
  %1807 = vmatprep.subr.bf16.mxu0 0
  %1808 = vmatpush2.bf16.msra.mxu0 0
  %1809 = vmatprep.subr.bf16.mxu0 0
  %1810 = vmatpush2.bf16.msra.mxu0 0
  %1811 = vmatprep.subr.bf16.mxu0 0
  %1812 = vmatpush2.bf16.msra.mxu0 0
  %1813 = vmatprep.subr.bf16.mxu0 0
  %1814 = vmatpush2.bf16.msra.mxu0 0
  %1815 = vmatprep.subr.bf16.mxu0 0
  %1816 = vmatpush2.bf16.msra.mxu0 0
  %1817 = vmatprep.subr.bf16.mxu0 0
  %1818 = vmatpush2.bf16.msra.mxu0 0
  %1819 = vmatprep.subr.bf16.mxu0 0
  %1820 = vmatpush2.bf16.msra.mxu0 0
  %1821 = vmatprep.mubr.bf16.mxu0 0
  %1822 = vmatmul.mubr.bf16.gmra.mxu0 %v1787
  %v1823 = vpop.f32.mrf.mxu0
  %v1824 = vadd.f32 0.0, %v1823
  %v1825 = vpop.f32.mrf.mxu0
  %v1826 = vpop.f32.mrf.mxu0
  %v1827 = vpop.f32.mrf.mxu0
  %1828 = vdwg.mxu0
  %v1829 = vadd.f32 %v1781, %v1824
  %v1830 = vtanh.pop %v1829
  %v1831 = vxor.u32 %v1829, 2147483648
  %v1832 = vmul.f32 %v1831, 1.442695
  %v1833 = vpow.pop %v1832
  %v1834 = vadd.f32 %v1833, 1.0
  %v1835 = vrcp.pop %v1834
  %v1836 = vmul.f32 1.0, %v1835
  %v1837 = vsel %vm42, %v1830, %v1836
  %v1838 = vmul.f32 %v1837, %v1780
  %1840 = vrot.lane.b32.xlu0 %v1837, 64
  %v1841 = vpop.permute.xlu0 %1840
  %v1843 = vmul.f32 %v1837, %v1841
  %1845 = vrot.lane.b32.xlu0 %v1843, 32
  %v1846 = vpop.permute.xlu0 %1845
  %v1848 = vadd.f32 %v1838, %v1846
  %v1849 = vtanh.pop %v1848
  %1851 = vrot.lane.b32.xlu0 %v1849, 64
  %v1852 = vpop.permute.xlu0 %1851
  %v1854 = vmul.f32 %v1837, %v1852
  %vm1855 = vcmp.gt.s32.totalorder %v1358, 6
  %v1856 = vsel %vm1855, 1, 0
  %1857 = vset.pattern.permute.xlu0 0
  %1858 = vperm.xlu0 %1857, %v1856
  %v1859 = vpop.permute.xlu0 %1858
  %vm1860 = vcmp.eq.s32.totalorder %v1859, 1
  %v1861 = vsel %vm1860, %v1854, %v1779
  %v1862 = vsel %vm1860, %v1848, %v1780
  %v1863 = vld [vmem:[%s851] sm:$0xff]
  %v1864 = vpack.c.bf16 %v1861, %v1861
  %1866 = vrot.lane.b32.xlu0 %v1864, 32
  %v1867 = vpop.permute.xlu0 %1866
  %v1869 = vsel %vm101, %v1867, 0
  %1871 = vmatprep.subr.bf16.mxu0 0
  %1872 = vmatpush1.bf16.msra.mxu0 0
  %1873 = vmatprep.subr.bf16.mxu0 0
  %1874 = vmatpush1.bf16.msra.mxu0 0
  %1875 = vmatprep.subr.bf16.mxu0 0
  %1876 = vmatpush1.bf16.msra.mxu0 0
  %1877 = vmatprep.subr.bf16.mxu0 0
  %1878 = vmatpush1.bf16.msra.mxu0 0
  %1879 = vmatprep.subr.bf16.mxu0 0
  %1880 = vmatpush1.bf16.msra.mxu0 0
  %1881 = vmatprep.subr.bf16.mxu0 0
  %1882 = vmatpush1.bf16.msra.mxu0 0
  %1883 = vmatprep.subr.bf16.mxu0 0
  %1884 = vmatpush1.bf16.msra.mxu0 %v1282
  %1885 = vmatprep.subr.bf16.mxu0 0
  %1886 = vmatpush1.bf16.msra.mxu0 %v1281
  %1887 = vmatprep.subr.bf16.mxu0 0
  %1888 = vmatpush2.bf16.msra.mxu0 0
  %1889 = vmatprep.subr.bf16.mxu0 0
  %1890 = vmatpush2.bf16.msra.mxu0 0
  %1891 = vmatprep.subr.bf16.mxu0 0
  %1892 = vmatpush2.bf16.msra.mxu0 0
  %1893 = vmatprep.subr.bf16.mxu0 0
  %1894 = vmatpush2.bf16.msra.mxu0 0
  %1895 = vmatprep.subr.bf16.mxu0 0
  %1896 = vmatpush2.bf16.msra.mxu0 0
  %1897 = vmatprep.subr.bf16.mxu0 0
  %1898 = vmatpush2.bf16.msra.mxu0 0
  %1899 = vmatprep.subr.bf16.mxu0 0
  %1900 = vmatpush2.bf16.msra.mxu0 0
  %1901 = vmatprep.subr.bf16.mxu0 0
  %1902 = vmatpush2.bf16.msra.mxu0 0
  %1903 = vmatprep.mubr.bf16.mxu0 0
  %1904 = vmatmul.mubr.bf16.gmra.mxu0 %v1869
  %v1905 = vpop.f32.mrf.mxu0
  %v1906 = vadd.f32 0.0, %v1905
  %v1907 = vpop.f32.mrf.mxu0
  %v1908 = vpop.f32.mrf.mxu0
  %v1909 = vpop.f32.mrf.mxu0
  %1910 = vdwg.mxu0
  %v1911 = vadd.f32 %v1863, %v1906
  %v1912 = vtanh.pop %v1911
  %v1913 = vxor.u32 %v1911, 2147483648
  %v1914 = vmul.f32 %v1913, 1.442695
  %v1915 = vpow.pop %v1914
  %v1916 = vadd.f32 %v1915, 1.0
  %v1917 = vrcp.pop %v1916
  %v1918 = vmul.f32 1.0, %v1917
  %v1919 = vsel %vm42, %v1912, %v1918
  %v1920 = vmul.f32 %v1919, %v1862
  %1922 = vrot.lane.b32.xlu0 %v1919, 64
  %v1923 = vpop.permute.xlu0 %1922
  %v1925 = vmul.f32 %v1919, %v1923
  %1927 = vrot.lane.b32.xlu0 %v1925, 32
  %v1928 = vpop.permute.xlu0 %1927
  %v1930 = vadd.f32 %v1920, %v1928
  %v1931 = vtanh.pop %v1930
  %1933 = vrot.lane.b32.xlu0 %v1931, 64
  %v1934 = vpop.permute.xlu0 %1933
  %v1936 = vmul.f32 %v1919, %v1934
  %vm1937 = vcmp.gt.s32.totalorder %v1358, 7
  %v1938 = vsel %vm1937, 1, 0
  %1939 = vset.pattern.permute.xlu0 0
  %1940 = vperm.xlu0 %1939, %v1938
  %v1941 = vpop.permute.xlu0 %1940
  %vm1942 = vcmp.eq.s32.totalorder %v1941, 1
  %v1943 = vsel %vm1942, %v1936, %v1861
  %v1944 = vsel %vm1942, %v1930, %v1862
  %v1945 = vld [vmem:[%s941] sm:$0xff]
  %v1946 = vpack.c.bf16 %v1943, %v1943
  %1948 = vrot.lane.b32.xlu0 %v1946, 32
  %v1949 = vpop.permute.xlu0 %1948
  %v1951 = vsel %vm101, %v1949, 0
  %1953 = vmatprep.subr.bf16.mxu0 0
  %1954 = vmatpush1.bf16.msra.mxu0 0
  %1955 = vmatprep.subr.bf16.mxu0 0
  %1956 = vmatpush1.bf16.msra.mxu0 0
  %1957 = vmatprep.subr.bf16.mxu0 0
  %1958 = vmatpush1.bf16.msra.mxu0 0
  %1959 = vmatprep.subr.bf16.mxu0 0
  %1960 = vmatpush1.bf16.msra.mxu0 0
  %1961 = vmatprep.subr.bf16.mxu0 0
  %1962 = vmatpush1.bf16.msra.mxu0 0
  %1963 = vmatprep.subr.bf16.mxu0 0
  %1964 = vmatpush1.bf16.msra.mxu0 0
  %1965 = vmatprep.subr.bf16.mxu0 0
  %1966 = vmatpush1.bf16.msra.mxu0 %v1282
  %1967 = vmatprep.subr.bf16.mxu0 0
  %1968 = vmatpush1.bf16.msra.mxu0 %v1281
  %1969 = vmatprep.subr.bf16.mxu0 0
  %1970 = vmatpush2.bf16.msra.mxu0 0
  %1971 = vmatprep.subr.bf16.mxu0 0
  %1972 = vmatpush2.bf16.msra.mxu0 0
  %1973 = vmatprep.subr.bf16.mxu0 0
  %1974 = vmatpush2.bf16.msra.mxu0 0
  %1975 = vmatprep.subr.bf16.mxu0 0
  %1976 = vmatpush2.bf16.msra.mxu0 0
  %1977 = vmatprep.subr.bf16.mxu0 0
  %1978 = vmatpush2.bf16.msra.mxu0 0
  %1979 = vmatprep.subr.bf16.mxu0 0
  %1980 = vmatpush2.bf16.msra.mxu0 0
  %1981 = vmatprep.subr.bf16.mxu0 0
  %1982 = vmatpush2.bf16.msra.mxu0 0
  %1983 = vmatprep.subr.bf16.mxu0 0
  %1984 = vmatpush2.bf16.msra.mxu0 0
  %1985 = vmatprep.mubr.bf16.mxu0 0
  %1986 = vmatmul.mubr.bf16.gmra.mxu0 %v1951
  %v1987 = vpop.f32.mrf.mxu0
  %v1988 = vadd.f32 0.0, %v1987
  %v1989 = vpop.f32.mrf.mxu0
  %v1990 = vpop.f32.mrf.mxu0
  %v1991 = vpop.f32.mrf.mxu0
  %1992 = vdwg.mxu0
  %v1993 = vadd.f32 %v1945, %v1988
  %v1994 = vtanh.pop %v1993
  %v1995 = vxor.u32 %v1993, 2147483648
  %v1996 = vmul.f32 %v1995, 1.442695
  %v1997 = vpow.pop %v1996
  %v1998 = vadd.f32 %v1997, 1.0
  %v1999 = vrcp.pop %v1998
  %v2000 = vmul.f32 1.0, %v1999
  %v2001 = vsel %vm42, %v1994, %v2000
  %v2002 = vmul.f32 %v2001, %v1944
  %2004 = vrot.lane.b32.xlu0 %v2001, 64
  %v2005 = vpop.permute.xlu0 %2004
  %v2007 = vmul.f32 %v2001, %v2005
  %2009 = vrot.lane.b32.xlu0 %v2007, 32
  %v2010 = vpop.permute.xlu0 %2009
  %v2012 = vadd.f32 %v2002, %v2010
  %v2013 = vtanh.pop %v2012
  %2015 = vrot.lane.b32.xlu0 %v2013, 64
  %v2016 = vpop.permute.xlu0 %2015
  %v2018 = vmul.f32 %v2001, %v2016
  %vm2019 = vcmp.gt.s32.totalorder %v1358, 8
  %v2020 = vsel %vm2019, 1, 0
  %2021 = vset.pattern.permute.xlu0 0
  %2022 = vperm.xlu0 %2021, %v2020
  %v2023 = vpop.permute.xlu0 %2022
  %vm2024 = vcmp.eq.s32.totalorder %v2023, 1
  %v2025 = vsel %vm2024, %v2018, %v1943
  %v2026 = vsel %vm2024, %v2012, %v1944
  %v2027 = vld [vmem:[%s1031] sm:$0xff]
  %v2028 = vpack.c.bf16 %v2025, %v2025
  %2030 = vrot.lane.b32.xlu0 %v2028, 32
  %v2031 = vpop.permute.xlu0 %2030
  %v2033 = vsel %vm101, %v2031, 0
  %2035 = vmatprep.subr.bf16.mxu0 0
  %2036 = vmatpush1.bf16.msra.mxu0 0
  %2037 = vmatprep.subr.bf16.mxu0 0
  %2038 = vmatpush1.bf16.msra.mxu0 0
  %2039 = vmatprep.subr.bf16.mxu0 0
  %2040 = vmatpush1.bf16.msra.mxu0 0
  %2041 = vmatprep.subr.bf16.mxu0 0
  %2042 = vmatpush1.bf16.msra.mxu0 0
  %2043 = vmatprep.subr.bf16.mxu0 0
  %2044 = vmatpush1.bf16.msra.mxu0 0
  %2045 = vmatprep.subr.bf16.mxu0 0
  %2046 = vmatpush1.bf16.msra.mxu0 0
  %2047 = vmatprep.subr.bf16.mxu0 0
  %2048 = vmatpush1.bf16.msra.mxu0 %v1282
  %2049 = vmatprep.subr.bf16.mxu0 0
  %2050 = vmatpush1.bf16.msra.mxu0 %v1281
  %2051 = vmatprep.subr.bf16.mxu0 0
  %2052 = vmatpush2.bf16.msra.mxu0 0
  %2053 = vmatprep.subr.bf16.mxu0 0
  %2054 = vmatpush2.bf16.msra.mxu0 0
  %2055 = vmatprep.subr.bf16.mxu0 0
  %2056 = vmatpush2.bf16.msra.mxu0 0
  %2057 = vmatprep.subr.bf16.mxu0 0
  %2058 = vmatpush2.bf16.msra.mxu0 0
  %2059 = vmatprep.subr.bf16.mxu0 0
  %2060 = vmatpush2.bf16.msra.mxu0 0
  %2061 = vmatprep.subr.bf16.mxu0 0
  %2062 = vmatpush2.bf16.msra.mxu0 0
  %2063 = vmatprep.subr.bf16.mxu0 0
  %2064 = vmatpush2.bf16.msra.mxu0 0
  %2065 = vmatprep.subr.bf16.mxu0 0
  %2066 = vmatpush2.bf16.msra.mxu0 0
  %2067 = vmatprep.mubr.bf16.mxu0 0
  %2068 = vmatmul.mubr.bf16.gmra.mxu0 %v2033
  %v2069 = vpop.f32.mrf.mxu0
  %v2070 = vadd.f32 0.0, %v2069
  %v2071 = vpop.f32.mrf.mxu0
  %v2072 = vpop.f32.mrf.mxu0
  %v2073 = vpop.f32.mrf.mxu0
  %2074 = vdwg.mxu0
  %v2075 = vadd.f32 %v2027, %v2070
  %v2076 = vtanh.pop %v2075
  %v2077 = vxor.u32 %v2075, 2147483648
  %v2078 = vmul.f32 %v2077, 1.442695
  %v2079 = vpow.pop %v2078
  %v2080 = vadd.f32 %v2079, 1.0
  %v2081 = vrcp.pop %v2080
  %v2082 = vmul.f32 1.0, %v2081
  %v2083 = vsel %vm42, %v2076, %v2082
  %v2084 = vmul.f32 %v2083, %v2026
  %2086 = vrot.lane.b32.xlu0 %v2083, 64
  %v2087 = vpop.permute.xlu0 %2086
  %v2089 = vmul.f32 %v2083, %v2087
  %2091 = vrot.lane.b32.xlu0 %v2089, 32
  %v2092 = vpop.permute.xlu0 %2091
  %v2094 = vadd.f32 %v2084, %v2092
  %v2095 = vtanh.pop %v2094
  %2097 = vrot.lane.b32.xlu0 %v2095, 64
  %v2098 = vpop.permute.xlu0 %2097
  %v2100 = vmul.f32 %v2083, %v2098
  %vm2101 = vcmp.gt.s32.totalorder %v1358, 9
  %v2102 = vsel %vm2101, 1, 0
  %2103 = vset.pattern.permute.xlu0 0
  %2104 = vperm.xlu0 %2103, %v2102
  %v2105 = vpop.permute.xlu0 %2104
  %vm2106 = vcmp.eq.s32.totalorder %v2105, 1
  %v2107 = vsel %vm2106, %v2100, %v2025
  %v2108 = vsel %vm2106, %v2094, %v2026
  %2110 = vrot.lane.b32.xlu0 %v2107, 32
  %v2111 = vpop.permute.xlu0 %2110
  %s2113 = scalar_lea.vmem %s10, 8
  %2114 = vst.msk [vmem:[%s2113] sm:$0xff] %vm101, %v2111
  %2116 = vrot.lane.b32.xlu0 %v2108, 96
  %v2117 = vpop.permute.xlu0 %2116
  %s2119 = scalar_lea.vmem %s11, 8
  %2120 = vst.msk [vmem:[%s2119] sm:$0xff] %vm101, %v2117
  // Predicated region
  $region42: #{seq2seq_forward.2} parent=0 // pred_check
    _
  $region43: #{seq2seq_forward.2} parent=0 // pred_check_branch
    %2122 = sbr.rel (0) target = $region45
  $region44: #{seq2seq_forward.2} parent=0 // pred_region
    _
  $region45: #{seq2seq_forward.2} parent=0 // pred_fallthru
    _
  // Predicated region
  $region46: #{seq2seq_forward.2} parent=0 // pred_check
    _
  $region47: #{seq2seq_forward.2} parent=0 // pred_check_branch
    %2124 = sbr.rel (0) target = $region49
  $region48: #{seq2seq_forward.2} parent=0 // pred_region
    _
  $region49: #{seq2seq_forward.2} parent=0 // pred_fallthru
    _
  // Predicated region
  $region50: #{seq2seq_forward.2} parent=0 // pred_check
    _
  $region51: #{seq2seq_forward.2} parent=0 // pred_check_branch
    %2126 = sbr.rel (0) target = $region53
  $region52: #{seq2seq_forward.2} parent=0 // pred_region
    _
  $region53: #{seq2seq_forward.2} parent=0 // pred_fallthru
    _
  // Predicated region
  $region54: #{seq2seq_forward.2} parent=0 // pred_check
    _
  $region55: #{seq2seq_forward.2} parent=0 // pred_check_branch
    %2128 = sbr.rel (0) target = $region57
  $region56: #{seq2seq_forward.2} parent=0 // pred_region
    _
  $region57: #{seq2seq_forward.2} parent=0 // pred_fallthru
    _

</llo_original>
